<compile_context>
chip_gen: v5e
topology: v5e:2x2
jax: 0.10.0
libtpu: 0.0.40
codegen_flags: <defaults>
</compile_context>

<pallas_src>
import numpy as np
import jax
import jax.numpy as jnp
from jax import lax
from jax.experimental import pallas as pl
from jax.experimental.pallas import tpu as pltpu

F32 = jnp.float32
VMEM = pl.BlockSpec(memory_space=pltpu.MemorySpace.VMEM)

# ---- model config ----------------------------------------------------------
N_BATCH = 2
T_STEPS = 16
SIGNAL_CHANNELS = 4
NUM_CLASSES = 5
CONV1_OUT = 8
CONV_K = 3
LAST_CONV_CHANNELS = 512
HIDDEN = 32
FC_OUT = 16
BN_EPS = 1e-5

L1 = T_STEPS - CONV_K + 1          # conv1 output length (14)
LP = L1 // 2                       # pooled length (7), floor mode
L2 = LP - CONV_K + 1               # conv2 output length == LSTM steps (5)

# ---- packed-parameter layouts (shared by wrapper and kernel) ---------------
# pack_small: (SMALL_ROWS, PACK_W) f32; row offsets 8-aligned per block.
PACK_W = 32
ROW_W1 = 0                         # (CONV_K*SIGNAL_CHANNELS=12, CONV1_OUT=8)
ROW_S1 = 16                        # (1, 8)
ROW_T1 = 17                        # (1, 8)
ROW_WFC = 24                       # (HIDDEN=32, FC_OUT=16)
ROW_BFC = 56                       # (1, 16)
ROW_WH = 64                        # (FC_OUT=16, NUM_CLASSES=5)
ROW_BH = 80                        # (1, 5)
SMALL_ROWS = 88

# pack512: (P512_ROWS, 512) f32.
ROW_W2 = 0                         # (CONV_K*CONV1_OUT=24, 512)
ROW_S2 = 24                        # (1, 512)
ROW_T2 = 25                        # (1, 512)
P512_ROWS = 32

# lstm_pack: (LSTM_ROWS, 4*HIDDEN=128) f32, manual-DMA'd from HBM.
ROW_WIH = 0                        # (512, 128)
ROW_WHH = LAST_CONV_CHANNELS       # 512, (32, 128)
ROW_BL = ROW_WHH + HIDDEN          # 544, (1, 128)
LSTM_ROWS = 552                    # padded to a sublane multiple


# ============================================================================
# Single fused kernel: conv1+BN+ReLU -> maxpool(2,2) -> conv2+BN -> LSTM
#                      (last hidden) -> Linear+ReLU -> head.
# Gridless; all intermediates stay in VMEM / vregs; only (N, num_classes)
# logits are written back to HBM.
# ============================================================================
def _fused_kernel(x_ref, small_ref, p512_ref, lstm_hbm_ref, o_ref,
                  lstm_buf, dma_sem):
    # Kick off the LSTM weight DMA immediately; it overlaps the whole conv stage.
    lstm_cp = pltpu.make_async_copy(lstm_hbm_ref, lstm_buf, dma_sem)
    lstm_cp.start()

    n, l_in, c_in = x_ref.shape
    k, c1, h = CONV_K, CONV1_OUT, HIDDEN
    l1, lp, l2 = L1, LP, L2

    # ---- unpack the small packed operands (static sublane/lane slices) ----
    small = small_ref[...]
    w1 = small[ROW_W1:ROW_W1 + k * c_in, 0:c1]              # (12, 8)
    s1 = small[ROW_S1:ROW_S1 + 1, 0:c1]                     # (1, 8)
    t1 = small[ROW_T1:ROW_T1 + 1, 0:c1]                     # (1, 8)
    wfc = small[ROW_WFC:ROW_WFC + h, 0:FC_OUT]              # (32, 16)
    bfc = small[ROW_BFC:ROW_BFC + 1, 0:FC_OUT]              # (1, 16)
    wh = small[ROW_WH:ROW_WH + FC_OUT, 0:NUM_CLASSES]       # (16, 5)
    bh = small[ROW_BH:ROW_BH + 1, 0:NUM_CLASSES]            # (1, 5)

    p512 = p512_ref[...]
    w2 = p512[ROW_W2:ROW_W2 + k * c1, :]                    # (24, 512)
    s2 = p512[ROW_S2:ROW_S2 + 1, :]                         # (1, 512)
    t2 = p512[ROW_T2:ROW_T2 + 1, :]                         # (1, 512)

    # ---- conv1 + BN(eval) + ReLU: ONE batched im2col MXU dot ----
    x_all = x_ref[...]                                       # (n, 16, 4)
    cols1 = jnp.concatenate(
        [jnp.concatenate([x_all[b, j:j + l1, :] for j in range(k)], axis=1)
         for b in range(n)], axis=0)                         # (n*l1, k*c_in) = (28, 12)
    y1 = jnp.dot(cols1, w1, preferred_element_type=jnp.float32)
    y1 = jnp.maximum(y1 * s1 + t1, 0.0)                      # (28, 8), rows b*l1 + r

    # ---- MaxPool1d(2,2), floor mode.  maxed[q] = max(y1[q], y1[q+1]); pooled
    # rows are the even q within each batch (l1=14 is even, so no pair straddles
    # the batch boundary).  Two contiguous slices + one vector max.
    maxed = jnp.maximum(y1[0:n * l1 - 1, :], y1[1:n * l1, :])          # (27, 8)
    pooled = jnp.concatenate(
        [maxed[b * l1 + 2 * m:b * l1 + 2 * m + 1, :]
         for b in range(n) for m in range(lp)], axis=0)      # (n*lp, 8), rows b*lp + m

    # ---- conv2 + BN (no ReLU): ONE batched im2col MXU dot ----
    cols2 = jnp.concatenate(
        [jnp.concatenate([pooled[b * lp + j:b * lp + j + l2, :] for j in range(k)], axis=1)
         for b in range(n)], axis=0)                         # (n*l2, k*c1) = (10, 24)
    h2 = jnp.dot(cols2, w2, preferred_element_type=jnp.float32) * s2 + t2   # (10, 512)

    # ---- LSTM ----
    lstm_cp.wait()                                           # W_ih/W_hh/bias now in VMEM
    wih = lstm_buf[ROW_WIH:ROW_WIH + LAST_CONV_CHANNELS, :]  # (512, 128)
    whh = lstm_buf[ROW_WHH:ROW_WHH + h, :]                   # (32, 128)
    bl = lstm_buf[ROW_BL:ROW_BL + 1, :]                      # (1, 128)

    # Input projection hoisted out of the recurrence: one (10,512)x(512,128) pass.
    xw = jnp.dot(h2, wih, preferred_element_type=jnp.float32) + bl      # (10, 128)

    # Per-step input-gate rows {t, l2+t} of batch-major xw.  Independent of the
    # recurrent state, so gather them ahead of the strictly-serial loop.
    gx = [jnp.concatenate([xw[b * l2 + t:b * l2 + t + 1, :] for b in range(n)], axis=0)
          for t in range(l2)]                                # l2 x (n, 4H)

    hs = jnp.zeros((n, h), jnp.float32)
    cs = jnp.zeros((n, h), jnp.float32)
    for t in range(l2):                                      # fully unrolled (l2 = 5)
        gates = gx[t] + jnp.dot(hs, whh, preferred_element_type=jnp.float32)  # (n, 4H)
        sg = jax.nn.sigmoid(gates)                           # 1 EUP pass, full vreg
        tg = jnp.tanh(gates)                                 # 1 EUP pass, full vreg
        i_g = sg[:, 0 * h:1 * h]
        f_g = sg[:, 1 * h:2 * h]
        g_g = tg[:, 2 * h:3 * h]
        o_g = sg[:, 3 * h:4 * h]
        cs = f_g * cs + i_g * g_g
        hs = o_g * jnp.tanh(cs)

    # ---- fc (Linear + ReLU) + classification head ----
    feat = jnp.maximum(jnp.dot(hs, wfc, preferred_element_type=jnp.float32) + bfc, 0.0)
    o_ref[...] = (jnp.dot(feat, wh, preferred_element_type=jnp.float32) + bh
                  ).astype(o_ref.dtype)


# ============================================================================
# One-time parameter preparation (weight-load time, eager, OUTSIDE jit):
# fold BN into (scale, shift), transpose weights to im2col / right-multiply
# layouts, and pack everything into 3 arrays.
# ============================================================================
def prepare_params(p):
    c1_out, c_in, k = p["conv1_w"].shape
    c2_out = p["conv2_w"].shape[0]

    inv1 = p["bn1_g"] / jnp.sqrt(p["bn1_v"] + BN_EPS)
    s1 = inv1.reshape(1, c1_out)
    t1 = (p["bn1_b"] + (p["conv1_b"] - p["bn1_m"]) * inv1).reshape(1, c1_out)
    inv2 = p["bn2_g"] / jnp.sqrt(p["bn2_v"] + BN_EPS)
    s2 = inv2.reshape(1, c2_out)
    t2 = (p["bn2_b"] + (p["conv2_b"] - p["bn2_m"]) * inv2).reshape(1, c2_out)

    # (C_out, C_in, K) -> (K, C_in, C_out) -> (K*C_in, C_out): rows ordered
    # k-major / c-minor, matching the in-kernel im2col lane concatenation.
    w1 = jnp.transpose(p["conv1_w"], (2, 1, 0)).reshape(k * c_in, c1_out)
    w2 = jnp.transpose(p["conv2_w"], (2, 1, 0)).reshape(k * c1_out, c2_out)

    wih = jnp.transpose(p["lstm_wih"])                       # (512, 4H)
    whh = jnp.transpose(p["lstm_whh"])                       # (H, 4H)
    bl = (p["lstm_bih"] + p["lstm_bhh"]).reshape(1, -1)      # (1, 4H)
    wfc = jnp.transpose(p["fc1_w"])                          # (H, FC_OUT)
    bfc = p["fc1_b"].reshape(1, -1)
    wh = jnp.transpose(p["head_w"])                          # (FC_OUT, classes)
    bh = p["head_b"].reshape(1, -1)

    def place(dst, row, blk):
        blk = blk.astype(F32)
        return dst.at[row:row + blk.shape[0], 0:blk.shape[1]].set(blk)

    small = jnp.zeros((SMALL_ROWS, PACK_W), F32)
    for row, blk in ((ROW_W1, w1), (ROW_S1, s1), (ROW_T1, t1), (ROW_WFC, wfc),
                     (ROW_BFC, bfc), (ROW_WH, wh), (ROW_BH, bh)):
        small = place(small, row, blk)

    p512 = jnp.zeros((P512_ROWS, LAST_CONV_CHANNELS), F32)
    for row, blk in ((ROW_W2, w2), (ROW_S2, s2), (ROW_T2, t2)):
        p512 = place(p512, row, blk)

    lstm = jnp.zeros((LSTM_ROWS, 4 * HIDDEN), F32)
    for row, blk in ((ROW_WIH, wih), (ROW_WHH, whh), (ROW_BL, bl)):
        lstm = place(lstm, row, blk)

    return small, p512, lstm


@jax.jit
def conv_lstm_forward(x, pack_small, pack512, lstm_pack):
    # x: (N, T, C) with C == signal_channels (no additional_input branch).
    n = x.shape[0]
    return pl.pallas_call(
        _fused_kernel,
        out_shape=jax.ShapeDtypeStruct((n, NUM_CLASSES), F32),
        in_specs=[VMEM, VMEM, VMEM,
                  pl.BlockSpec(memory_space=pl.ANY)],       # LSTM pack: manual DMA
        out_specs=VMEM,
        scratch_shapes=[pltpu.VMEM((LSTM_ROWS, 4 * HIDDEN), F32),
                        pltpu.SemaphoreType.DMA(())],
    )(x.astype(F32), pack_small, pack512, lstm_pack)


# ============================================================================
# Pure-JAX reference (mirrors PyTorch NCL conventions) for verification.
# ============================================================================
def reference_forward(x, p):
    s = jnp.transpose(x.astype(F32), (0, 2, 1))              # (N, C, T)

    def conv1d(z, w, b):
        y = lax.conv_general_dilated(z, w, window_strides=(1,), padding="VALID",
                                     dimension_numbers=("NCH", "OIH", "NCH"))
        return y + b[None, :, None]

    def bn(z, g, be, m, v):
        return (z - m[None, :, None]) / jnp.sqrt(v[None, :, None] + BN_EPS) \
            * g[None, :, None] + be[None, :, None]

    s = jnp.maximum(bn(conv1d(s, p["conv1_w"], p["conv1_b"]),
                       p["bn1_g"], p["bn1_b"], p["bn1_m"], p["bn1_v"]), 0.0)
    n, c, l = s.shape
    s = s[:, :, : (l // 2) * 2].reshape(n, c, l // 2, 2).max(axis=3)
    s = bn(conv1d(s, p["conv2_w"], p["conv2_b"]),
           p["bn2_g"], p["bn2_b"], p["bn2_m"], p["bn2_v"])
    s = jnp.transpose(s, (0, 2, 1))                          # (N, T', 512)

    def step(carry, x_t):
        h, cst = carry
        gates = x_t @ p["lstm_wih"].T + h @ p["lstm_whh"].T + p["lstm_bih"] + p["lstm_bhh"]
        i, f, g, o = jnp.split(gates, 4, axis=-1)
        i, f, o = jax.nn.sigmoid(i), jax.nn.sigmoid(f), jax.nn.sigmoid(o)
        g = jnp.tanh(g)
        cst = f * cst + i * g
        h = o * jnp.tanh(cst)
        return (h, cst), None

    nb = s.shape[0]
    (h, _), _ = lax.scan(step, (jnp.zeros((nb, HIDDEN), F32), jnp.zeros((nb, HIDDEN), F32)),
                         jnp.transpose(s, (1, 0, 2)))
    feat = jnp.maximum(h @ p["fc1_w"].T + p["fc1_b"], 0.0)
    return feat @ p["head_w"].T + p["head_b"]


# ============================================================================
# Deterministic parameter init (PyTorch-layout shapes).
# ============================================================================
def init_params(key):
    ks = jax.random.split(key, 16)
    nrm = lambda k, shp, s=0.2: (s * jax.random.normal(k, shp)).astype(F32)
    p = {
        "conv1_w": nrm(ks[0], (CONV1_OUT, SIGNAL_CHANNELS, CONV_K)),
        "conv1_b": nrm(ks[1], (CONV1_OUT,)),
        "bn1_g": (1.0 + nrm(ks[2], (CONV1_OUT,), 0.1)).astype(F32),
        "bn1_b": nrm(ks[3], (CONV1_OUT,), 0.1),
        "bn1_m": nrm(ks[4], (CONV1_OUT,), 0.1),
        "bn1_v": (1.0 + jnp.abs(nrm(ks[5], (CONV1_OUT,), 0.1))).astype(F32),
        "conv2_w": nrm(ks[6], (LAST_CONV_CHANNELS, CONV1_OUT, CONV_K)),
        "conv2_b": nrm(ks[7], (LAST_CONV_CHANNELS,)),
        "bn2_g": (1.0 + nrm(ks[8], (LAST_CONV_CHANNELS,), 0.1)).astype(F32),
        "bn2_b": nrm(ks[9], (LAST_CONV_CHANNELS,), 0.1),
        "bn2_m": nrm(ks[10], (LAST_CONV_CHANNELS,), 0.1),
        "bn2_v": (1.0 + jnp.abs(nrm(ks[11], (LAST_CONV_CHANNELS,), 0.1))).astype(F32),
        "lstm_wih": nrm(ks[12], (4 * HIDDEN, LAST_CONV_CHANNELS), 0.05),
        "lstm_whh": nrm(ks[13], (4 * HIDDEN, HIDDEN), 0.2),
        "lstm_bih": nrm(ks[14], (4 * HIDDEN,), 0.1),
        "lstm_bhh": nrm(ks[15], (4 * HIDDEN,), 0.1),
    }
    k2 = jax.random.split(jax.random.fold_in(key, 7), 4)
    p["fc1_w"] = nrm(k2[0], (FC_OUT, HIDDEN), 0.4)
    p["fc1_b"] = nrm(k2[1], (FC_OUT,), 0.2)
    p["head_w"] = nrm(k2[2], (NUM_CLASSES, FC_OUT), 0.4)
    p["head_b"] = nrm(k2[3], (NUM_CLASSES,), 0.2)
    return p


if __name__ == "__main__":
    # Test-harness-only setting so the Pallas kernel and the pure-JAX reference
    # both use exact-f32 matmuls for the parity check (not a library side effect).
    jax.config.update("jax_default_matmul_precision", "highest")

    root = jax.random.PRNGKey(0)
    k_param, k_x = jax.random.split(root)
    params = init_params(k_param)
    x = jax.random.normal(k_x, (N_BATCH, T_STEPS, SIGNAL_CHANNELS), dtype=F32)

    # Weight folding / packing happens ONCE here (weight-load time), not per call.
    pack_small, pack512, lstm_pack = jax.block_until_ready(prepare_params(params))

    out = jax.block_until_ready(conv_lstm_forward(x, pack_small, pack512, lstm_pack))
    ref = jax.block_until_ready(jax.jit(reference_forward)(x, params))

    assert out.shape == (N_BATCH, NUM_CLASSES), out.shape
    assert out.dtype == jnp.float32
    np.testing.assert_allclose(np.asarray(out), np.asarray(ref), rtol=1e-2, atol=1e-2)
    print("KERNEL_OK")
</pallas_src>

<mosaic_0001>
module attributes {stable_mosaic.version = 11 : i64} {
  func.func @_fused_kernel(%arg0: memref<2x16x4xf32, #tpu.memory_space<vmem>>, %arg1: memref<88x32xf32, #tpu.memory_space<vmem>>, %arg2: memref<32x512xf32, #tpu.memory_space<vmem>>, %arg3: memref<552x128xf32, #tpu.memory_space<any>>, %arg4: memref<2x5xf32, #tpu.memory_space<vmem>>, %arg5: memref<552x128xf32, #tpu.memory_space<vmem>>, %arg6: memref<!tpu.dma_semaphore, #tpu.memory_space<semaphore_mem>>) attributes {dimension_semantics = [], scalar_prefetch = 0 : i64, scratch_operands = 2 : i64, tpu.core_type = #tpu.core_type<tc>} {
    tpu.enqueue_dma source(%arg3 : memref<552x128xf32, #tpu.memory_space<any>>) target(%arg5 : memref<552x128xf32, #tpu.memory_space<vmem>>) target_semaphore(%arg6 : memref<!tpu.dma_semaphore, #tpu.memory_space<semaphore_mem>>)
    %c0 = arith.constant 0 : index
    %c0_0 = arith.constant 0 : index
    %0 = vector.load %arg1[%c0, %c0_0] : memref<88x32xf32, #tpu.memory_space<vmem>>, vector<88x32xf32>
    %1 = vector.extract_strided_slice %0 {offsets = [0, 0], sizes = [12, 8], strides = [1, 1]} : vector<88x32xf32> to vector<12x8xf32>
    %2 = vector.extract_strided_slice %0 {offsets = [16, 0], sizes = [1, 8], strides = [1, 1]} : vector<88x32xf32> to vector<1x8xf32>
    %3 = vector.extract_strided_slice %0 {offsets = [17, 0], sizes = [1, 8], strides = [1, 1]} : vector<88x32xf32> to vector<1x8xf32>
    %4 = vector.extract_strided_slice %0 {offsets = [24, 0], sizes = [32, 16], strides = [1, 1]} : vector<88x32xf32> to vector<32x16xf32>
    %5 = vector.extract_strided_slice %0 {offsets = [56, 0], sizes = [1, 16], strides = [1, 1]} : vector<88x32xf32> to vector<1x16xf32>
    %6 = vector.extract_strided_slice %0 {offsets = [64, 0], sizes = [16, 5], strides = [1, 1]} : vector<88x32xf32> to vector<16x5xf32>
    %7 = vector.extract_strided_slice %0 {offsets = [80, 0], sizes = [1, 5], strides = [1, 1]} : vector<88x32xf32> to vector<1x5xf32>
    %c0_1 = arith.constant 0 : index
    %c0_2 = arith.constant 0 : index
    %8 = vector.load %arg2[%c0_1, %c0_2] : memref<32x512xf32, #tpu.memory_space<vmem>>, vector<32x512xf32>
    %9 = vector.extract_strided_slice %8 {offsets = [0, 0], sizes = [24, 512], strides = [1, 1]} : vector<32x512xf32> to vector<24x512xf32>
    %10 = vector.extract_strided_slice %8 {offsets = [24, 0], sizes = [1, 512], strides = [1, 1]} : vector<32x512xf32> to vector<1x512xf32>
    %11 = vector.extract_strided_slice %8 {offsets = [25, 0], sizes = [1, 512], strides = [1, 1]} : vector<32x512xf32> to vector<1x512xf32>
    %c0_3 = arith.constant 0 : index
    %c0_4 = arith.constant 0 : index
    %c0_5 = arith.constant 0 : index
    %12 = vector.load %arg0[%c0_3, %c0_4, %c0_5] : memref<2x16x4xf32, #tpu.memory_space<vmem>>, vector<2x16x4xf32>
    %13 = vector.extract_strided_slice %12 {offsets = [0, 0, 0], sizes = [1, 14, 4], strides = [1, 1, 1]} : vector<2x16x4xf32> to vector<1x14x4xf32>
    %14 = vector.shape_cast %13 : vector<1x14x4xf32> to vector<14x4xf32>
    %15 = vector.extract_strided_slice %12 {offsets = [0, 1, 0], sizes = [1, 14, 4], strides = [1, 1, 1]} : vector<2x16x4xf32> to vector<1x14x4xf32>
    %16 = vector.shape_cast %15 : vector<1x14x4xf32> to vector<14x4xf32>
    %17 = vector.extract_strided_slice %12 {offsets = [0, 2, 0], sizes = [1, 14, 4], strides = [1, 1, 1]} : vector<2x16x4xf32> to vector<1x14x4xf32>
    %18 = vector.shape_cast %17 : vector<1x14x4xf32> to vector<14x4xf32>
    %19 = tpu.concatenate %14, %16, %18 in 1 : vector<14x4xf32>, vector<14x4xf32>, vector<14x4xf32> -> vector<14x12xf32>
    %20 = vector.extract_strided_slice %12 {offsets = [1, 0, 0], sizes = [1, 14, 4], strides = [1, 1, 1]} : vector<2x16x4xf32> to vector<1x14x4xf32>
    %21 = vector.shape_cast %20 : vector<1x14x4xf32> to vector<14x4xf32>
    %22 = vector.extract_strided_slice %12 {offsets = [1, 1, 0], sizes = [1, 14, 4], strides = [1, 1, 1]} : vector<2x16x4xf32> to vector<1x14x4xf32>
    %23 = vector.shape_cast %22 : vector<1x14x4xf32> to vector<14x4xf32>
    %24 = vector.extract_strided_slice %12 {offsets = [1, 2, 0], sizes = [1, 14, 4], strides = [1, 1, 1]} : vector<2x16x4xf32> to vector<1x14x4xf32>
    %25 = vector.shape_cast %24 : vector<1x14x4xf32> to vector<14x4xf32>
    %26 = tpu.concatenate %21, %23, %25 in 1 : vector<14x4xf32>, vector<14x4xf32>, vector<14x4xf32> -> vector<14x12xf32>
    %27 = tpu.concatenate %19, %26 in 0 : vector<14x12xf32>, vector<14x12xf32> -> vector<28x12xf32>
    %cst = arith.constant dense<0.000000e+00> : vector<28x8xf32>
    %28 = tpu.matmul %27, %1, %cst {dimension_numbers = #tpu.dot_dimension_numbers<[1], [0], [0], [1], [0, 0, 1, 1], [], []>, precision = #tpu.contract_precision<fp32>} : vector<28x12xf32>, vector<12x8xf32>, vector<28x8xf32> -> vector<28x8xf32>
    %29 = vector.broadcast %2 : vector<1x8xf32> to vector<28x8xf32>
    %30 = arith.mulf %28, %29 : vector<28x8xf32>
    %31 = vector.broadcast %3 : vector<1x8xf32> to vector<28x8xf32>
    %32 = arith.addf %30, %31 : vector<28x8xf32>
    %cst_6 = arith.constant 0.000000e+00 : f32
    %33 = vector.broadcast %cst_6 : f32 to vector<28x8xf32>
    %34 = arith.maximumf %32, %33 : vector<28x8xf32>
    %35 = vector.extract_strided_slice %34 {offsets = [0, 0], sizes = [27, 8], strides = [1, 1]} : vector<28x8xf32> to vector<27x8xf32>
    %36 = vector.extract_strided_slice %34 {offsets = [1, 0], sizes = [27, 8], strides = [1, 1]} : vector<28x8xf32> to vector<27x8xf32>
    %37 = arith.maximumf %35, %36 : vector<27x8xf32>
    %38 = vector.extract_strided_slice %37 {offsets = [0, 0], sizes = [1, 8], strides = [1, 1]} : vector<27x8xf32> to vector<1x8xf32>
    %39 = vector.extract_strided_slice %37 {offsets = [2, 0], sizes = [1, 8], strides = [1, 1]} : vector<27x8xf32> to vector<1x8xf32>
    %40 = vector.extract_strided_slice %37 {offsets = [4, 0], sizes = [1, 8], strides = [1, 1]} : vector<27x8xf32> to vector<1x8xf32>
    %41 = vector.extract_strided_slice %37 {offsets = [6, 0], sizes = [1, 8], strides = [1, 1]} : vector<27x8xf32> to vector<1x8xf32>
    %42 = vector.extract_strided_slice %37 {offsets = [8, 0], sizes = [1, 8], strides = [1, 1]} : vector<27x8xf32> to vector<1x8xf32>
    %43 = vector.extract_strided_slice %37 {offsets = [10, 0], sizes = [1, 8], strides = [1, 1]} : vector<27x8xf32> to vector<1x8xf32>
    %44 = vector.extract_strided_slice %37 {offsets = [12, 0], sizes = [1, 8], strides = [1, 1]} : vector<27x8xf32> to vector<1x8xf32>
    %45 = vector.extract_strided_slice %37 {offsets = [14, 0], sizes = [1, 8], strides = [1, 1]} : vector<27x8xf32> to vector<1x8xf32>
    %46 = vector.extract_strided_slice %37 {offsets = [16, 0], sizes = [1, 8], strides = [1, 1]} : vector<27x8xf32> to vector<1x8xf32>
    %47 = vector.extract_strided_slice %37 {offsets = [18, 0], sizes = [1, 8], strides = [1, 1]} : vector<27x8xf32> to vector<1x8xf32>
    %48 = vector.extract_strided_slice %37 {offsets = [20, 0], sizes = [1, 8], strides = [1, 1]} : vector<27x8xf32> to vector<1x8xf32>
    %49 = vector.extract_strided_slice %37 {offsets = [22, 0], sizes = [1, 8], strides = [1, 1]} : vector<27x8xf32> to vector<1x8xf32>
    %50 = vector.extract_strided_slice %37 {offsets = [24, 0], sizes = [1, 8], strides = [1, 1]} : vector<27x8xf32> to vector<1x8xf32>
    %51 = vector.extract_strided_slice %37 {offsets = [26, 0], sizes = [1, 8], strides = [1, 1]} : vector<27x8xf32> to vector<1x8xf32>
    %52 = tpu.concatenate %38, %39, %40, %41, %42, %43, %44, %45, %46, %47, %48, %49, %50, %51 in 0 : vector<1x8xf32>, vector<1x8xf32>, vector<1x8xf32>, vector<1x8xf32>, vector<1x8xf32>, vector<1x8xf32>, vector<1x8xf32>, vector<1x8xf32>, vector<1x8xf32>, vector<1x8xf32>, vector<1x8xf32>, vector<1x8xf32>, vector<1x8xf32>, vector<1x8xf32> -> vector<14x8xf32>
    %53 = vector.extract_strided_slice %52 {offsets = [0, 0], sizes = [5, 8], strides = [1, 1]} : vector<14x8xf32> to vector<5x8xf32>
    %54 = vector.extract_strided_slice %52 {offsets = [1, 0], sizes = [5, 8], strides = [1, 1]} : vector<14x8xf32> to vector<5x8xf32>
    %55 = vector.extract_strided_slice %52 {offsets = [2, 0], sizes = [5, 8], strides = [1, 1]} : vector<14x8xf32> to vector<5x8xf32>
    %56 = tpu.concatenate %53, %54, %55 in 1 : vector<5x8xf32>, vector<5x8xf32>, vector<5x8xf32> -> vector<5x24xf32>
    %57 = vector.extract_strided_slice %52 {offsets = [7, 0], sizes = [5, 8], strides = [1, 1]} : vector<14x8xf32> to vector<5x8xf32>
    %58 = vector.extract_strided_slice %52 {offsets = [8, 0], sizes = [5, 8], strides = [1, 1]} : vector<14x8xf32> to vector<5x8xf32>
    %59 = vector.extract_strided_slice %52 {offsets = [9, 0], sizes = [5, 8], strides = [1, 1]} : vector<14x8xf32> to vector<5x8xf32>
    %60 = tpu.concatenate %57, %58, %59 in 1 : vector<5x8xf32>, vector<5x8xf32>, vector<5x8xf32> -> vector<5x24xf32>
    %61 = tpu.concatenate %56, %60 in 0 : vector<5x24xf32>, vector<5x24xf32> -> vector<10x24xf32>
    %cst_7 = arith.constant dense<0.000000e+00> : vector<10x512xf32>
    %62 = tpu.matmul %61, %9, %cst_7 {dimension_numbers = #tpu.dot_dimension_numbers<[1], [0], [0], [1], [0, 0, 1, 1], [], []>, precision = #tpu.contract_precision<fp32>} : vector<10x24xf32>, vector<24x512xf32>, vector<10x512xf32> -> vector<10x512xf32>
    %63 = vector.broadcast %10 : vector<1x512xf32> to vector<10x512xf32>
    %64 = arith.mulf %62, %63 : vector<10x512xf32>
    %65 = vector.broadcast %11 : vector<1x512xf32> to vector<10x512xf32>
    %66 = arith.addf %64, %65 : vector<10x512xf32>
    tpu.wait_dma2 semaphore(%arg6 : memref<!tpu.dma_semaphore, #tpu.memory_space<semaphore_mem>>) src(%arg3 : memref<552x128xf32, #tpu.memory_space<any>>) dst(%arg5 : memref<552x128xf32, #tpu.memory_space<vmem>>)
    %c0_8 = arith.constant 0 : index
    %c0_9 = arith.constant 0 : index
    %67 = vector.load %arg5[%c0_8, %c0_9] : memref<552x128xf32, #tpu.memory_space<vmem>>, vector<512x128xf32>
    %c512 = arith.constant 512 : index
    %c0_10 = arith.constant 0 : index
    %68 = vector.load %arg5[%c512, %c0_10] : memref<552x128xf32, #tpu.memory_space<vmem>>, vector<32x128xf32>
    %c544 = arith.constant 544 : index
    %c0_11 = arith.constant 0 : index
    %69 = vector.load %arg5[%c544, %c0_11] : memref<552x128xf32, #tpu.memory_space<vmem>>, vector<1x128xf32>
    %cst_12 = arith.constant dense<0.000000e+00> : vector<10x128xf32>
    %70 = tpu.matmul %66, %67, %cst_12 {dimension_numbers = #tpu.dot_dimension_numbers<[1], [0], [0], [1], [0, 0, 1, 1], [], []>, precision = #tpu.contract_precision<fp32>} : vector<10x512xf32>, vector<512x128xf32>, vector<10x128xf32> -> vector<10x128xf32>
    %71 = vector.broadcast %69 : vector<1x128xf32> to vector<10x128xf32>
    %72 = arith.addf %70, %71 : vector<10x128xf32>
    %73 = vector.extract_strided_slice %72 {offsets = [0, 0], sizes = [1, 128], strides = [1, 1]} : vector<10x128xf32> to vector<1x128xf32>
    %74 = vector.extract_strided_slice %72 {offsets = [5, 0], sizes = [1, 128], strides = [1, 1]} : vector<10x128xf32> to vector<1x128xf32>
    %75 = tpu.concatenate %73, %74 in 0 : vector<1x128xf32>, vector<1x128xf32> -> vector<2x128xf32>
    %76 = vector.extract_strided_slice %72 {offsets = [1, 0], sizes = [1, 128], strides = [1, 1]} : vector<10x128xf32> to vector<1x128xf32>
    %77 = vector.extract_strided_slice %72 {offsets = [6, 0], sizes = [1, 128], strides = [1, 1]} : vector<10x128xf32> to vector<1x128xf32>
    %78 = tpu.concatenate %76, %77 in 0 : vector<1x128xf32>, vector<1x128xf32> -> vector<2x128xf32>
    %79 = vector.extract_strided_slice %72 {offsets = [2, 0], sizes = [1, 128], strides = [1, 1]} : vector<10x128xf32> to vector<1x128xf32>
    %80 = vector.extract_strided_slice %72 {offsets = [7, 0], sizes = [1, 128], strides = [1, 1]} : vector<10x128xf32> to vector<1x128xf32>
    %81 = tpu.concatenate %79, %80 in 0 : vector<1x128xf32>, vector<1x128xf32> -> vector<2x128xf32>
    %82 = vector.extract_strided_slice %72 {offsets = [3, 0], sizes = [1, 128], strides = [1, 1]} : vector<10x128xf32> to vector<1x128xf32>
    %83 = vector.extract_strided_slice %72 {offsets = [8, 0], sizes = [1, 128], strides = [1, 1]} : vector<10x128xf32> to vector<1x128xf32>
    %84 = tpu.concatenate %82, %83 in 0 : vector<1x128xf32>, vector<1x128xf32> -> vector<2x128xf32>
    %85 = vector.extract_strided_slice %72 {offsets = [4, 0], sizes = [1, 128], strides = [1, 1]} : vector<10x128xf32> to vector<1x128xf32>
    %86 = vector.extract_strided_slice %72 {offsets = [9, 0], sizes = [1, 128], strides = [1, 1]} : vector<10x128xf32> to vector<1x128xf32>
    %87 = tpu.concatenate %85, %86 in 0 : vector<1x128xf32>, vector<1x128xf32> -> vector<2x128xf32>
    %cst_13 = arith.constant 0.000000e+00 : f32
    %88 = vector.broadcast %cst_13 : f32 to vector<2x32xf32>
    %cst_14 = arith.constant 0.000000e+00 : f32
    %89 = vector.broadcast %cst_14 : f32 to vector<2x32xf32>
    %cst_15 = arith.constant dense<0.000000e+00> : vector<2x128xf32>
    %90 = tpu.matmul %88, %68, %cst_15 {dimension_numbers = #tpu.dot_dimension_numbers<[1], [0], [0], [1], [0, 0, 1, 1], [], []>, precision = #tpu.contract_precision<fp32>} : vector<2x32xf32>, vector<32x128xf32>, vector<2x128xf32> -> vector<2x128xf32>
    %91 = arith.addf %75, %90 : vector<2x128xf32>
    %92 = arith.negf %91 : vector<2x128xf32>
    %93 = math.exp %92 : vector<2x128xf32>
    %cst_16 = arith.constant 1.000000e+00 : f32
    %94 = vector.broadcast %cst_16 : f32 to vector<2x128xf32>
    %95 = arith.addf %94, %93 : vector<2x128xf32>
    %96 = arith.divf %94, %95 : vector<2x128xf32>
    %97 = math.tanh %91 : vector<2x128xf32>
    %98 = vector.extract_strided_slice %96 {offsets = [0, 0], sizes = [2, 32], strides = [1, 1]} : vector<2x128xf32> to vector<2x32xf32>
    %99 = vector.extract_strided_slice %96 {offsets = [0, 32], sizes = [2, 32], strides = [1, 1]} : vector<2x128xf32> to vector<2x32xf32>
    %100 = vector.extract_strided_slice %97 {offsets = [0, 64], sizes = [2, 32], strides = [1, 1]} : vector<2x128xf32> to vector<2x32xf32>
    %101 = vector.extract_strided_slice %96 {offsets = [0, 96], sizes = [2, 32], strides = [1, 1]} : vector<2x128xf32> to vector<2x32xf32>
    %102 = arith.mulf %99, %89 : vector<2x32xf32>
    %103 = arith.mulf %98, %100 : vector<2x32xf32>
    %104 = arith.addf %102, %103 : vector<2x32xf32>
    %105 = math.tanh %104 : vector<2x32xf32>
    %106 = arith.mulf %101, %105 : vector<2x32xf32>
    %cst_17 = arith.constant dense<0.000000e+00> : vector<2x128xf32>
    %107 = tpu.matmul %106, %68, %cst_17 {dimension_numbers = #tpu.dot_dimension_numbers<[1], [0], [0], [1], [0, 0, 1, 1], [], []>, precision = #tpu.contract_precision<fp32>} : vector<2x32xf32>, vector<32x128xf32>, vector<2x128xf32> -> vector<2x128xf32>
    %108 = arith.addf %78, %107 : vector<2x128xf32>
    %109 = arith.negf %108 : vector<2x128xf32>
    %110 = math.exp %109 : vector<2x128xf32>
    %cst_18 = arith.constant 1.000000e+00 : f32
    %111 = vector.broadcast %cst_18 : f32 to vector<2x128xf32>
    %112 = arith.addf %111, %110 : vector<2x128xf32>
    %113 = arith.divf %111, %112 : vector<2x128xf32>
    %114 = math.tanh %108 : vector<2x128xf32>
    %115 = vector.extract_strided_slice %113 {offsets = [0, 0], sizes = [2, 32], strides = [1, 1]} : vector<2x128xf32> to vector<2x32xf32>
    %116 = vector.extract_strided_slice %113 {offsets = [0, 32], sizes = [2, 32], strides = [1, 1]} : vector<2x128xf32> to vector<2x32xf32>
    %117 = vector.extract_strided_slice %114 {offsets = [0, 64], sizes = [2, 32], strides = [1, 1]} : vector<2x128xf32> to vector<2x32xf32>
    %118 = vector.extract_strided_slice %113 {offsets = [0, 96], sizes = [2, 32], strides = [1, 1]} : vector<2x128xf32> to vector<2x32xf32>
    %119 = arith.mulf %116, %104 : vector<2x32xf32>
    %120 = arith.mulf %115, %117 : vector<2x32xf32>
    %121 = arith.addf %119, %120 : vector<2x32xf32>
    %122 = math.tanh %121 : vector<2x32xf32>
    %123 = arith.mulf %118, %122 : vector<2x32xf32>
    %cst_19 = arith.constant dense<0.000000e+00> : vector<2x128xf32>
    %124 = tpu.matmul %123, %68, %cst_19 {dimension_numbers = #tpu.dot_dimension_numbers<[1], [0], [0], [1], [0, 0, 1, 1], [], []>, precision = #tpu.contract_precision<fp32>} : vector<2x32xf32>, vector<32x128xf32>, vector<2x128xf32> -> vector<2x128xf32>
    %125 = arith.addf %81, %124 : vector<2x128xf32>
    %126 = arith.negf %125 : vector<2x128xf32>
    %127 = math.exp %126 : vector<2x128xf32>
    %cst_20 = arith.constant 1.000000e+00 : f32
    %128 = vector.broadcast %cst_20 : f32 to vector<2x128xf32>
    %129 = arith.addf %128, %127 : vector<2x128xf32>
    %130 = arith.divf %128, %129 : vector<2x128xf32>
    %131 = math.tanh %125 : vector<2x128xf32>
    %132 = vector.extract_strided_slice %130 {offsets = [0, 0], sizes = [2, 32], strides = [1, 1]} : vector<2x128xf32> to vector<2x32xf32>
    %133 = vector.extract_strided_slice %130 {offsets = [0, 32], sizes = [2, 32], strides = [1, 1]} : vector<2x128xf32> to vector<2x32xf32>
    %134 = vector.extract_strided_slice %131 {offsets = [0, 64], sizes = [2, 32], strides = [1, 1]} : vector<2x128xf32> to vector<2x32xf32>
    %135 = vector.extract_strided_slice %130 {offsets = [0, 96], sizes = [2, 32], strides = [1, 1]} : vector<2x128xf32> to vector<2x32xf32>
    %136 = arith.mulf %133, %121 : vector<2x32xf32>
    %137 = arith.mulf %132, %134 : vector<2x32xf32>
    %138 = arith.addf %136, %137 : vector<2x32xf32>
    %139 = math.tanh %138 : vector<2x32xf32>
    %140 = arith.mulf %135, %139 : vector<2x32xf32>
    %cst_21 = arith.constant dense<0.000000e+00> : vector<2x128xf32>
    %141 = tpu.matmul %140, %68, %cst_21 {dimension_numbers = #tpu.dot_dimension_numbers<[1], [0], [0], [1], [0, 0, 1, 1], [], []>, precision = #tpu.contract_precision<fp32>} : vector<2x32xf32>, vector<32x128xf32>, vector<2x128xf32> -> vector<2x128xf32>
    %142 = arith.addf %84, %141 : vector<2x128xf32>
    %143 = arith.negf %142 : vector<2x128xf32>
    %144 = math.exp %143 : vector<2x128xf32>
    %cst_22 = arith.constant 1.000000e+00 : f32
    %145 = vector.broadcast %cst_22 : f32 to vector<2x128xf32>
    %146 = arith.addf %145, %144 : vector<2x128xf32>
    %147 = arith.divf %145, %146 : vector<2x128xf32>
    %148 = math.tanh %142 : vector<2x128xf32>
    %149 = vector.extract_strided_slice %147 {offsets = [0, 0], sizes = [2, 32], strides = [1, 1]} : vector<2x128xf32> to vector<2x32xf32>
    %150 = vector.extract_strided_slice %147 {offsets = [0, 32], sizes = [2, 32], strides = [1, 1]} : vector<2x128xf32> to vector<2x32xf32>
    %151 = vector.extract_strided_slice %148 {offsets = [0, 64], sizes = [2, 32], strides = [1, 1]} : vector<2x128xf32> to vector<2x32xf32>
    %152 = vector.extract_strided_slice %147 {offsets = [0, 96], sizes = [2, 32], strides = [1, 1]} : vector<2x128xf32> to vector<2x32xf32>
    %153 = arith.mulf %150, %138 : vector<2x32xf32>
    %154 = arith.mulf %149, %151 : vector<2x32xf32>
    %155 = arith.addf %153, %154 : vector<2x32xf32>
    %156 = math.tanh %155 : vector<2x32xf32>
    %157 = arith.mulf %152, %156 : vector<2x32xf32>
    %cst_23 = arith.constant dense<0.000000e+00> : vector<2x128xf32>
    %158 = tpu.matmul %157, %68, %cst_23 {dimension_numbers = #tpu.dot_dimension_numbers<[1], [0], [0], [1], [0, 0, 1, 1], [], []>, precision = #tpu.contract_precision<fp32>} : vector<2x32xf32>, vector<32x128xf32>, vector<2x128xf32> -> vector<2x128xf32>
    %159 = arith.addf %87, %158 : vector<2x128xf32>
    %160 = arith.negf %159 : vector<2x128xf32>
    %161 = math.exp %160 : vector<2x128xf32>
    %cst_24 = arith.constant 1.000000e+00 : f32
    %162 = vector.broadcast %cst_24 : f32 to vector<2x128xf32>
    %163 = arith.addf %162, %161 : vector<2x128xf32>
    %164 = arith.divf %162, %163 : vector<2x128xf32>
    %165 = math.tanh %159 : vector<2x128xf32>
    %166 = vector.extract_strided_slice %164 {offsets = [0, 0], sizes = [2, 32], strides = [1, 1]} : vector<2x128xf32> to vector<2x32xf32>
    %167 = vector.extract_strided_slice %164 {offsets = [0, 32], sizes = [2, 32], strides = [1, 1]} : vector<2x128xf32> to vector<2x32xf32>
    %168 = vector.extract_strided_slice %165 {offsets = [0, 64], sizes = [2, 32], strides = [1, 1]} : vector<2x128xf32> to vector<2x32xf32>
    %169 = vector.extract_strided_slice %164 {offsets = [0, 96], sizes = [2, 32], strides = [1, 1]} : vector<2x128xf32> to vector<2x32xf32>
    %170 = arith.mulf %167, %155 : vector<2x32xf32>
    %171 = arith.mulf %166, %168 : vector<2x32xf32>
    %172 = arith.addf %170, %171 : vector<2x32xf32>
    %173 = math.tanh %172 : vector<2x32xf32>
    %174 = arith.mulf %169, %173 : vector<2x32xf32>
    %cst_25 = arith.constant dense<0.000000e+00> : vector<2x16xf32>
    %175 = tpu.matmul %174, %4, %cst_25 {dimension_numbers = #tpu.dot_dimension_numbers<[1], [0], [0], [1], [0, 0, 1, 1], [], []>, precision = #tpu.contract_precision<fp32>} : vector<2x32xf32>, vector<32x16xf32>, vector<2x16xf32> -> vector<2x16xf32>
    %176 = vector.broadcast %5 : vector<1x16xf32> to vector<2x16xf32>
    %177 = arith.addf %175, %176 : vector<2x16xf32>
    %cst_26 = arith.constant 0.000000e+00 : f32
    %178 = vector.broadcast %cst_26 : f32 to vector<2x16xf32>
    %179 = arith.maximumf %177, %178 : vector<2x16xf32>
    %cst_27 = arith.constant dense<0.000000e+00> : vector<2x5xf32>
    %180 = tpu.matmul %179, %6, %cst_27 {dimension_numbers = #tpu.dot_dimension_numbers<[1], [0], [0], [1], [0, 0, 1, 1], [], []>, precision = #tpu.contract_precision<fp32>} : vector<2x16xf32>, vector<16x5xf32>, vector<2x5xf32> -> vector<2x5xf32>
    %181 = vector.broadcast %7 : vector<1x5xf32> to vector<2x5xf32>
    %182 = arith.addf %180, %181 : vector<2x5xf32>
    %c0_28 = arith.constant 0 : index
    %c0_29 = arith.constant 0 : index
    %183 = vector.load %arg4[%c0_28, %c0_29] : memref<2x5xf32, #tpu.memory_space<vmem>>, vector<2x5xf32>
    tpu.vector_store %arg4[%c0_28, %c0_29], %182 {strides = array<i32>} : memref<2x5xf32, #tpu.memory_space<vmem>>, vector<2x5xf32>,
    return
  }
}

</mosaic_0001>

<llo_original>
// kernel: conv_lstm_forward.1
$region0: #{conv_lstm_forward.1}
  #allocation0 [shape = 'u32[]', space=smem, size = 0x4, offset = 0x4, fixed_abs, tag = 'smem constant byte address 0x4 - core index']
  #allocation1 [shape = 'u32[72,128]{1,0:T(1,128)}', space=vmem, size = 0x9000, scoped, tag = 'internal scratch']
  #allocation2 [shape = 'f32[552,128]{1,0:T(8,128)}', space=vmem, size = 0x45000, scoped, tag = 'scratch operand']
  #allocation3 [shape = 's32[1]{0}', space=sflag, size = 0x4, scoped, tag = 'scratch operand']
  #allocation6 [shape = 's32[]', space=sflag, size = 0x4, offset = 0, fixed_abs, tag = 'sflag constant byte address 0x0 - dummy sync flag']
  #allocation7 [shape = 's32[]', space=sflag, size = 0x4, offset = 0, fixed_abs, tag = 'sflag constant byte address 0x0 - dummy sync flag']
  #allocation8 [shape = 'u32[]', space=smem, size = 0x4, offset = 0x44, fixed_abs, tag = 'smem constant byte address 0x44 - assertion arg 0']
  #allocation9 [shape = 'u32[]', space=smem, size = 0x4, offset = 0x48, fixed_abs, tag = 'smem constant byte address 0x48 - assertion arg 1']
  %s0 = inlined_call_operand.vmem [shape: f32[2,16,4], index: 0, kind: input, shape index: {}]
  %s1 = inlined_call_operand.vmem [shape: f32[88,32], index: 1, kind: input, shape index: {}]
  %s2 = inlined_call_operand.vmem [shape: f32[32,512], index: 2, kind: input, shape index: {}]
  %s3 = inlined_call_operand.hbm [shape: f32[552,128], index: 3, kind: input, shape index: {}]
  %s4 = inlined_call_operand.hbm [shape: f32[2,5], index: 4, kind: output, shape index: {}]
  %s5 = sld [smem:[#allocation0]]
  $region26: #{conv_lstm_forward.1} parent=0
    _
  %s7 = ssub.s32 1, %s5
  %s8 = scalar_select 0, %s7, %s5
  $region1: #{conv_lstm_forward.1} parent=0
    #allocation4 [shape = 'u8[1024]{0}', space=vmem, size = 0x400, scoped, tag = 'output window, operand 0, single buffered']
    #allocation5 [shape = 's32[1]{0}', space=sflag, size = 0x4, scoped, tag = 'scoped memory for conv_lstm_forward.1']
    %9 = vsyncpa [#allocation5], 0
    // Predicated region
    $region2: #{conv_lstm_forward.1} parent=1 // pred_check
      _
    $region3: #{conv_lstm_forward.1} parent=1 // pred_check_branch
      %11 = sbr.rel (0) target = $region5
    $region4: #{conv_lstm_forward.1} parent=1 // pred_region
      _
    $region5: #{conv_lstm_forward.1} parent=1 // pred_fallthru
      _
    // Predicated region
    $region6: #{conv_lstm_forward.1} parent=1 // pred_check
      _
    $region7: #{conv_lstm_forward.1} parent=1 // pred_check_branch
      %13 = sbr.rel (0) target = $region9
    $region8: #{conv_lstm_forward.1} parent=1 // pred_region
      _
    $region9: #{conv_lstm_forward.1} parent=1 // pred_fallthru
      _
    // Predicated region
    $region10: #{conv_lstm_forward.1} parent=1 // pred_check
      _
    $region11: #{conv_lstm_forward.1} parent=1 // pred_check_branch
      %15 = sbr.rel (0) target = $region13
    $region12: #{conv_lstm_forward.1} parent=1 // pred_region
      _
    $region13: #{conv_lstm_forward.1} parent=1 // pred_fallthru
      _
    // Predicated region
    $region14: #{conv_lstm_forward.1} parent=1 // pred_check
      _
    $region15: #{conv_lstm_forward.1} parent=1 // pred_check_branch
      %17 = sbr.rel target = $region17
    $region16: #{conv_lstm_forward.1} parent=1 // pred_region
      %18 = sst [smem:[#allocation8]] [#allocation7]
      %19 = sst [smem:[#allocation9]] [#allocation6]
    $region17: #{conv_lstm_forward.1} parent=1 // pred_fallthru
      _
    %21 = shalt.err (0)
    %s23 = sshll.u32 %s3, 4
    %s24 = int_to_ptr.hbm [resolvable:$true] %s23
    %s25 = sshll.u32 [#allocation2], 4
    %s26 = int_to_ptr.vmem [resolvable:$true] %s25
    %28 = dma.hbm_to_vmem [thread:$0]  %s24, 8832, %s26, [#allocation3]
    %v29 = vld [vmem:[%s1] sm:$0xff]
    %v30 = vld [vmem:[%s1 + $0x8] sm:$0xff]
    %v31 = vld [vmem:[%s1 + $0x10] sm:$0xff]
    %v32 = vld [vmem:[%s1 + $0x18] sm:$0xff]
    %v33 = vld [vmem:[%s1 + $0x20] sm:$0xff]
    %v34 = vld [vmem:[%s1 + $0x28] sm:$0xff]
    %v35 = vld [vmem:[%s1 + $0x30] sm:$0xff]
    %v36 = vld [vmem:[%s1 + $0x38] sm:$0xff]
    %v37 = vld [vmem:[%s1 + $0x40] sm:$0xff]
    %v38 = vld [vmem:[%s1 + $0x48] sm:$0xff]
    %v39 = vld [vmem:[%s1 + $0x50] sm:$0xff]
    %v40 = vld [vmem:[%s2] sm:$0xff]
    %v41 = vld [vmem:[%s2 + $0x8] sm:$0xff]
    %v42 = vld [vmem:[%s2 + $0x10] sm:$0xff]
    %v43 = vld [vmem:[%s2 + $0x18] sm:$0xff]
    %v44 = vld [vmem:[%s2 + $0x20] sm:$0xff]
    %v45 = vld [vmem:[%s2 + $0x28] sm:$0xff]
    %v46 = vld [vmem:[%s2 + $0x30] sm:$0xff]
    %v47 = vld [vmem:[%s2 + $0x38] sm:$0xff]
    %v48 = vld [vmem:[%s2 + $0x40] sm:$0xff]
    %v49 = vld [vmem:[%s2 + $0x48] sm:$0xff]
    %v50 = vld [vmem:[%s2 + $0x50] sm:$0xff]
    %v51 = vld [vmem:[%s2 + $0x58] sm:$0xff]
    %v52 = vld [vmem:[%s2 + $0x60] sm:$0xff]
    %v53 = vld [vmem:[%s2 + $0x68] sm:$0xff]
    %v54 = vld [vmem:[%s2 + $0x70] sm:$0xff]
    %v55 = vld [vmem:[%s2 + $0x78] sm:$0xff]
    %v56 = vld [vmem:[%s0] sm:$0xff]
    %v57 = vld [vmem:[%s0 + $0x8] sm:$0xff]
    %v58 = vld [vmem:[%s0 + $0x10] sm:$0xff]
    %v59 = vld [vmem:[%s0 + $0x18] sm:$0xff]
    %vm62 = vcmask 1046528
    %v63 = vrot.slane %v56, 1
    %v64 = vrot.slane %v57, 1
    %v65 = vsel %vm62, %v63, %v64
    %66 = vrot.lane.b32.xlu0 %v65, 4
    %v67 = vpop.permute.xlu0 %66
    %68 = vrot.lane.b32.xlu0 %v64, 4
    %v69 = vpop.permute.xlu0 %68
    %vm72 = vcmask 1045504
    %v73 = vrot.slane %v56, 2
    %v74 = vrot.slane %v57, 2
    %v75 = vsel %vm72, %v73, %v74
    %76 = vrot.lane.b32.xlu0 %v75, 8
    %v77 = vpop.permute.xlu0 %76
    %78 = vrot.lane.b32.xlu0 %v74, 8
    %v79 = vpop.permute.xlu0 %78
    %vm82 = vcmask 31744
    %v83 = vsel %vm82, %v56, %v67
    %v84 = vsel %vm82, %v57, %v69
    %vm85 = vcmask 64512
    %v86 = vsel %vm85, %v83, %v77
    %v87 = vsel %vm85, %v84, %v79
    %v90 = vrot.slane %v58, 1
    %v91 = vrot.slane %v59, 1
    %v92 = vsel %vm62, %v90, %v91
    %93 = vrot.lane.b32.xlu0 %v92, 4
    %v94 = vpop.permute.xlu0 %93
    %95 = vrot.lane.b32.xlu0 %v91, 4
    %v96 = vpop.permute.xlu0 %95
    %v99 = vrot.slane %v58, 2
    %v100 = vrot.slane %v59, 2
    %v101 = vsel %vm72, %v99, %v100
    %102 = vrot.lane.b32.xlu0 %v101, 8
    %v103 = vpop.permute.xlu0 %102
    %104 = vrot.lane.b32.xlu0 %v100, 8
    %v105 = vpop.permute.xlu0 %104
    %v108 = vsel %vm82, %v58, %v94
    %v109 = vsel %vm82, %v59, %v96
    %v110 = vsel %vm85, %v108, %v103
    %v111 = vsel %vm85, %v109, %v105
    %v114 = vrot.slane %v110, 2
    %v115 = vrot.slane %v111, 2
    %v116 = vsel %vm72, %v114, %v115
    %v118 = vsel %vm72, %v87, %v114
    %vm119 = vcmask 97280
    %v121 = vsel %vm119, %v86, 0
    %v124 = vsel %vm119, %v118, 0
    %v126 = vsel %vm119, %v116, 0
    %v128 = vsel %vm119, %v115, 0
    %vm130 = vcmask 1043456
    %v132 = vsel %vm130, %v30, 0
    %134 = vmatpush.msra.mxu0 0.0
    %135 = vmatpush.msra.mxu0 0.0
    %136 = vmatpush.msra.mxu0 0.0
    %137 = vmatpush.msra.mxu0 0.0
    %138 = vmatpush.msra.mxu0 0.0
    %139 = vmatpush.msra.mxu0 0.0
    %140 = vmatpush.msra.mxu0 0.0
    %141 = vmatpush.msra.mxu0 0.0
    %142 = vmatpush.msra.mxu0 0.0
    %143 = vmatpush.msra.mxu0 0.0
    %144 = vmatpush.msra.mxu0 0.0
    %145 = vmatpush.msra.mxu0 0.0
    %146 = vmatpush.msra.mxu0 0.0
    %147 = vmatpush.msra.mxu0 0.0
    %v148 = vand.u32 %v132, 4294901760
    %149 = vmatpush.msra.mxu0 %v148
    %v150 = vand.u32 %v29, 4294901760
    %151 = vmatpush.msra.mxu0 %v150
    %v152 = vand.u32 %v121, 4294901760
    %v153 = vsub.f32 %v121, %v152
    %v154 = vand.u32 %v153, 4294901760
    %v155 = vsub.f32 %v153, %v154
    %v156 = vand.u32 %v155, 4294901760
    %157 = vmatmul.f32.gmra.mxu0 %v156
    %v158 = vpop.f32.mrf.mxu0
    %v159 = vadd.f32 0.0, %v158
    %v160 = vand.u32 %v124, 4294901760
    %v161 = vsub.f32 %v124, %v160
    %v162 = vand.u32 %v161, 4294901760
    %v163 = vsub.f32 %v161, %v162
    %v164 = vand.u32 %v163, 4294901760
    %165 = vmatmul.f32.gmra.mxu0 %v164
    %v166 = vpop.f32.mrf.mxu0
    %v167 = vadd.f32 0.0, %v166
    %v168 = vand.u32 %v126, 4294901760
    %v169 = vsub.f32 %v126, %v168
    %v170 = vand.u32 %v169, 4294901760
    %v171 = vsub.f32 %v169, %v170
    %v172 = vand.u32 %v171, 4294901760
    %173 = vmatmul.f32.gmra.mxu0 %v172
    %v174 = vpop.f32.mrf.mxu0
    %v175 = vadd.f32 0.0, %v174
    %v176 = vand.u32 %v128, 4294901760
    %v177 = vsub.f32 %v128, %v176
    %v178 = vand.u32 %v177, 4294901760
    %v179 = vsub.f32 %v177, %v178
    %v180 = vand.u32 %v179, 4294901760
    %181 = vmatmul.f32.gmra.mxu0 %v180
    %v182 = vpop.f32.mrf.mxu0
    %v183 = vadd.f32 0.0, %v182
    %184 = vdwg.mxu0
    %185 = vmatpush.msra.mxu0 0.0
    %186 = vmatpush.msra.mxu0 0.0
    %187 = vmatpush.msra.mxu0 0.0
    %188 = vmatpush.msra.mxu0 0.0
    %189 = vmatpush.msra.mxu0 0.0
    %190 = vmatpush.msra.mxu0 0.0
    %191 = vmatpush.msra.mxu0 0.0
    %192 = vmatpush.msra.mxu0 0.0
    %193 = vmatpush.msra.mxu0 0.0
    %194 = vmatpush.msra.mxu0 0.0
    %195 = vmatpush.msra.mxu0 0.0
    %196 = vmatpush.msra.mxu0 0.0
    %197 = vmatpush.msra.mxu0 0.0
    %198 = vmatpush.msra.mxu0 0.0
    %v199 = vand.u32 %v132, 4294901760
    %v200 = vsub.f32 %v132, %v199
    %v201 = vand.u32 %v200, 4294901760
    %v202 = vsub.f32 %v200, %v201
    %v203 = vand.u32 %v202, 4294901760
    %204 = vmatpush.msra.mxu0 %v203
    %v205 = vand.u32 %v29, 4294901760
    %v206 = vsub.f32 %v29, %v205
    %v207 = vand.u32 %v206, 4294901760
    %v208 = vsub.f32 %v206, %v207
    %v209 = vand.u32 %v208, 4294901760
    %210 = vmatpush.msra.mxu0 %v209
    %v211 = vand.u32 %v121, 4294901760
    %212 = vmatmul.f32.gmra.mxu0 %v211
    %v213 = vpop.f32.mrf.mxu0
    %v214 = vadd.f32 %v159, %v213
    %v215 = vand.u32 %v124, 4294901760
    %216 = vmatmul.f32.gmra.mxu0 %v215
    %v217 = vpop.f32.mrf.mxu0
    %v218 = vadd.f32 %v167, %v217
    %v219 = vand.u32 %v126, 4294901760
    %220 = vmatmul.f32.gmra.mxu0 %v219
    %v221 = vpop.f32.mrf.mxu0
    %v222 = vadd.f32 %v175, %v221
    %v223 = vand.u32 %v128, 4294901760
    %224 = vmatmul.f32.gmra.mxu0 %v223
    %v225 = vpop.f32.mrf.mxu0
    %v226 = vadd.f32 %v183, %v225
    %227 = vdwg.mxu0
    %228 = vmatpush.msra.mxu0 0.0
    %229 = vmatpush.msra.mxu0 0.0
    %230 = vmatpush.msra.mxu0 0.0
    %231 = vmatpush.msra.mxu0 0.0
    %232 = vmatpush.msra.mxu0 0.0
    %233 = vmatpush.msra.mxu0 0.0
    %234 = vmatpush.msra.mxu0 0.0
    %235 = vmatpush.msra.mxu0 0.0
    %236 = vmatpush.msra.mxu0 0.0
    %237 = vmatpush.msra.mxu0 0.0
    %238 = vmatpush.msra.mxu0 0.0
    %239 = vmatpush.msra.mxu0 0.0
    %240 = vmatpush.msra.mxu0 0.0
    %241 = vmatpush.msra.mxu0 0.0
    %v242 = vand.u32 %v132, 4294901760
    %v243 = vsub.f32 %v132, %v242
    %244 = vmatpush.msra.mxu0 %v243
    %v245 = vand.u32 %v29, 4294901760
    %v246 = vsub.f32 %v29, %v245
    %247 = vmatpush.msra.mxu0 %v246
    %v248 = vand.u32 %v121, 4294901760
    %v249 = vsub.f32 %v121, %v248
    %250 = vmatmul.f32.gmra.mxu0 %v249
    %v251 = vpop.f32.mrf.mxu0
    %v252 = vadd.f32 %v214, %v251
    %v253 = vand.u32 %v124, 4294901760
    %v254 = vsub.f32 %v124, %v253
    %255 = vmatmul.f32.gmra.mxu0 %v254
    %v256 = vpop.f32.mrf.mxu0
    %v257 = vadd.f32 %v218, %v256
    %v258 = vand.u32 %v126, 4294901760
    %v259 = vsub.f32 %v126, %v258
    %260 = vmatmul.f32.gmra.mxu0 %v259
    %v261 = vpop.f32.mrf.mxu0
    %v262 = vadd.f32 %v222, %v261
    %v263 = vand.u32 %v128, 4294901760
    %v264 = vsub.f32 %v128, %v263
    %265 = vmatmul.f32.gmra.mxu0 %v264
    %v266 = vpop.f32.mrf.mxu0
    %v267 = vadd.f32 %v226, %v266
    %268 = vdwg.mxu0
    %269 = vmatpush.msra.mxu0 0.0
    %270 = vmatpush.msra.mxu0 0.0
    %271 = vmatpush.msra.mxu0 0.0
    %272 = vmatpush.msra.mxu0 0.0
    %273 = vmatpush.msra.mxu0 0.0
    %274 = vmatpush.msra.mxu0 0.0
    %275 = vmatpush.msra.mxu0 0.0
    %276 = vmatpush.msra.mxu0 0.0
    %277 = vmatpush.msra.mxu0 0.0
    %278 = vmatpush.msra.mxu0 0.0
    %279 = vmatpush.msra.mxu0 0.0
    %280 = vmatpush.msra.mxu0 0.0
    %281 = vmatpush.msra.mxu0 0.0
    %282 = vmatpush.msra.mxu0 0.0
    %v283 = vand.u32 %v132, 4294901760
    %284 = vmatpush.msra.mxu0 %v283
    %v285 = vand.u32 %v29, 4294901760
    %286 = vmatpush.msra.mxu0 %v285
    %v287 = vand.u32 %v121, 4294901760
    %v288 = vsub.f32 %v121, %v287
    %v289 = vand.u32 %v288, 4294901760
    %290 = vmatmul.f32.gmra.mxu0 %v289
    %v291 = vpop.f32.mrf.mxu0
    %v292 = vadd.f32 %v252, %v291
    %v293 = vand.u32 %v124, 4294901760
    %v294 = vsub.f32 %v124, %v293
    %v295 = vand.u32 %v294, 4294901760
    %296 = vmatmul.f32.gmra.mxu0 %v295
    %v297 = vpop.f32.mrf.mxu0
    %v298 = vadd.f32 %v257, %v297
    %v299 = vand.u32 %v126, 4294901760
    %v300 = vsub.f32 %v126, %v299
    %v301 = vand.u32 %v300, 4294901760
    %302 = vmatmul.f32.gmra.mxu0 %v301
    %v303 = vpop.f32.mrf.mxu0
    %v304 = vadd.f32 %v262, %v303
    %v305 = vand.u32 %v128, 4294901760
    %v306 = vsub.f32 %v128, %v305
    %v307 = vand.u32 %v306, 4294901760
    %308 = vmatmul.f32.gmra.mxu0 %v307
    %v309 = vpop.f32.mrf.mxu0
    %v310 = vadd.f32 %v267, %v309
    %311 = vdwg.mxu0
    %312 = vmatpush.msra.mxu0 0.0
    %313 = vmatpush.msra.mxu0 0.0
    %314 = vmatpush.msra.mxu0 0.0
    %315 = vmatpush.msra.mxu0 0.0
    %316 = vmatpush.msra.mxu0 0.0
    %317 = vmatpush.msra.mxu0 0.0
    %318 = vmatpush.msra.mxu0 0.0
    %319 = vmatpush.msra.mxu0 0.0
    %320 = vmatpush.msra.mxu0 0.0
    %321 = vmatpush.msra.mxu0 0.0
    %322 = vmatpush.msra.mxu0 0.0
    %323 = vmatpush.msra.mxu0 0.0
    %324 = vmatpush.msra.mxu0 0.0
    %325 = vmatpush.msra.mxu0 0.0
    %v326 = vand.u32 %v132, 4294901760
    %v327 = vsub.f32 %v132, %v326
    %v328 = vand.u32 %v327, 4294901760
    %329 = vmatpush.msra.mxu0 %v328
    %v330 = vand.u32 %v29, 4294901760
    %v331 = vsub.f32 %v29, %v330
    %v332 = vand.u32 %v331, 4294901760
    %333 = vmatpush.msra.mxu0 %v332
    %v334 = vand.u32 %v121, 4294901760
    %335 = vmatmul.f32.gmra.mxu0 %v334
    %v336 = vpop.f32.mrf.mxu0
    %v337 = vadd.f32 %v292, %v336
    %v338 = vand.u32 %v124, 4294901760
    %339 = vmatmul.f32.gmra.mxu0 %v338
    %v340 = vpop.f32.mrf.mxu0
    %v341 = vadd.f32 %v298, %v340
    %v342 = vand.u32 %v126, 4294901760
    %343 = vmatmul.f32.gmra.mxu0 %v342
    %v344 = vpop.f32.mrf.mxu0
    %v345 = vadd.f32 %v304, %v344
    %v346 = vand.u32 %v128, 4294901760
    %347 = vmatmul.f32.gmra.mxu0 %v346
    %v348 = vpop.f32.mrf.mxu0
    %v349 = vadd.f32 %v310, %v348
    %350 = vdwg.mxu0
    %351 = vmatpush.msra.mxu0 0.0
    %352 = vmatpush.msra.mxu0 0.0
    %353 = vmatpush.msra.mxu0 0.0
    %354 = vmatpush.msra.mxu0 0.0
    %355 = vmatpush.msra.mxu0 0.0
    %356 = vmatpush.msra.mxu0 0.0
    %357 = vmatpush.msra.mxu0 0.0
    %358 = vmatpush.msra.mxu0 0.0
    %359 = vmatpush.msra.mxu0 0.0
    %360 = vmatpush.msra.mxu0 0.0
    %361 = vmatpush.msra.mxu0 0.0
    %362 = vmatpush.msra.mxu0 0.0
    %363 = vmatpush.msra.mxu0 0.0
    %364 = vmatpush.msra.mxu0 0.0
    %v365 = vand.u32 %v132, 4294901760
    %366 = vmatpush.msra.mxu0 %v365
    %v367 = vand.u32 %v29, 4294901760
    %368 = vmatpush.msra.mxu0 %v367
    %v369 = vand.u32 %v121, 4294901760
    %370 = vmatmul.f32.gmra.mxu0 %v369
    %v371 = vpop.f32.mrf.mxu0
    %v372 = vadd.f32 %v337, %v371
    %v373 = vand.u32 %v124, 4294901760
    %374 = vmatmul.f32.gmra.mxu0 %v373
    %v375 = vpop.f32.mrf.mxu0
    %v376 = vadd.f32 %v341, %v375
    %v377 = vand.u32 %v126, 4294901760
    %378 = vmatmul.f32.gmra.mxu0 %v377
    %v379 = vpop.f32.mrf.mxu0
    %v380 = vadd.f32 %v345, %v379
    %v381 = vand.u32 %v128, 4294901760
    %382 = vmatmul.f32.gmra.mxu0 %v381
    %v383 = vpop.f32.mrf.mxu0
    %v384 = vadd.f32 %v349, %v383
    %385 = vdwg.mxu0
    %v386 = vperm.slane %v31, 0
    %v387 = vmul.f32 %v372, %v386
    %v388 = vmul.f32 %v376, %v386
    %v389 = vmul.f32 %v380, %v386
    %v390 = vmul.f32 %v384, %v386
    %v391 = vperm.slane %v31, 1
    %v392 = vadd.f32 %v387, %v391
    %v393 = vadd.f32 %v388, %v391
    %v394 = vadd.f32 %v389, %v391
    %v395 = vadd.f32 %v390, %v391
    %v396 = vmax.f32 %v392, 0.0
    %v397 = vmax.f32 %v393, 0.0
    %v398 = vmax.f32 %v394, 0.0
    %v399 = vmax.f32 %v395, 0.0
    %v404 = vrot.slane %v396, 1
    %v405 = vrot.slane %v397, 1
    %v406 = vsel %vm62, %v404, %v405
    %v407 = vrot.slane %v398, 1
    %v408 = vsel %vm62, %v405, %v407
    %v409 = vrot.slane %v399, 1
    %v410 = vsel %vm62, %v407, %v409
    %v415 = vmax.f32 %v396, %v406
    %v416 = vmax.f32 %v397, %v408
    %v417 = vmax.f32 %v398, %v410
    %v418 = vmax.f32 %v399, %v409
    %v420 = vrot.slane %v415, 1
    %v422 = vrot.slane %v415, 2
    %v424 = vrot.slane %v415, 3
    %v427 = vrot.slane %v416, 4
    %v429 = vrot.slane %v416, 5
    %v431 = vrot.slane %v416, 6
    %v433 = vrot.slane %v416, 7
    %v436 = vrot.slane %v417, 1
    %v438 = vrot.slane %v417, 2
    %v440 = vrot.slane %v417, 3
    %v443 = vrot.slane %v418, 4
    %v445 = vrot.slane %v418, 5
    %vm447 = vcmask 1040384
    %v448 = vsel %vm447, %v415, %v420
    %vm449 = vcmask 1041408
    %v450 = vsel %vm449, %v448, %v422
    %vm451 = vcmask 1042432
    %v452 = vsel %vm451, %v450, %v424
    %v453 = vsel %vm130, %v452, %v427
    %vm454 = vcmask 1044480
    %v455 = vsel %vm454, %v453, %v429
    %v456 = vsel %vm72, %v455, %v431
    %v457 = vsel %vm62, %v456, %v433
    %v458 = vsel %vm447, %v417, %v436
    %v459 = vsel %vm449, %v458, %v438
    %v460 = vsel %vm451, %v459, %v440
    %v461 = vsel %vm130, %v460, %v443
    %v462 = vsel %vm454, %v461, %v445
    %v464 = vrot.slane %v457, 1
    %465 = vrot.lane.b32.xlu0 %v464, 8
    %v466 = vpop.permute.xlu0 %465
    %v468 = vrot.slane %v457, 2
    %469 = vrot.lane.b32.xlu0 %v468, 16
    %v470 = vpop.permute.xlu0 %469
    %v472 = vsel %vm85, %v457, %v466
    %vm473 = vcmask 130048
    %v474 = vsel %vm473, %v472, %v470
    %v476 = vrot.slane %v462, 1
    %477 = vrot.lane.b32.xlu0 %v476, 8
    %v478 = vpop.permute.xlu0 %477
    %v480 = vrot.slane %v462, 2
    %481 = vrot.lane.b32.xlu0 %v480, 16
    %v482 = vpop.permute.xlu0 %481
    %v484 = vsel %vm85, %v457, %v478
    %v485 = vsel %vm85, %v462, %v478
    %v486 = vsel %vm473, %v484, %v482
    %v487 = vsel %vm473, %v485, %v482
    %v490 = vrot.slane %v486, 2
    %v491 = vrot.slane %v487, 2
    %v492 = vsel %vm72, %v490, %v491
    %v494 = vsel %vm454, %v474, %v492
    %vm495 = vcmask 195584
    %v497 = vsel %vm495, %v494, 0
    %v499 = vsel %vm495, %v491, 0
    %501 = vmatpush.msra.mxu0 0.0
    %502 = vmatpush.msra.mxu0 0.0
    %503 = vmatpush.msra.mxu0 0.0
    %504 = vmatpush.msra.mxu0 0.0
    %505 = vmatpush.msra.mxu0 0.0
    %506 = vmatpush.msra.mxu0 0.0
    %507 = vmatpush.msra.mxu0 0.0
    %508 = vmatpush.msra.mxu0 0.0
    %509 = vmatpush.msra.mxu0 0.0
    %510 = vmatpush.msra.mxu0 0.0
    %511 = vmatpush.msra.mxu0 0.0
    %512 = vmatpush.msra.mxu0 0.0
    %513 = vmatpush.msra.mxu0 0.0
    %v514 = vand.u32 %v48, 4294901760
    %515 = vmatpush.msra.mxu0 %v514
    %v516 = vand.u32 %v44, 4294901760
    %517 = vmatpush.msra.mxu0 %v516
    %v518 = vand.u32 %v40, 4294901760
    %519 = vmatpush.msra.mxu0 %v518
    %v520 = vand.u32 %v497, 4294901760
    %v521 = vsub.f32 %v497, %v520
    %v522 = vand.u32 %v521, 4294901760
    %v523 = vsub.f32 %v521, %v522
    %v524 = vand.u32 %v523, 4294901760
    %525 = vmatmul.f32.gmra.mxu0 %v524
    %v526 = vpop.f32.mrf.mxu0
    %v527 = vadd.f32 0.0, %v526
    %v528 = vand.u32 %v499, 4294901760
    %v529 = vsub.f32 %v499, %v528
    %v530 = vand.u32 %v529, 4294901760
    %v531 = vsub.f32 %v529, %v530
    %v532 = vand.u32 %v531, 4294901760
    %533 = vmatmul.f32.gmra.mxu0 %v532
    %v534 = vpop.f32.mrf.mxu0
    %v535 = vadd.f32 0.0, %v534
    %536 = vdwg.mxu0
    %537 = vmatpush.msra.mxu0 0.0
    %538 = vmatpush.msra.mxu0 0.0
    %539 = vmatpush.msra.mxu0 0.0
    %540 = vmatpush.msra.mxu0 0.0
    %541 = vmatpush.msra.mxu0 0.0
    %542 = vmatpush.msra.mxu0 0.0
    %543 = vmatpush.msra.mxu0 0.0
    %544 = vmatpush.msra.mxu0 0.0
    %545 = vmatpush.msra.mxu0 0.0
    %546 = vmatpush.msra.mxu0 0.0
    %547 = vmatpush.msra.mxu0 0.0
    %548 = vmatpush.msra.mxu0 0.0
    %549 = vmatpush.msra.mxu0 0.0
    %v550 = vand.u32 %v48, 4294901760
    %v551 = vsub.f32 %v48, %v550
    %v552 = vand.u32 %v551, 4294901760
    %v553 = vsub.f32 %v551, %v552
    %v554 = vand.u32 %v553, 4294901760
    %555 = vmatpush.msra.mxu0 %v554
    %v556 = vand.u32 %v44, 4294901760
    %v557 = vsub.f32 %v44, %v556
    %v558 = vand.u32 %v557, 4294901760
    %v559 = vsub.f32 %v557, %v558
    %v560 = vand.u32 %v559, 4294901760
    %561 = vmatpush.msra.mxu0 %v560
    %v562 = vand.u32 %v40, 4294901760
    %v563 = vsub.f32 %v40, %v562
    %v564 = vand.u32 %v563, 4294901760
    %v565 = vsub.f32 %v563, %v564
    %v566 = vand.u32 %v565, 4294901760
    %567 = vmatpush.msra.mxu0 %v566
    %v568 = vand.u32 %v497, 4294901760
    %569 = vmatmul.f32.gmra.mxu0 %v568
    %v570 = vpop.f32.mrf.mxu0
    %v571 = vadd.f32 %v527, %v570
    %v572 = vand.u32 %v499, 4294901760
    %573 = vmatmul.f32.gmra.mxu0 %v572
    %v574 = vpop.f32.mrf.mxu0
    %v575 = vadd.f32 %v535, %v574
    %576 = vdwg.mxu0
    %577 = vmatpush.msra.mxu0 0.0
    %578 = vmatpush.msra.mxu0 0.0
    %579 = vmatpush.msra.mxu0 0.0
    %580 = vmatpush.msra.mxu0 0.0
    %581 = vmatpush.msra.mxu0 0.0
    %582 = vmatpush.msra.mxu0 0.0
    %583 = vmatpush.msra.mxu0 0.0
    %584 = vmatpush.msra.mxu0 0.0
    %585 = vmatpush.msra.mxu0 0.0
    %586 = vmatpush.msra.mxu0 0.0
    %587 = vmatpush.msra.mxu0 0.0
    %588 = vmatpush.msra.mxu0 0.0
    %589 = vmatpush.msra.mxu0 0.0
    %v590 = vand.u32 %v48, 4294901760
    %v591 = vsub.f32 %v48, %v590
    %592 = vmatpush.msra.mxu0 %v591
    %v593 = vand.u32 %v44, 4294901760
    %v594 = vsub.f32 %v44, %v593
    %595 = vmatpush.msra.mxu0 %v594
    %v596 = vand.u32 %v40, 4294901760
    %v597 = vsub.f32 %v40, %v596
    %598 = vmatpush.msra.mxu0 %v597
    %v599 = vand.u32 %v497, 4294901760
    %v600 = vsub.f32 %v497, %v599
    %601 = vmatmul.f32.gmra.mxu0 %v600
    %v602 = vpop.f32.mrf.mxu0
    %v603 = vadd.f32 %v571, %v602
    %v604 = vand.u32 %v499, 4294901760
    %v605 = vsub.f32 %v499, %v604
    %606 = vmatmul.f32.gmra.mxu0 %v605
    %v607 = vpop.f32.mrf.mxu0
    %v608 = vadd.f32 %v575, %v607
    %609 = vdwg.mxu0
    %610 = vmatpush.msra.mxu0 0.0
    %611 = vmatpush.msra.mxu0 0.0
    %612 = vmatpush.msra.mxu0 0.0
    %613 = vmatpush.msra.mxu0 0.0
    %614 = vmatpush.msra.mxu0 0.0
    %615 = vmatpush.msra.mxu0 0.0
    %616 = vmatpush.msra.mxu0 0.0
    %617 = vmatpush.msra.mxu0 0.0
    %618 = vmatpush.msra.mxu0 0.0
    %619 = vmatpush.msra.mxu0 0.0
    %620 = vmatpush.msra.mxu0 0.0
    %621 = vmatpush.msra.mxu0 0.0
    %622 = vmatpush.msra.mxu0 0.0
    %v623 = vand.u32 %v48, 4294901760
    %624 = vmatpush.msra.mxu0 %v623
    %v625 = vand.u32 %v44, 4294901760
    %626 = vmatpush.msra.mxu0 %v625
    %v627 = vand.u32 %v40, 4294901760
    %628 = vmatpush.msra.mxu0 %v627
    %v629 = vand.u32 %v497, 4294901760
    %v630 = vsub.f32 %v497, %v629
    %v631 = vand.u32 %v630, 4294901760
    %632 = vmatmul.f32.gmra.mxu0 %v631
    %v633 = vpop.f32.mrf.mxu0
    %v634 = vadd.f32 %v603, %v633
    %v635 = vand.u32 %v499, 4294901760
    %v636 = vsub.f32 %v499, %v635
    %v637 = vand.u32 %v636, 4294901760
    %638 = vmatmul.f32.gmra.mxu0 %v637
    %v639 = vpop.f32.mrf.mxu0
    %v640 = vadd.f32 %v608, %v639
    %641 = vdwg.mxu0
    %642 = vmatpush.msra.mxu0 0.0
    %643 = vmatpush.msra.mxu0 0.0
    %644 = vmatpush.msra.mxu0 0.0
    %645 = vmatpush.msra.mxu0 0.0
    %646 = vmatpush.msra.mxu0 0.0
    %647 = vmatpush.msra.mxu0 0.0
    %648 = vmatpush.msra.mxu0 0.0
    %649 = vmatpush.msra.mxu0 0.0
    %650 = vmatpush.msra.mxu0 0.0
    %651 = vmatpush.msra.mxu0 0.0
    %652 = vmatpush.msra.mxu0 0.0
    %653 = vmatpush.msra.mxu0 0.0
    %654 = vmatpush.msra.mxu0 0.0
    %v655 = vand.u32 %v48, 4294901760
    %v656 = vsub.f32 %v48, %v655
    %v657 = vand.u32 %v656, 4294901760
    %658 = vmatpush.msra.mxu0 %v657
    %v659 = vand.u32 %v44, 4294901760
    %v660 = vsub.f32 %v44, %v659
    %v661 = vand.u32 %v660, 4294901760
    %662 = vmatpush.msra.mxu0 %v661
    %v663 = vand.u32 %v40, 4294901760
    %v664 = vsub.f32 %v40, %v663
    %v665 = vand.u32 %v664, 4294901760
    %666 = vmatpush.msra.mxu0 %v665
    %v667 = vand.u32 %v497, 4294901760
    %668 = vmatmul.f32.gmra.mxu0 %v667
    %v669 = vpop.f32.mrf.mxu0
    %v670 = vadd.f32 %v634, %v669
    %v671 = vand.u32 %v499, 4294901760
    %672 = vmatmul.f32.gmra.mxu0 %v671
    %v673 = vpop.f32.mrf.mxu0
    %v674 = vadd.f32 %v640, %v673
    %675 = vdwg.mxu0
    %676 = vmatpush.msra.mxu0 0.0
    %677 = vmatpush.msra.mxu0 0.0
    %678 = vmatpush.msra.mxu0 0.0
    %679 = vmatpush.msra.mxu0 0.0
    %680 = vmatpush.msra.mxu0 0.0
    %681 = vmatpush.msra.mxu0 0.0
    %682 = vmatpush.msra.mxu0 0.0
    %683 = vmatpush.msra.mxu0 0.0
    %684 = vmatpush.msra.mxu0 0.0
    %685 = vmatpush.msra.mxu0 0.0
    %686 = vmatpush.msra.mxu0 0.0
    %687 = vmatpush.msra.mxu0 0.0
    %688 = vmatpush.msra.mxu0 0.0
    %v689 = vand.u32 %v48, 4294901760
    %690 = vmatpush.msra.mxu0 %v689
    %v691 = vand.u32 %v44, 4294901760
    %692 = vmatpush.msra.mxu0 %v691
    %v693 = vand.u32 %v40, 4294901760
    %694 = vmatpush.msra.mxu0 %v693
    %v695 = vand.u32 %v497, 4294901760
    %696 = vmatmul.f32.gmra.mxu0 %v695
    %v697 = vpop.f32.mrf.mxu0
    %v698 = vadd.f32 %v670, %v697
    %v699 = vand.u32 %v499, 4294901760
    %700 = vmatmul.f32.gmra.mxu0 %v699
    %v701 = vpop.f32.mrf.mxu0
    %v702 = vadd.f32 %v674, %v701
    %703 = vdwg.mxu0
    %704 = vmatpush.msra.mxu0 0.0
    %705 = vmatpush.msra.mxu0 0.0
    %706 = vmatpush.msra.mxu0 0.0
    %707 = vmatpush.msra.mxu0 0.0
    %708 = vmatpush.msra.mxu0 0.0
    %709 = vmatpush.msra.mxu0 0.0
    %710 = vmatpush.msra.mxu0 0.0
    %711 = vmatpush.msra.mxu0 0.0
    %712 = vmatpush.msra.mxu0 0.0
    %713 = vmatpush.msra.mxu0 0.0
    %714 = vmatpush.msra.mxu0 0.0
    %715 = vmatpush.msra.mxu0 0.0
    %716 = vmatpush.msra.mxu0 0.0
    %v717 = vand.u32 %v49, 4294901760
    %718 = vmatpush.msra.mxu0 %v717
    %v719 = vand.u32 %v45, 4294901760
    %720 = vmatpush.msra.mxu0 %v719
    %v721 = vand.u32 %v41, 4294901760
    %722 = vmatpush.msra.mxu0 %v721
    %v723 = vand.u32 %v497, 4294901760
    %v724 = vsub.f32 %v497, %v723
    %v725 = vand.u32 %v724, 4294901760
    %v726 = vsub.f32 %v724, %v725
    %v727 = vand.u32 %v726, 4294901760
    %728 = vmatmul.f32.gmra.mxu0 %v727
    %v729 = vpop.f32.mrf.mxu0
    %v730 = vadd.f32 0.0, %v729
    %v731 = vand.u32 %v499, 4294901760
    %v732 = vsub.f32 %v499, %v731
    %v733 = vand.u32 %v732, 4294901760
    %v734 = vsub.f32 %v732, %v733
    %v735 = vand.u32 %v734, 4294901760
    %736 = vmatmul.f32.gmra.mxu0 %v735
    %v737 = vpop.f32.mrf.mxu0
    %v738 = vadd.f32 0.0, %v737
    %739 = vdwg.mxu0
    %740 = vmatpush.msra.mxu0 0.0
    %741 = vmatpush.msra.mxu0 0.0
    %742 = vmatpush.msra.mxu0 0.0
    %743 = vmatpush.msra.mxu0 0.0
    %744 = vmatpush.msra.mxu0 0.0
    %745 = vmatpush.msra.mxu0 0.0
    %746 = vmatpush.msra.mxu0 0.0
    %747 = vmatpush.msra.mxu0 0.0
    %748 = vmatpush.msra.mxu0 0.0
    %749 = vmatpush.msra.mxu0 0.0
    %750 = vmatpush.msra.mxu0 0.0
    %751 = vmatpush.msra.mxu0 0.0
    %752 = vmatpush.msra.mxu0 0.0
    %v753 = vand.u32 %v49, 4294901760
    %v754 = vsub.f32 %v49, %v753
    %v755 = vand.u32 %v754, 4294901760
    %v756 = vsub.f32 %v754, %v755
    %v757 = vand.u32 %v756, 4294901760
    %758 = vmatpush.msra.mxu0 %v757
    %v759 = vand.u32 %v45, 4294901760
    %v760 = vsub.f32 %v45, %v759
    %v761 = vand.u32 %v760, 4294901760
    %v762 = vsub.f32 %v760, %v761
    %v763 = vand.u32 %v762, 4294901760
    %764 = vmatpush.msra.mxu0 %v763
    %v765 = vand.u32 %v41, 4294901760
    %v766 = vsub.f32 %v41, %v765
    %v767 = vand.u32 %v766, 4294901760
    %v768 = vsub.f32 %v766, %v767
    %v769 = vand.u32 %v768, 4294901760
    %770 = vmatpush.msra.mxu0 %v769
    %v771 = vand.u32 %v497, 4294901760
    %772 = vmatmul.f32.gmra.mxu0 %v771
    %v773 = vpop.f32.mrf.mxu0
    %v774 = vadd.f32 %v730, %v773
    %v775 = vand.u32 %v499, 4294901760
    %776 = vmatmul.f32.gmra.mxu0 %v775
    %v777 = vpop.f32.mrf.mxu0
    %v778 = vadd.f32 %v738, %v777
    %779 = vdwg.mxu0
    %780 = vmatpush.msra.mxu0 0.0
    %781 = vmatpush.msra.mxu0 0.0
    %782 = vmatpush.msra.mxu0 0.0
    %783 = vmatpush.msra.mxu0 0.0
    %784 = vmatpush.msra.mxu0 0.0
    %785 = vmatpush.msra.mxu0 0.0
    %786 = vmatpush.msra.mxu0 0.0
    %787 = vmatpush.msra.mxu0 0.0
    %788 = vmatpush.msra.mxu0 0.0
    %789 = vmatpush.msra.mxu0 0.0
    %790 = vmatpush.msra.mxu0 0.0
    %791 = vmatpush.msra.mxu0 0.0
    %792 = vmatpush.msra.mxu0 0.0
    %v793 = vand.u32 %v49, 4294901760
    %v794 = vsub.f32 %v49, %v793
    %795 = vmatpush.msra.mxu0 %v794
    %v796 = vand.u32 %v45, 4294901760
    %v797 = vsub.f32 %v45, %v796
    %798 = vmatpush.msra.mxu0 %v797
    %v799 = vand.u32 %v41, 4294901760
    %v800 = vsub.f32 %v41, %v799
    %801 = vmatpush.msra.mxu0 %v800
    %v802 = vand.u32 %v497, 4294901760
    %v803 = vsub.f32 %v497, %v802
    %804 = vmatmul.f32.gmra.mxu0 %v803
    %v805 = vpop.f32.mrf.mxu0
    %v806 = vadd.f32 %v774, %v805
    %v807 = vand.u32 %v499, 4294901760
    %v808 = vsub.f32 %v499, %v807
    %809 = vmatmul.f32.gmra.mxu0 %v808
    %v810 = vpop.f32.mrf.mxu0
    %v811 = vadd.f32 %v778, %v810
    %812 = vdwg.mxu0
    %813 = vmatpush.msra.mxu0 0.0
    %814 = vmatpush.msra.mxu0 0.0
    %815 = vmatpush.msra.mxu0 0.0
    %816 = vmatpush.msra.mxu0 0.0
    %817 = vmatpush.msra.mxu0 0.0
    %818 = vmatpush.msra.mxu0 0.0
    %819 = vmatpush.msra.mxu0 0.0
    %820 = vmatpush.msra.mxu0 0.0
    %821 = vmatpush.msra.mxu0 0.0
    %822 = vmatpush.msra.mxu0 0.0
    %823 = vmatpush.msra.mxu0 0.0
    %824 = vmatpush.msra.mxu0 0.0
    %825 = vmatpush.msra.mxu0 0.0
    %v826 = vand.u32 %v49, 4294901760
    %827 = vmatpush.msra.mxu0 %v826
    %v828 = vand.u32 %v45, 4294901760
    %829 = vmatpush.msra.mxu0 %v828
    %v830 = vand.u32 %v41, 4294901760
    %831 = vmatpush.msra.mxu0 %v830
    %v832 = vand.u32 %v497, 4294901760
    %v833 = vsub.f32 %v497, %v832
    %v834 = vand.u32 %v833, 4294901760
    %835 = vmatmul.f32.gmra.mxu0 %v834
    %v836 = vpop.f32.mrf.mxu0
    %v837 = vadd.f32 %v806, %v836
    %v838 = vand.u32 %v499, 4294901760
    %v839 = vsub.f32 %v499, %v838
    %v840 = vand.u32 %v839, 4294901760
    %841 = vmatmul.f32.gmra.mxu0 %v840
    %v842 = vpop.f32.mrf.mxu0
    %v843 = vadd.f32 %v811, %v842
    %844 = vdwg.mxu0
    %845 = vmatpush.msra.mxu0 0.0
    %846 = vmatpush.msra.mxu0 0.0
    %847 = vmatpush.msra.mxu0 0.0
    %848 = vmatpush.msra.mxu0 0.0
    %849 = vmatpush.msra.mxu0 0.0
    %850 = vmatpush.msra.mxu0 0.0
    %851 = vmatpush.msra.mxu0 0.0
    %852 = vmatpush.msra.mxu0 0.0
    %853 = vmatpush.msra.mxu0 0.0
    %854 = vmatpush.msra.mxu0 0.0
    %855 = vmatpush.msra.mxu0 0.0
    %856 = vmatpush.msra.mxu0 0.0
    %857 = vmatpush.msra.mxu0 0.0
    %v858 = vand.u32 %v49, 4294901760
    %v859 = vsub.f32 %v49, %v858
    %v860 = vand.u32 %v859, 4294901760
    %861 = vmatpush.msra.mxu0 %v860
    %v862 = vand.u32 %v45, 4294901760
    %v863 = vsub.f32 %v45, %v862
    %v864 = vand.u32 %v863, 4294901760
    %865 = vmatpush.msra.mxu0 %v864
    %v866 = vand.u32 %v41, 4294901760
    %v867 = vsub.f32 %v41, %v866
    %v868 = vand.u32 %v867, 4294901760
    %869 = vmatpush.msra.mxu0 %v868
    %v870 = vand.u32 %v497, 4294901760
    %871 = vmatmul.f32.gmra.mxu0 %v870
    %v872 = vpop.f32.mrf.mxu0
    %v873 = vadd.f32 %v837, %v872
    %v874 = vand.u32 %v499, 4294901760
    %875 = vmatmul.f32.gmra.mxu0 %v874
    %v876 = vpop.f32.mrf.mxu0
    %v877 = vadd.f32 %v843, %v876
    %878 = vdwg.mxu0
    %879 = vmatpush.msra.mxu0 0.0
    %880 = vmatpush.msra.mxu0 0.0
    %881 = vmatpush.msra.mxu0 0.0
    %882 = vmatpush.msra.mxu0 0.0
    %883 = vmatpush.msra.mxu0 0.0
    %884 = vmatpush.msra.mxu0 0.0
    %885 = vmatpush.msra.mxu0 0.0
    %886 = vmatpush.msra.mxu0 0.0
    %887 = vmatpush.msra.mxu0 0.0
    %888 = vmatpush.msra.mxu0 0.0
    %889 = vmatpush.msra.mxu0 0.0
    %890 = vmatpush.msra.mxu0 0.0
    %891 = vmatpush.msra.mxu0 0.0
    %v892 = vand.u32 %v49, 4294901760
    %893 = vmatpush.msra.mxu0 %v892
    %v894 = vand.u32 %v45, 4294901760
    %895 = vmatpush.msra.mxu0 %v894
    %v896 = vand.u32 %v41, 4294901760
    %897 = vmatpush.msra.mxu0 %v896
    %v898 = vand.u32 %v497, 4294901760
    %899 = vmatmul.f32.gmra.mxu0 %v898
    %v900 = vpop.f32.mrf.mxu0
    %v901 = vadd.f32 %v873, %v900
    %v902 = vand.u32 %v499, 4294901760
    %903 = vmatmul.f32.gmra.mxu0 %v902
    %v904 = vpop.f32.mrf.mxu0
    %v905 = vadd.f32 %v877, %v904
    %906 = vdwg.mxu0
    %907 = vmatpush.msra.mxu0 0.0
    %908 = vmatpush.msra.mxu0 0.0
    %909 = vmatpush.msra.mxu0 0.0
    %910 = vmatpush.msra.mxu0 0.0
    %911 = vmatpush.msra.mxu0 0.0
    %912 = vmatpush.msra.mxu0 0.0
    %913 = vmatpush.msra.mxu0 0.0
    %914 = vmatpush.msra.mxu0 0.0
    %915 = vmatpush.msra.mxu0 0.0
    %916 = vmatpush.msra.mxu0 0.0
    %917 = vmatpush.msra.mxu0 0.0
    %918 = vmatpush.msra.mxu0 0.0
    %919 = vmatpush.msra.mxu0 0.0
    %v920 = vand.u32 %v50, 4294901760
    %921 = vmatpush.msra.mxu0 %v920
    %v922 = vand.u32 %v46, 4294901760
    %923 = vmatpush.msra.mxu0 %v922
    %v924 = vand.u32 %v42, 4294901760
    %925 = vmatpush.msra.mxu0 %v924
    %v926 = vand.u32 %v497, 4294901760
    %v927 = vsub.f32 %v497, %v926
    %v928 = vand.u32 %v927, 4294901760
    %v929 = vsub.f32 %v927, %v928
    %v930 = vand.u32 %v929, 4294901760
    %931 = vmatmul.f32.gmra.mxu0 %v930
    %v932 = vpop.f32.mrf.mxu0
    %v933 = vadd.f32 0.0, %v932
    %v934 = vand.u32 %v499, 4294901760
    %v935 = vsub.f32 %v499, %v934
    %v936 = vand.u32 %v935, 4294901760
    %v937 = vsub.f32 %v935, %v936
    %v938 = vand.u32 %v937, 4294901760
    %939 = vmatmul.f32.gmra.mxu0 %v938
    %v940 = vpop.f32.mrf.mxu0
    %v941 = vadd.f32 0.0, %v940
    %942 = vdwg.mxu0
    %943 = vmatpush.msra.mxu0 0.0
    %944 = vmatpush.msra.mxu0 0.0
    %945 = vmatpush.msra.mxu0 0.0
    %946 = vmatpush.msra.mxu0 0.0
    %947 = vmatpush.msra.mxu0 0.0
    %948 = vmatpush.msra.mxu0 0.0
    %949 = vmatpush.msra.mxu0 0.0
    %950 = vmatpush.msra.mxu0 0.0
    %951 = vmatpush.msra.mxu0 0.0
    %952 = vmatpush.msra.mxu0 0.0
    %953 = vmatpush.msra.mxu0 0.0
    %954 = vmatpush.msra.mxu0 0.0
    %955 = vmatpush.msra.mxu0 0.0
    %v956 = vand.u32 %v50, 4294901760
    %v957 = vsub.f32 %v50, %v956
    %v958 = vand.u32 %v957, 4294901760
    %v959 = vsub.f32 %v957, %v958
    %v960 = vand.u32 %v959, 4294901760
    %961 = vmatpush.msra.mxu0 %v960
    %v962 = vand.u32 %v46, 4294901760
    %v963 = vsub.f32 %v46, %v962
    %v964 = vand.u32 %v963, 4294901760
    %v965 = vsub.f32 %v963, %v964
    %v966 = vand.u32 %v965, 4294901760
    %967 = vmatpush.msra.mxu0 %v966
    %v968 = vand.u32 %v42, 4294901760
    %v969 = vsub.f32 %v42, %v968
    %v970 = vand.u32 %v969, 4294901760
    %v971 = vsub.f32 %v969, %v970
    %v972 = vand.u32 %v971, 4294901760
    %973 = vmatpush.msra.mxu0 %v972
    %v974 = vand.u32 %v497, 4294901760
    %975 = vmatmul.f32.gmra.mxu0 %v974
    %v976 = vpop.f32.mrf.mxu0
    %v977 = vadd.f32 %v933, %v976
    %v978 = vand.u32 %v499, 4294901760
    %979 = vmatmul.f32.gmra.mxu0 %v978
    %v980 = vpop.f32.mrf.mxu0
    %v981 = vadd.f32 %v941, %v980
    %982 = vdwg.mxu0
    %983 = vmatpush.msra.mxu0 0.0
    %984 = vmatpush.msra.mxu0 0.0
    %985 = vmatpush.msra.mxu0 0.0
    %986 = vmatpush.msra.mxu0 0.0
    %987 = vmatpush.msra.mxu0 0.0
    %988 = vmatpush.msra.mxu0 0.0
    %989 = vmatpush.msra.mxu0 0.0
    %990 = vmatpush.msra.mxu0 0.0
    %991 = vmatpush.msra.mxu0 0.0
    %992 = vmatpush.msra.mxu0 0.0
    %993 = vmatpush.msra.mxu0 0.0
    %994 = vmatpush.msra.mxu0 0.0
    %995 = vmatpush.msra.mxu0 0.0
    %v996 = vand.u32 %v50, 4294901760
    %v997 = vsub.f32 %v50, %v996
    %998 = vmatpush.msra.mxu0 %v997
    %v999 = vand.u32 %v46, 4294901760
    %v1000 = vsub.f32 %v46, %v999
    %1001 = vmatpush.msra.mxu0 %v1000
    %v1002 = vand.u32 %v42, 4294901760
    %v1003 = vsub.f32 %v42, %v1002
    %1004 = vmatpush.msra.mxu0 %v1003
    %v1005 = vand.u32 %v497, 4294901760
    %v1006 = vsub.f32 %v497, %v1005
    %1007 = vmatmul.f32.gmra.mxu0 %v1006
    %v1008 = vpop.f32.mrf.mxu0
    %v1009 = vadd.f32 %v977, %v1008
    %v1010 = vand.u32 %v499, 4294901760
    %v1011 = vsub.f32 %v499, %v1010
    %1012 = vmatmul.f32.gmra.mxu0 %v1011
    %v1013 = vpop.f32.mrf.mxu0
    %v1014 = vadd.f32 %v981, %v1013
    %1015 = vdwg.mxu0
    %1016 = vmatpush.msra.mxu0 0.0
    %1017 = vmatpush.msra.mxu0 0.0
    %1018 = vmatpush.msra.mxu0 0.0
    %1019 = vmatpush.msra.mxu0 0.0
    %1020 = vmatpush.msra.mxu0 0.0
    %1021 = vmatpush.msra.mxu0 0.0
    %1022 = vmatpush.msra.mxu0 0.0
    %1023 = vmatpush.msra.mxu0 0.0
    %1024 = vmatpush.msra.mxu0 0.0
    %1025 = vmatpush.msra.mxu0 0.0
    %1026 = vmatpush.msra.mxu0 0.0
    %1027 = vmatpush.msra.mxu0 0.0
    %1028 = vmatpush.msra.mxu0 0.0
    %v1029 = vand.u32 %v50, 4294901760
    %1030 = vmatpush.msra.mxu0 %v1029
    %v1031 = vand.u32 %v46, 4294901760
    %1032 = vmatpush.msra.mxu0 %v1031
    %v1033 = vand.u32 %v42, 4294901760
    %1034 = vmatpush.msra.mxu0 %v1033
    %v1035 = vand.u32 %v497, 4294901760
    %v1036 = vsub.f32 %v497, %v1035
    %v1037 = vand.u32 %v1036, 4294901760
    %1038 = vmatmul.f32.gmra.mxu0 %v1037
    %v1039 = vpop.f32.mrf.mxu0
    %v1040 = vadd.f32 %v1009, %v1039
    %v1041 = vand.u32 %v499, 4294901760
    %v1042 = vsub.f32 %v499, %v1041
    %v1043 = vand.u32 %v1042, 4294901760
    %1044 = vmatmul.f32.gmra.mxu0 %v1043
    %v1045 = vpop.f32.mrf.mxu0
    %v1046 = vadd.f32 %v1014, %v1045
    %1047 = vdwg.mxu0
    %1048 = vmatpush.msra.mxu0 0.0
    %1049 = vmatpush.msra.mxu0 0.0
    %1050 = vmatpush.msra.mxu0 0.0
    %1051 = vmatpush.msra.mxu0 0.0
    %1052 = vmatpush.msra.mxu0 0.0
    %1053 = vmatpush.msra.mxu0 0.0
    %1054 = vmatpush.msra.mxu0 0.0
    %1055 = vmatpush.msra.mxu0 0.0
    %1056 = vmatpush.msra.mxu0 0.0
    %1057 = vmatpush.msra.mxu0 0.0
    %1058 = vmatpush.msra.mxu0 0.0
    %1059 = vmatpush.msra.mxu0 0.0
    %1060 = vmatpush.msra.mxu0 0.0
    %v1061 = vand.u32 %v50, 4294901760
    %v1062 = vsub.f32 %v50, %v1061
    %v1063 = vand.u32 %v1062, 4294901760
    %1064 = vmatpush.msra.mxu0 %v1063
    %v1065 = vand.u32 %v46, 4294901760
    %v1066 = vsub.f32 %v46, %v1065
    %v1067 = vand.u32 %v1066, 4294901760
    %1068 = vmatpush.msra.mxu0 %v1067
    %v1069 = vand.u32 %v42, 4294901760
    %v1070 = vsub.f32 %v42, %v1069
    %v1071 = vand.u32 %v1070, 4294901760
    %1072 = vmatpush.msra.mxu0 %v1071
    %v1073 = vand.u32 %v497, 4294901760
    %1074 = vmatmul.f32.gmra.mxu0 %v1073
    %v1075 = vpop.f32.mrf.mxu0
    %v1076 = vadd.f32 %v1040, %v1075
    %v1077 = vand.u32 %v499, 4294901760
    %1078 = vmatmul.f32.gmra.mxu0 %v1077
    %v1079 = vpop.f32.mrf.mxu0
    %v1080 = vadd.f32 %v1046, %v1079
    %1081 = vdwg.mxu0
    %1082 = vmatpush.msra.mxu0 0.0
    %1083 = vmatpush.msra.mxu0 0.0
    %1084 = vmatpush.msra.mxu0 0.0
    %1085 = vmatpush.msra.mxu0 0.0
    %1086 = vmatpush.msra.mxu0 0.0
    %1087 = vmatpush.msra.mxu0 0.0
    %1088 = vmatpush.msra.mxu0 0.0
    %1089 = vmatpush.msra.mxu0 0.0
    %1090 = vmatpush.msra.mxu0 0.0
    %1091 = vmatpush.msra.mxu0 0.0
    %1092 = vmatpush.msra.mxu0 0.0
    %1093 = vmatpush.msra.mxu0 0.0
    %1094 = vmatpush.msra.mxu0 0.0
    %v1095 = vand.u32 %v50, 4294901760
    %1096 = vmatpush.msra.mxu0 %v1095
    %v1097 = vand.u32 %v46, 4294901760
    %1098 = vmatpush.msra.mxu0 %v1097
    %v1099 = vand.u32 %v42, 4294901760
    %1100 = vmatpush.msra.mxu0 %v1099
    %v1101 = vand.u32 %v497, 4294901760
    %1102 = vmatmul.f32.gmra.mxu0 %v1101
    %v1103 = vpop.f32.mrf.mxu0
    %v1104 = vadd.f32 %v1076, %v1103
    %v1105 = vand.u32 %v499, 4294901760
    %1106 = vmatmul.f32.gmra.mxu0 %v1105
    %v1107 = vpop.f32.mrf.mxu0
    %v1108 = vadd.f32 %v1080, %v1107
    %1109 = vdwg.mxu0
    %1110 = vmatpush.msra.mxu0 0.0
    %1111 = vmatpush.msra.mxu0 0.0
    %1112 = vmatpush.msra.mxu0 0.0
    %1113 = vmatpush.msra.mxu0 0.0
    %1114 = vmatpush.msra.mxu0 0.0
    %1115 = vmatpush.msra.mxu0 0.0
    %1116 = vmatpush.msra.mxu0 0.0
    %1117 = vmatpush.msra.mxu0 0.0
    %1118 = vmatpush.msra.mxu0 0.0
    %1119 = vmatpush.msra.mxu0 0.0
    %1120 = vmatpush.msra.mxu0 0.0
    %1121 = vmatpush.msra.mxu0 0.0
    %1122 = vmatpush.msra.mxu0 0.0
    %v1123 = vand.u32 %v51, 4294901760
    %1124 = vmatpush.msra.mxu0 %v1123
    %v1125 = vand.u32 %v47, 4294901760
    %1126 = vmatpush.msra.mxu0 %v1125
    %v1127 = vand.u32 %v43, 4294901760
    %1128 = vmatpush.msra.mxu0 %v1127
    %v1129 = vand.u32 %v497, 4294901760
    %v1130 = vsub.f32 %v497, %v1129
    %v1131 = vand.u32 %v1130, 4294901760
    %v1132 = vsub.f32 %v1130, %v1131
    %v1133 = vand.u32 %v1132, 4294901760
    %1134 = vmatmul.f32.gmra.mxu0 %v1133
    %v1135 = vpop.f32.mrf.mxu0
    %v1136 = vadd.f32 0.0, %v1135
    %v1137 = vand.u32 %v499, 4294901760
    %v1138 = vsub.f32 %v499, %v1137
    %v1139 = vand.u32 %v1138, 4294901760
    %v1140 = vsub.f32 %v1138, %v1139
    %v1141 = vand.u32 %v1140, 4294901760
    %1142 = vmatmul.f32.gmra.mxu0 %v1141
    %v1143 = vpop.f32.mrf.mxu0
    %v1144 = vadd.f32 0.0, %v1143
    %1145 = vdwg.mxu0
    %1146 = vmatpush.msra.mxu0 0.0
    %1147 = vmatpush.msra.mxu0 0.0
    %1148 = vmatpush.msra.mxu0 0.0
    %1149 = vmatpush.msra.mxu0 0.0
    %1150 = vmatpush.msra.mxu0 0.0
    %1151 = vmatpush.msra.mxu0 0.0
    %1152 = vmatpush.msra.mxu0 0.0
    %1153 = vmatpush.msra.mxu0 0.0
    %1154 = vmatpush.msra.mxu0 0.0
    %1155 = vmatpush.msra.mxu0 0.0
    %1156 = vmatpush.msra.mxu0 0.0
    %1157 = vmatpush.msra.mxu0 0.0
    %1158 = vmatpush.msra.mxu0 0.0
    %v1159 = vand.u32 %v51, 4294901760
    %v1160 = vsub.f32 %v51, %v1159
    %v1161 = vand.u32 %v1160, 4294901760
    %v1162 = vsub.f32 %v1160, %v1161
    %v1163 = vand.u32 %v1162, 4294901760
    %1164 = vmatpush.msra.mxu0 %v1163
    %v1165 = vand.u32 %v47, 4294901760
    %v1166 = vsub.f32 %v47, %v1165
    %v1167 = vand.u32 %v1166, 4294901760
    %v1168 = vsub.f32 %v1166, %v1167
    %v1169 = vand.u32 %v1168, 4294901760
    %1170 = vmatpush.msra.mxu0 %v1169
    %v1171 = vand.u32 %v43, 4294901760
    %v1172 = vsub.f32 %v43, %v1171
    %v1173 = vand.u32 %v1172, 4294901760
    %v1174 = vsub.f32 %v1172, %v1173
    %v1175 = vand.u32 %v1174, 4294901760
    %1176 = vmatpush.msra.mxu0 %v1175
    %v1177 = vand.u32 %v497, 4294901760
    %1178 = vmatmul.f32.gmra.mxu0 %v1177
    %v1179 = vpop.f32.mrf.mxu0
    %v1180 = vadd.f32 %v1136, %v1179
    %v1181 = vand.u32 %v499, 4294901760
    %1182 = vmatmul.f32.gmra.mxu0 %v1181
    %v1183 = vpop.f32.mrf.mxu0
    %v1184 = vadd.f32 %v1144, %v1183
    %1185 = vdwg.mxu0
    %1186 = vmatpush.msra.mxu0 0.0
    %1187 = vmatpush.msra.mxu0 0.0
    %1188 = vmatpush.msra.mxu0 0.0
    %1189 = vmatpush.msra.mxu0 0.0
    %1190 = vmatpush.msra.mxu0 0.0
    %1191 = vmatpush.msra.mxu0 0.0
    %1192 = vmatpush.msra.mxu0 0.0
    %1193 = vmatpush.msra.mxu0 0.0
    %1194 = vmatpush.msra.mxu0 0.0
    %1195 = vmatpush.msra.mxu0 0.0
    %1196 = vmatpush.msra.mxu0 0.0
    %1197 = vmatpush.msra.mxu0 0.0
    %1198 = vmatpush.msra.mxu0 0.0
    %v1199 = vand.u32 %v51, 4294901760
    %v1200 = vsub.f32 %v51, %v1199
    %1201 = vmatpush.msra.mxu0 %v1200
    %v1202 = vand.u32 %v47, 4294901760
    %v1203 = vsub.f32 %v47, %v1202
    %1204 = vmatpush.msra.mxu0 %v1203
    %v1205 = vand.u32 %v43, 4294901760
    %v1206 = vsub.f32 %v43, %v1205
    %1207 = vmatpush.msra.mxu0 %v1206
    %v1208 = vand.u32 %v497, 4294901760
    %v1209 = vsub.f32 %v497, %v1208
    %1210 = vmatmul.f32.gmra.mxu0 %v1209
    %v1211 = vpop.f32.mrf.mxu0
    %v1212 = vadd.f32 %v1180, %v1211
    %v1213 = vand.u32 %v499, 4294901760
    %v1214 = vsub.f32 %v499, %v1213
    %1215 = vmatmul.f32.gmra.mxu0 %v1214
    %v1216 = vpop.f32.mrf.mxu0
    %v1217 = vadd.f32 %v1184, %v1216
    %1218 = vdwg.mxu0
    %1219 = vmatpush.msra.mxu0 0.0
    %1220 = vmatpush.msra.mxu0 0.0
    %1221 = vmatpush.msra.mxu0 0.0
    %1222 = vmatpush.msra.mxu0 0.0
    %1223 = vmatpush.msra.mxu0 0.0
    %1224 = vmatpush.msra.mxu0 0.0
    %1225 = vmatpush.msra.mxu0 0.0
    %1226 = vmatpush.msra.mxu0 0.0
    %1227 = vmatpush.msra.mxu0 0.0
    %1228 = vmatpush.msra.mxu0 0.0
    %1229 = vmatpush.msra.mxu0 0.0
    %1230 = vmatpush.msra.mxu0 0.0
    %1231 = vmatpush.msra.mxu0 0.0
    %v1232 = vand.u32 %v51, 4294901760
    %1233 = vmatpush.msra.mxu0 %v1232
    %v1234 = vand.u32 %v47, 4294901760
    %1235 = vmatpush.msra.mxu0 %v1234
    %v1236 = vand.u32 %v43, 4294901760
    %1237 = vmatpush.msra.mxu0 %v1236
    %v1238 = vand.u32 %v497, 4294901760
    %v1239 = vsub.f32 %v497, %v1238
    %v1240 = vand.u32 %v1239, 4294901760
    %1241 = vmatmul.f32.gmra.mxu0 %v1240
    %v1242 = vpop.f32.mrf.mxu0
    %v1243 = vadd.f32 %v1212, %v1242
    %v1244 = vand.u32 %v499, 4294901760
    %v1245 = vsub.f32 %v499, %v1244
    %v1246 = vand.u32 %v1245, 4294901760
    %1247 = vmatmul.f32.gmra.mxu0 %v1246
    %v1248 = vpop.f32.mrf.mxu0
    %v1249 = vadd.f32 %v1217, %v1248
    %1250 = vdwg.mxu0
    %1251 = vmatpush.msra.mxu0 0.0
    %1252 = vmatpush.msra.mxu0 0.0
    %1253 = vmatpush.msra.mxu0 0.0
    %1254 = vmatpush.msra.mxu0 0.0
    %1255 = vmatpush.msra.mxu0 0.0
    %1256 = vmatpush.msra.mxu0 0.0
    %1257 = vmatpush.msra.mxu0 0.0
    %1258 = vmatpush.msra.mxu0 0.0
    %1259 = vmatpush.msra.mxu0 0.0
    %1260 = vmatpush.msra.mxu0 0.0
    %1261 = vmatpush.msra.mxu0 0.0
    %1262 = vmatpush.msra.mxu0 0.0
    %1263 = vmatpush.msra.mxu0 0.0
    %v1264 = vand.u32 %v51, 4294901760
    %v1265 = vsub.f32 %v51, %v1264
    %v1266 = vand.u32 %v1265, 4294901760
    %1267 = vmatpush.msra.mxu0 %v1266
    %v1268 = vand.u32 %v47, 4294901760
    %v1269 = vsub.f32 %v47, %v1268
    %v1270 = vand.u32 %v1269, 4294901760
    %1271 = vmatpush.msra.mxu0 %v1270
    %v1272 = vand.u32 %v43, 4294901760
    %v1273 = vsub.f32 %v43, %v1272
    %v1274 = vand.u32 %v1273, 4294901760
    %1275 = vmatpush.msra.mxu0 %v1274
    %v1276 = vand.u32 %v497, 4294901760
    %1277 = vmatmul.f32.gmra.mxu0 %v1276
    %v1278 = vpop.f32.mrf.mxu0
    %v1279 = vadd.f32 %v1243, %v1278
    %v1280 = vand.u32 %v499, 4294901760
    %1281 = vmatmul.f32.gmra.mxu0 %v1280
    %v1282 = vpop.f32.mrf.mxu0
    %v1283 = vadd.f32 %v1249, %v1282
    %1284 = vdwg.mxu0
    %1285 = vmatpush.msra.mxu0 0.0
    %1286 = vmatpush.msra.mxu0 0.0
    %1287 = vmatpush.msra.mxu0 0.0
    %1288 = vmatpush.msra.mxu0 0.0
    %1289 = vmatpush.msra.mxu0 0.0
    %1290 = vmatpush.msra.mxu0 0.0
    %1291 = vmatpush.msra.mxu0 0.0
    %1292 = vmatpush.msra.mxu0 0.0
    %1293 = vmatpush.msra.mxu0 0.0
    %1294 = vmatpush.msra.mxu0 0.0
    %1295 = vmatpush.msra.mxu0 0.0
    %1296 = vmatpush.msra.mxu0 0.0
    %1297 = vmatpush.msra.mxu0 0.0
    %v1298 = vand.u32 %v51, 4294901760
    %1299 = vmatpush.msra.mxu0 %v1298
    %v1300 = vand.u32 %v47, 4294901760
    %1301 = vmatpush.msra.mxu0 %v1300
    %v1302 = vand.u32 %v43, 4294901760
    %1303 = vmatpush.msra.mxu0 %v1302
    %v1304 = vand.u32 %v497, 4294901760
    %1305 = vmatmul.f32.gmra.mxu0 %v1304
    %v1306 = vpop.f32.mrf.mxu0
    %v1307 = vadd.f32 %v1279, %v1306
    %v1308 = vand.u32 %v499, 4294901760
    %1309 = vmatmul.f32.gmra.mxu0 %v1308
    %v1310 = vpop.f32.mrf.mxu0
    %v1311 = vadd.f32 %v1283, %v1310
    %1312 = vdwg.mxu0
    %v1313 = vperm.slane %v52, 0
    %v1314 = vperm.slane %v53, 0
    %v1315 = vperm.slane %v54, 0
    %v1316 = vperm.slane %v55, 0
    %v1317 = vmul.f32 %v698, %v1313
    %v1318 = vmul.f32 %v901, %v1314
    %v1319 = vmul.f32 %v1104, %v1315
    %v1320 = vmul.f32 %v1307, %v1316
    %v1321 = vmul.f32 %v702, %v1313
    %v1322 = vmul.f32 %v905, %v1314
    %v1323 = vmul.f32 %v1108, %v1315
    %v1324 = vmul.f32 %v1311, %v1316
    %v1325 = vperm.slane %v52, 1
    %v1326 = vperm.slane %v53, 1
    %v1327 = vperm.slane %v54, 1
    %v1328 = vperm.slane %v55, 1
    %v1329 = vadd.f32 %v1317, %v1325
    %v1330 = vadd.f32 %v1318, %v1326
    %v1331 = vadd.f32 %v1319, %v1327
    %v1332 = vadd.f32 %v1320, %v1328
    %v1333 = vadd.f32 %v1321, %v1325
    %v1334 = vadd.f32 %v1322, %v1326
    %v1335 = vadd.f32 %v1323, %v1327
    %v1336 = vadd.f32 %v1324, %v1328
    %s1337 = smul.u32 552, 1
    %s1338 = sshll.u32 %s1337, 4
    %1339 = dma.done [#allocation3], %s1338
    %v1340 = vld [vmem:[#allocation2] sm:$0xff]
    %v1341 = vld [vmem:[#allocation2 + $0x8] sm:$0xff]
    %v1342 = vld [vmem:[#allocation2 + $0x10] sm:$0xff]
    %v1343 = vld [vmem:[#allocation2 + $0x18] sm:$0xff]
    %v1344 = vld [vmem:[#allocation2 + $0x20] sm:$0xff]
    %v1345 = vld [vmem:[#allocation2 + $0x28] sm:$0xff]
    %v1346 = vld [vmem:[#allocation2 + $0x30] sm:$0xff]
    %v1347 = vld [vmem:[#allocation2 + $0x38] sm:$0xff]
    %v1348 = vld [vmem:[#allocation2 + $0x40] sm:$0xff]
    %v1349 = vld [vmem:[#allocation2 + $0x48] sm:$0xff]
    %v1350 = vld [vmem:[#allocation2 + $0x50] sm:$0xff]
    %v1351 = vld [vmem:[#allocation2 + $0x58] sm:$0xff]
    %v1352 = vld [vmem:[#allocation2 + $0x60] sm:$0xff]
    %v1353 = vld [vmem:[#allocation2 + $0x68] sm:$0xff]
    %v1354 = vld [vmem:[#allocation2 + $0x70] sm:$0xff]
    %v1355 = vld [vmem:[#allocation2 + $0x78] sm:$0xff]
    %v1356 = vld [vmem:[#allocation2 + $0x80] sm:$0xff]
    %v1357 = vld [vmem:[#allocation2 + $0x88] sm:$0xff]
    %v1358 = vld [vmem:[#allocation2 + $0x90] sm:$0xff]
    %v1359 = vld [vmem:[#allocation2 + $0x98] sm:$0xff]
    %v1360 = vld [vmem:[#allocation2 + $0xa0] sm:$0xff]
    %v1361 = vld [vmem:[#allocation2 + $0xa8] sm:$0xff]
    %v1362 = vld [vmem:[#allocation2 + $0xb0] sm:$0xff]
    %v1363 = vld [vmem:[#allocation2 + $0xb8] sm:$0xff]
    %v1364 = vld [vmem:[#allocation2 + $0xc0] sm:$0xff]
    %v1365 = vld [vmem:[#allocation2 + $0xc8] sm:$0xff]
    %v1366 = vld [vmem:[#allocation2 + $0xd0] sm:$0xff]
    %v1367 = vld [vmem:[#allocation2 + $0xd8] sm:$0xff]
    %v1368 = vld [vmem:[#allocation2 + $0xe0] sm:$0xff]
    %v1369 = vld [vmem:[#allocation2 + $0xe8] sm:$0xff]
    %v1370 = vld [vmem:[#allocation2 + $0xf0] sm:$0xff]
    %v1371 = vld [vmem:[#allocation2 + $0xf8] sm:$0xff]
    %v1372 = vld [vmem:[#allocation2 + $0x100] sm:$0xff]
    %v1373 = vld [vmem:[#allocation2 + $0x108] sm:$0xff]
    %v1374 = vld [vmem:[#allocation2 + $0x110] sm:$0xff]
    %v1375 = vld [vmem:[#allocation2 + $0x118] sm:$0xff]
    %v1376 = vld [vmem:[#allocation2 + $0x120] sm:$0xff]
    %v1377 = vld [vmem:[#allocation2 + $0x128] sm:$0xff]
    %v1378 = vld [vmem:[#allocation2 + $0x130] sm:$0xff]
    %v1379 = vld [vmem:[#allocation2 + $0x138] sm:$0xff]
    %v1380 = vld [vmem:[#allocation2 + $0x140] sm:$0xff]
    %v1381 = vld [vmem:[#allocation2 + $0x148] sm:$0xff]
    %v1382 = vld [vmem:[#allocation2 + $0x150] sm:$0xff]
    %v1383 = vld [vmem:[#allocation2 + $0x158] sm:$0xff]
    %v1384 = vld [vmem:[#allocation2 + $0x160] sm:$0xff]
    %v1385 = vld [vmem:[#allocation2 + $0x168] sm:$0xff]
    %v1386 = vld [vmem:[#allocation2 + $0x170] sm:$0xff]
    %v1387 = vld [vmem:[#allocation2 + $0x178] sm:$0xff]
    %v1388 = vld [vmem:[#allocation2 + $0x180] sm:$0xff]
    %v1389 = vld [vmem:[#allocation2 + $0x188] sm:$0xff]
    %v1390 = vld [vmem:[#allocation2 + $0x190] sm:$0xff]
    %v1391 = vld [vmem:[#allocation2 + $0x198] sm:$0xff]
    %v1392 = vld [vmem:[#allocation2 + $0x1a0] sm:$0xff]
    %v1393 = vld [vmem:[#allocation2 + $0x1a8] sm:$0xff]
    %v1394 = vld [vmem:[#allocation2 + $0x1b0] sm:$0xff]
    %v1395 = vld [vmem:[#allocation2 + $0x1b8] sm:$0xff]
    %v1396 = vld [vmem:[#allocation2 + $0x1c0] sm:$0xff]
    %v1397 = vld [vmem:[#allocation2 + $0x1c8] sm:$0xff]
    %v1398 = vld [vmem:[#allocation2 + $0x1d0] sm:$0xff]
    %v1399 = vld [vmem:[#allocation2 + $0x1d8] sm:$0xff]
    %v1400 = vld [vmem:[#allocation2 + $0x1e0] sm:$0xff]
    %v1401 = vld [vmem:[#allocation2 + $0x1e8] sm:$0xff]
    %v1402 = vld [vmem:[#allocation2 + $0x1f0] sm:$0xff]
    %v1403 = vld [vmem:[#allocation2 + $0x1f8] sm:$0xff]
    %v1404 = vld [vmem:[#allocation2 + $0x200] sm:$0xff]
    %v1405 = vld [vmem:[#allocation2 + $0x208] sm:$0xff]
    %v1406 = vld [vmem:[#allocation2 + $0x210] sm:$0xff]
    %v1407 = vld [vmem:[#allocation2 + $0x218] sm:$0xff]
    %v1408 = vld [vmem:[#allocation2 + $0x220] sm:$0x1]
    %v1409 = vperm.slane %v1408, 0
    %v1410 = vand.u32 %v1355, 4294901760
    %1411 = vmatpush.msra.mxu0 %v1410
    %v1412 = vand.u32 %v1354, 4294901760
    %1413 = vmatpush.msra.mxu0 %v1412
    %v1414 = vand.u32 %v1353, 4294901760
    %1415 = vmatpush.msra.mxu0 %v1414
    %v1416 = vand.u32 %v1352, 4294901760
    %1417 = vmatpush.msra.mxu0 %v1416
    %v1418 = vand.u32 %v1351, 4294901760
    %1419 = vmatpush.msra.mxu0 %v1418
    %v1420 = vand.u32 %v1350, 4294901760
    %1421 = vmatpush.msra.mxu0 %v1420
    %v1422 = vand.u32 %v1349, 4294901760
    %1423 = vmatpush.msra.mxu0 %v1422
    %v1424 = vand.u32 %v1348, 4294901760
    %1425 = vmatpush.msra.mxu0 %v1424
    %v1426 = vand.u32 %v1347, 4294901760
    %1427 = vmatpush.msra.mxu0 %v1426
    %v1428 = vand.u32 %v1346, 4294901760
    %1429 = vmatpush.msra.mxu0 %v1428
    %v1430 = vand.u32 %v1345, 4294901760
    %1431 = vmatpush.msra.mxu0 %v1430
    %v1432 = vand.u32 %v1344, 4294901760
    %1433 = vmatpush.msra.mxu0 %v1432
    %v1434 = vand.u32 %v1343, 4294901760
    %1435 = vmatpush.msra.mxu0 %v1434
    %v1436 = vand.u32 %v1342, 4294901760
    %1437 = vmatpush.msra.mxu0 %v1436
    %v1438 = vand.u32 %v1341, 4294901760
    %1439 = vmatpush.msra.mxu0 %v1438
    %v1440 = vand.u32 %v1340, 4294901760
    %1441 = vmatpush.msra.mxu0 %v1440
    %v1442 = vand.u32 %v1329, 4294901760
    %v1443 = vsub.f32 %v1329, %v1442
    %v1444 = vand.u32 %v1443, 4294901760
    %v1445 = vsub.f32 %v1443, %v1444
    %v1446 = vand.u32 %v1445, 4294901760
    %1447 = vmatmul.f32.gmra.mxu0 %v1446
    %v1448 = vpop.f32.mrf.mxu0
    %v1449 = vadd.f32 %v1409, %v1448
    %v1450 = vand.u32 %v1333, 4294901760
    %v1451 = vsub.f32 %v1333, %v1450
    %v1452 = vand.u32 %v1451, 4294901760
    %v1453 = vsub.f32 %v1451, %v1452
    %v1454 = vand.u32 %v1453, 4294901760
    %1455 = vmatmul.f32.gmra.mxu0 %v1454
    %v1456 = vpop.f32.mrf.mxu0
    %v1457 = vadd.f32 %v1409, %v1456
    %1458 = vdwg.mxu0
    %v1459 = vand.u32 %v1355, 4294901760
    %v1460 = vsub.f32 %v1355, %v1459
    %v1461 = vand.u32 %v1460, 4294901760
    %v1462 = vsub.f32 %v1460, %v1461
    %v1463 = vand.u32 %v1462, 4294901760
    %1464 = vmatpush.msra.mxu0 %v1463
    %v1465 = vand.u32 %v1354, 4294901760
    %v1466 = vsub.f32 %v1354, %v1465
    %v1467 = vand.u32 %v1466, 4294901760
    %v1468 = vsub.f32 %v1466, %v1467
    %v1469 = vand.u32 %v1468, 4294901760
    %1470 = vmatpush.msra.mxu0 %v1469
    %v1471 = vand.u32 %v1353, 4294901760
    %v1472 = vsub.f32 %v1353, %v1471
    %v1473 = vand.u32 %v1472, 4294901760
    %v1474 = vsub.f32 %v1472, %v1473
    %v1475 = vand.u32 %v1474, 4294901760
    %1476 = vmatpush.msra.mxu0 %v1475
    %v1477 = vand.u32 %v1352, 4294901760
    %v1478 = vsub.f32 %v1352, %v1477
    %v1479 = vand.u32 %v1478, 4294901760
    %v1480 = vsub.f32 %v1478, %v1479
    %v1481 = vand.u32 %v1480, 4294901760
    %1482 = vmatpush.msra.mxu0 %v1481
    %v1483 = vand.u32 %v1351, 4294901760
    %v1484 = vsub.f32 %v1351, %v1483
    %v1485 = vand.u32 %v1484, 4294901760
    %v1486 = vsub.f32 %v1484, %v1485
    %v1487 = vand.u32 %v1486, 4294901760
    %1488 = vmatpush.msra.mxu0 %v1487
    %v1489 = vand.u32 %v1350, 4294901760
    %v1490 = vsub.f32 %v1350, %v1489
    %v1491 = vand.u32 %v1490, 4294901760
    %v1492 = vsub.f32 %v1490, %v1491
    %v1493 = vand.u32 %v1492, 4294901760
    %1494 = vmatpush.msra.mxu0 %v1493
    %v1495 = vand.u32 %v1349, 4294901760
    %v1496 = vsub.f32 %v1349, %v1495
    %v1497 = vand.u32 %v1496, 4294901760
    %v1498 = vsub.f32 %v1496, %v1497
    %v1499 = vand.u32 %v1498, 4294901760
    %1500 = vmatpush.msra.mxu0 %v1499
    %v1501 = vand.u32 %v1348, 4294901760
    %v1502 = vsub.f32 %v1348, %v1501
    %v1503 = vand.u32 %v1502, 4294901760
    %v1504 = vsub.f32 %v1502, %v1503
    %v1505 = vand.u32 %v1504, 4294901760
    %1506 = vmatpush.msra.mxu0 %v1505
    %v1507 = vand.u32 %v1347, 4294901760
    %v1508 = vsub.f32 %v1347, %v1507
    %v1509 = vand.u32 %v1508, 4294901760
    %v1510 = vsub.f32 %v1508, %v1509
    %v1511 = vand.u32 %v1510, 4294901760
    %1512 = vmatpush.msra.mxu0 %v1511
    %v1513 = vand.u32 %v1346, 4294901760
    %v1514 = vsub.f32 %v1346, %v1513
    %v1515 = vand.u32 %v1514, 4294901760
    %v1516 = vsub.f32 %v1514, %v1515
    %v1517 = vand.u32 %v1516, 4294901760
    %1518 = vmatpush.msra.mxu0 %v1517
    %v1519 = vand.u32 %v1345, 4294901760
    %v1520 = vsub.f32 %v1345, %v1519
    %v1521 = vand.u32 %v1520, 4294901760
    %v1522 = vsub.f32 %v1520, %v1521
    %v1523 = vand.u32 %v1522, 4294901760
    %1524 = vmatpush.msra.mxu0 %v1523
    %v1525 = vand.u32 %v1344, 4294901760
    %v1526 = vsub.f32 %v1344, %v1525
    %v1527 = vand.u32 %v1526, 4294901760
    %v1528 = vsub.f32 %v1526, %v1527
    %v1529 = vand.u32 %v1528, 4294901760
    %1530 = vmatpush.msra.mxu0 %v1529
    %v1531 = vand.u32 %v1343, 4294901760
    %v1532 = vsub.f32 %v1343, %v1531
    %v1533 = vand.u32 %v1532, 4294901760
    %v1534 = vsub.f32 %v1532, %v1533
    %v1535 = vand.u32 %v1534, 4294901760
    %1536 = vmatpush.msra.mxu0 %v1535
    %v1537 = vand.u32 %v1342, 4294901760
    %v1538 = vsub.f32 %v1342, %v1537
    %v1539 = vand.u32 %v1538, 4294901760
    %v1540 = vsub.f32 %v1538, %v1539
    %v1541 = vand.u32 %v1540, 4294901760
    %1542 = vmatpush.msra.mxu0 %v1541
    %v1543 = vand.u32 %v1341, 4294901760
    %v1544 = vsub.f32 %v1341, %v1543
    %v1545 = vand.u32 %v1544, 4294901760
    %v1546 = vsub.f32 %v1544, %v1545
    %v1547 = vand.u32 %v1546, 4294901760
    %1548 = vmatpush.msra.mxu0 %v1547
    %v1549 = vand.u32 %v1340, 4294901760
    %v1550 = vsub.f32 %v1340, %v1549
    %v1551 = vand.u32 %v1550, 4294901760
    %v1552 = vsub.f32 %v1550, %v1551
    %v1553 = vand.u32 %v1552, 4294901760
    %1554 = vmatpush.msra.mxu0 %v1553
    %v1555 = vand.u32 %v1329, 4294901760
    %1556 = vmatmul.f32.gmra.mxu0 %v1555
    %v1557 = vpop.f32.mrf.mxu0
    %v1558 = vadd.f32 %v1449, %v1557
    %v1559 = vand.u32 %v1333, 4294901760
    %1560 = vmatmul.f32.gmra.mxu0 %v1559
    %v1561 = vpop.f32.mrf.mxu0
    %v1562 = vadd.f32 %v1457, %v1561
    %1563 = vdwg.mxu0
    %v1564 = vand.u32 %v1355, 4294901760
    %v1565 = vsub.f32 %v1355, %v1564
    %1566 = vmatpush.msra.mxu0 %v1565
    %v1567 = vand.u32 %v1354, 4294901760
    %v1568 = vsub.f32 %v1354, %v1567
    %1569 = vmatpush.msra.mxu0 %v1568
    %v1570 = vand.u32 %v1353, 4294901760
    %v1571 = vsub.f32 %v1353, %v1570
    %1572 = vmatpush.msra.mxu0 %v1571
    %v1573 = vand.u32 %v1352, 4294901760
    %v1574 = vsub.f32 %v1352, %v1573
    %1575 = vmatpush.msra.mxu0 %v1574
    %v1576 = vand.u32 %v1351, 4294901760
    %v1577 = vsub.f32 %v1351, %v1576
    %1578 = vmatpush.msra.mxu0 %v1577
    %v1579 = vand.u32 %v1350, 4294901760
    %v1580 = vsub.f32 %v1350, %v1579
    %1581 = vmatpush.msra.mxu0 %v1580
    %v1582 = vand.u32 %v1349, 4294901760
    %v1583 = vsub.f32 %v1349, %v1582
    %1584 = vmatpush.msra.mxu0 %v1583
    %v1585 = vand.u32 %v1348, 4294901760
    %v1586 = vsub.f32 %v1348, %v1585
    %1587 = vmatpush.msra.mxu0 %v1586
    %v1588 = vand.u32 %v1347, 4294901760
    %v1589 = vsub.f32 %v1347, %v1588
    %1590 = vmatpush.msra.mxu0 %v1589
    %v1591 = vand.u32 %v1346, 4294901760
    %v1592 = vsub.f32 %v1346, %v1591
    %1593 = vmatpush.msra.mxu0 %v1592
    %v1594 = vand.u32 %v1345, 4294901760
    %v1595 = vsub.f32 %v1345, %v1594
    %1596 = vmatpush.msra.mxu0 %v1595
    %v1597 = vand.u32 %v1344, 4294901760
    %v1598 = vsub.f32 %v1344, %v1597
    %1599 = vmatpush.msra.mxu0 %v1598
    %v1600 = vand.u32 %v1343, 4294901760
    %v1601 = vsub.f32 %v1343, %v1600
    %1602 = vmatpush.msra.mxu0 %v1601
    %v1603 = vand.u32 %v1342, 4294901760
    %v1604 = vsub.f32 %v1342, %v1603
    %1605 = vmatpush.msra.mxu0 %v1604
    %v1606 = vand.u32 %v1341, 4294901760
    %v1607 = vsub.f32 %v1341, %v1606
    %1608 = vmatpush.msra.mxu0 %v1607
    %v1609 = vand.u32 %v1340, 4294901760
    %v1610 = vsub.f32 %v1340, %v1609
    %1611 = vmatpush.msra.mxu0 %v1610
    %v1612 = vand.u32 %v1329, 4294901760
    %v1613 = vsub.f32 %v1329, %v1612
    %1614 = vmatmul.f32.gmra.mxu0 %v1613
    %v1615 = vpop.f32.mrf.mxu0
    %v1616 = vadd.f32 %v1558, %v1615
    %v1617 = vand.u32 %v1333, 4294901760
    %v1618 = vsub.f32 %v1333, %v1617
    %1619 = vmatmul.f32.gmra.mxu0 %v1618
    %v1620 = vpop.f32.mrf.mxu0
    %v1621 = vadd.f32 %v1562, %v1620
    %1622 = vdwg.mxu0
    %v1623 = vand.u32 %v1355, 4294901760
    %1624 = vmatpush.msra.mxu0 %v1623
    %v1625 = vand.u32 %v1354, 4294901760
    %1626 = vmatpush.msra.mxu0 %v1625
    %v1627 = vand.u32 %v1353, 4294901760
    %1628 = vmatpush.msra.mxu0 %v1627
    %v1629 = vand.u32 %v1352, 4294901760
    %1630 = vmatpush.msra.mxu0 %v1629
    %v1631 = vand.u32 %v1351, 4294901760
    %1632 = vmatpush.msra.mxu0 %v1631
    %v1633 = vand.u32 %v1350, 4294901760
    %1634 = vmatpush.msra.mxu0 %v1633
    %v1635 = vand.u32 %v1349, 4294901760
    %1636 = vmatpush.msra.mxu0 %v1635
    %v1637 = vand.u32 %v1348, 4294901760
    %1638 = vmatpush.msra.mxu0 %v1637
    %v1639 = vand.u32 %v1347, 4294901760
    %1640 = vmatpush.msra.mxu0 %v1639
    %v1641 = vand.u32 %v1346, 4294901760
    %1642 = vmatpush.msra.mxu0 %v1641
    %v1643 = vand.u32 %v1345, 4294901760
    %1644 = vmatpush.msra.mxu0 %v1643
    %v1645 = vand.u32 %v1344, 4294901760
    %1646 = vmatpush.msra.mxu0 %v1645
    %v1647 = vand.u32 %v1343, 4294901760
    %1648 = vmatpush.msra.mxu0 %v1647
    %v1649 = vand.u32 %v1342, 4294901760
    %1650 = vmatpush.msra.mxu0 %v1649
    %v1651 = vand.u32 %v1341, 4294901760
    %1652 = vmatpush.msra.mxu0 %v1651
    %v1653 = vand.u32 %v1340, 4294901760
    %1654 = vmatpush.msra.mxu0 %v1653
    %v1655 = vand.u32 %v1329, 4294901760
    %v1656 = vsub.f32 %v1329, %v1655
    %v1657 = vand.u32 %v1656, 4294901760
    %1658 = vmatmul.f32.gmra.mxu0 %v1657
    %v1659 = vpop.f32.mrf.mxu0
    %v1660 = vadd.f32 %v1616, %v1659
    %v1661 = vand.u32 %v1333, 4294901760
    %v1662 = vsub.f32 %v1333, %v1661
    %v1663 = vand.u32 %v1662, 4294901760
    %1664 = vmatmul.f32.gmra.mxu0 %v1663
    %v1665 = vpop.f32.mrf.mxu0
    %v1666 = vadd.f32 %v1621, %v1665
    %1667 = vdwg.mxu0
    %v1668 = vand.u32 %v1355, 4294901760
    %v1669 = vsub.f32 %v1355, %v1668
    %v1670 = vand.u32 %v1669, 4294901760
    %1671 = vmatpush.msra.mxu0 %v1670
    %v1672 = vand.u32 %v1354, 4294901760
    %v1673 = vsub.f32 %v1354, %v1672
    %v1674 = vand.u32 %v1673, 4294901760
    %1675 = vmatpush.msra.mxu0 %v1674
    %v1676 = vand.u32 %v1353, 4294901760
    %v1677 = vsub.f32 %v1353, %v1676
    %v1678 = vand.u32 %v1677, 4294901760
    %1679 = vmatpush.msra.mxu0 %v1678
    %v1680 = vand.u32 %v1352, 4294901760
    %v1681 = vsub.f32 %v1352, %v1680
    %v1682 = vand.u32 %v1681, 4294901760
    %1683 = vmatpush.msra.mxu0 %v1682
    %v1684 = vand.u32 %v1351, 4294901760
    %v1685 = vsub.f32 %v1351, %v1684
    %v1686 = vand.u32 %v1685, 4294901760
    %1687 = vmatpush.msra.mxu0 %v1686
    %v1688 = vand.u32 %v1350, 4294901760
    %v1689 = vsub.f32 %v1350, %v1688
    %v1690 = vand.u32 %v1689, 4294901760
    %1691 = vmatpush.msra.mxu0 %v1690
    %v1692 = vand.u32 %v1349, 4294901760
    %v1693 = vsub.f32 %v1349, %v1692
    %v1694 = vand.u32 %v1693, 4294901760
    %1695 = vmatpush.msra.mxu0 %v1694
    %v1696 = vand.u32 %v1348, 4294901760
    %v1697 = vsub.f32 %v1348, %v1696
    %v1698 = vand.u32 %v1697, 4294901760
    %1699 = vmatpush.msra.mxu0 %v1698
    %v1700 = vand.u32 %v1347, 4294901760
    %v1701 = vsub.f32 %v1347, %v1700
    %v1702 = vand.u32 %v1701, 4294901760
    %1703 = vmatpush.msra.mxu0 %v1702
    %v1704 = vand.u32 %v1346, 4294901760
    %v1705 = vsub.f32 %v1346, %v1704
    %v1706 = vand.u32 %v1705, 4294901760
    %1707 = vmatpush.msra.mxu0 %v1706
    %v1708 = vand.u32 %v1345, 4294901760
    %v1709 = vsub.f32 %v1345, %v1708
    %v1710 = vand.u32 %v1709, 4294901760
    %1711 = vmatpush.msra.mxu0 %v1710
    %v1712 = vand.u32 %v1344, 4294901760
    %v1713 = vsub.f32 %v1344, %v1712
    %v1714 = vand.u32 %v1713, 4294901760
    %1715 = vmatpush.msra.mxu0 %v1714
    %v1716 = vand.u32 %v1343, 4294901760
    %v1717 = vsub.f32 %v1343, %v1716
    %v1718 = vand.u32 %v1717, 4294901760
    %1719 = vmatpush.msra.mxu0 %v1718
    %v1720 = vand.u32 %v1342, 4294901760
    %v1721 = vsub.f32 %v1342, %v1720
    %v1722 = vand.u32 %v1721, 4294901760
    %1723 = vmatpush.msra.mxu0 %v1722
    %v1724 = vand.u32 %v1341, 4294901760
    %v1725 = vsub.f32 %v1341, %v1724
    %v1726 = vand.u32 %v1725, 4294901760
    %1727 = vmatpush.msra.mxu0 %v1726
    %v1728 = vand.u32 %v1340, 4294901760
    %v1729 = vsub.f32 %v1340, %v1728
    %v1730 = vand.u32 %v1729, 4294901760
    %1731 = vmatpush.msra.mxu0 %v1730
    %v1732 = vand.u32 %v1329, 4294901760
    %1733 = vmatmul.f32.gmra.mxu0 %v1732
    %v1734 = vpop.f32.mrf.mxu0
    %v1735 = vadd.f32 %v1660, %v1734
    %v1736 = vand.u32 %v1333, 4294901760
    %1737 = vmatmul.f32.gmra.mxu0 %v1736
    %v1738 = vpop.f32.mrf.mxu0
    %v1739 = vadd.f32 %v1666, %v1738
    %1740 = vdwg.mxu0
    %v1741 = vand.u32 %v1355, 4294901760
    %1742 = vmatpush.msra.mxu0 %v1741
    %v1743 = vand.u32 %v1354, 4294901760
    %1744 = vmatpush.msra.mxu0 %v1743
    %v1745 = vand.u32 %v1353, 4294901760
    %1746 = vmatpush.msra.mxu0 %v1745
    %v1747 = vand.u32 %v1352, 4294901760
    %1748 = vmatpush.msra.mxu0 %v1747
    %v1749 = vand.u32 %v1351, 4294901760
    %1750 = vmatpush.msra.mxu0 %v1749
    %v1751 = vand.u32 %v1350, 4294901760
    %1752 = vmatpush.msra.mxu0 %v1751
    %v1753 = vand.u32 %v1349, 4294901760
    %1754 = vmatpush.msra.mxu0 %v1753
    %v1755 = vand.u32 %v1348, 4294901760
    %1756 = vmatpush.msra.mxu0 %v1755
    %v1757 = vand.u32 %v1347, 4294901760
    %1758 = vmatpush.msra.mxu0 %v1757
    %v1759 = vand.u32 %v1346, 4294901760
    %1760 = vmatpush.msra.mxu0 %v1759
    %v1761 = vand.u32 %v1345, 4294901760
    %1762 = vmatpush.msra.mxu0 %v1761
    %v1763 = vand.u32 %v1344, 4294901760
    %1764 = vmatpush.msra.mxu0 %v1763
    %v1765 = vand.u32 %v1343, 4294901760
    %1766 = vmatpush.msra.mxu0 %v1765
    %v1767 = vand.u32 %v1342, 4294901760
    %1768 = vmatpush.msra.mxu0 %v1767
    %v1769 = vand.u32 %v1341, 4294901760
    %1770 = vmatpush.msra.mxu0 %v1769
    %v1771 = vand.u32 %v1340, 4294901760
    %1772 = vmatpush.msra.mxu0 %v1771
    %v1773 = vand.u32 %v1329, 4294901760
    %1774 = vmatmul.f32.gmra.mxu0 %v1773
    %v1775 = vpop.f32.mrf.mxu0
    %v1776 = vadd.f32 %v1735, %v1775
    %v1777 = vand.u32 %v1333, 4294901760
    %1778 = vmatmul.f32.gmra.mxu0 %v1777
    %v1779 = vpop.f32.mrf.mxu0
    %v1780 = vadd.f32 %v1739, %v1779
    %1781 = vdwg.mxu0
    %v1782 = vand.u32 %v1371, 4294901760
    %1783 = vmatpush.msra.mxu0 %v1782
    %v1784 = vand.u32 %v1370, 4294901760
    %1785 = vmatpush.msra.mxu0 %v1784
    %v1786 = vand.u32 %v1369, 4294901760
    %1787 = vmatpush.msra.mxu0 %v1786
    %v1788 = vand.u32 %v1368, 4294901760
    %1789 = vmatpush.msra.mxu0 %v1788
    %v1790 = vand.u32 %v1367, 4294901760
    %1791 = vmatpush.msra.mxu0 %v1790
    %v1792 = vand.u32 %v1366, 4294901760
    %1793 = vmatpush.msra.mxu0 %v1792
    %v1794 = vand.u32 %v1365, 4294901760
    %1795 = vmatpush.msra.mxu0 %v1794
    %v1796 = vand.u32 %v1364, 4294901760
    %1797 = vmatpush.msra.mxu0 %v1796
    %v1798 = vand.u32 %v1363, 4294901760
    %1799 = vmatpush.msra.mxu0 %v1798
    %v1800 = vand.u32 %v1362, 4294901760
    %1801 = vmatpush.msra.mxu0 %v1800
    %v1802 = vand.u32 %v1361, 4294901760
    %1803 = vmatpush.msra.mxu0 %v1802
    %v1804 = vand.u32 %v1360, 4294901760
    %1805 = vmatpush.msra.mxu0 %v1804
    %v1806 = vand.u32 %v1359, 4294901760
    %1807 = vmatpush.msra.mxu0 %v1806
    %v1808 = vand.u32 %v1358, 4294901760
    %1809 = vmatpush.msra.mxu0 %v1808
    %v1810 = vand.u32 %v1357, 4294901760
    %1811 = vmatpush.msra.mxu0 %v1810
    %v1812 = vand.u32 %v1356, 4294901760
    %1813 = vmatpush.msra.mxu0 %v1812
    %v1814 = vand.u32 %v1330, 4294901760
    %v1815 = vsub.f32 %v1330, %v1814
    %v1816 = vand.u32 %v1815, 4294901760
    %v1817 = vsub.f32 %v1815, %v1816
    %v1818 = vand.u32 %v1817, 4294901760
    %1819 = vmatmul.f32.gmra.mxu0 %v1818
    %v1820 = vpop.f32.mrf.mxu0
    %v1821 = vadd.f32 %v1776, %v1820
    %v1822 = vand.u32 %v1334, 4294901760
    %v1823 = vsub.f32 %v1334, %v1822
    %v1824 = vand.u32 %v1823, 4294901760
    %v1825 = vsub.f32 %v1823, %v1824
    %v1826 = vand.u32 %v1825, 4294901760
    %1827 = vmatmul.f32.gmra.mxu0 %v1826
    %v1828 = vpop.f32.mrf.mxu0
    %v1829 = vadd.f32 %v1780, %v1828
    %1830 = vdwg.mxu0
    %v1831 = vand.u32 %v1371, 4294901760
    %v1832 = vsub.f32 %v1371, %v1831
    %v1833 = vand.u32 %v1832, 4294901760
    %v1834 = vsub.f32 %v1832, %v1833
    %v1835 = vand.u32 %v1834, 4294901760
    %1836 = vmatpush.msra.mxu0 %v1835
    %v1837 = vand.u32 %v1370, 4294901760
    %v1838 = vsub.f32 %v1370, %v1837
    %v1839 = vand.u32 %v1838, 4294901760
    %v1840 = vsub.f32 %v1838, %v1839
    %v1841 = vand.u32 %v1840, 4294901760
    %1842 = vmatpush.msra.mxu0 %v1841
    %v1843 = vand.u32 %v1369, 4294901760
    %v1844 = vsub.f32 %v1369, %v1843
    %v1845 = vand.u32 %v1844, 4294901760
    %v1846 = vsub.f32 %v1844, %v1845
    %v1847 = vand.u32 %v1846, 4294901760
    %1848 = vmatpush.msra.mxu0 %v1847
    %v1849 = vand.u32 %v1368, 4294901760
    %v1850 = vsub.f32 %v1368, %v1849
    %v1851 = vand.u32 %v1850, 4294901760
    %v1852 = vsub.f32 %v1850, %v1851
    %v1853 = vand.u32 %v1852, 4294901760
    %1854 = vmatpush.msra.mxu0 %v1853
    %v1855 = vand.u32 %v1367, 4294901760
    %v1856 = vsub.f32 %v1367, %v1855
    %v1857 = vand.u32 %v1856, 4294901760
    %v1858 = vsub.f32 %v1856, %v1857
    %v1859 = vand.u32 %v1858, 4294901760
    %1860 = vmatpush.msra.mxu0 %v1859
    %v1861 = vand.u32 %v1366, 4294901760
    %v1862 = vsub.f32 %v1366, %v1861
    %v1863 = vand.u32 %v1862, 4294901760
    %v1864 = vsub.f32 %v1862, %v1863
    %v1865 = vand.u32 %v1864, 4294901760
    %1866 = vmatpush.msra.mxu0 %v1865
    %v1867 = vand.u32 %v1365, 4294901760
    %v1868 = vsub.f32 %v1365, %v1867
    %v1869 = vand.u32 %v1868, 4294901760
    %v1870 = vsub.f32 %v1868, %v1869
    %v1871 = vand.u32 %v1870, 4294901760
    %1872 = vmatpush.msra.mxu0 %v1871
    %v1873 = vand.u32 %v1364, 4294901760
    %v1874 = vsub.f32 %v1364, %v1873
    %v1875 = vand.u32 %v1874, 4294901760
    %v1876 = vsub.f32 %v1874, %v1875
    %v1877 = vand.u32 %v1876, 4294901760
    %1878 = vmatpush.msra.mxu0 %v1877
    %v1879 = vand.u32 %v1363, 4294901760
    %v1880 = vsub.f32 %v1363, %v1879
    %v1881 = vand.u32 %v1880, 4294901760
    %v1882 = vsub.f32 %v1880, %v1881
    %v1883 = vand.u32 %v1882, 4294901760
    %1884 = vmatpush.msra.mxu0 %v1883
    %v1885 = vand.u32 %v1362, 4294901760
    %v1886 = vsub.f32 %v1362, %v1885
    %v1887 = vand.u32 %v1886, 4294901760
    %v1888 = vsub.f32 %v1886, %v1887
    %v1889 = vand.u32 %v1888, 4294901760
    %1890 = vmatpush.msra.mxu0 %v1889
    %v1891 = vand.u32 %v1361, 4294901760
    %v1892 = vsub.f32 %v1361, %v1891
    %v1893 = vand.u32 %v1892, 4294901760
    %v1894 = vsub.f32 %v1892, %v1893
    %v1895 = vand.u32 %v1894, 4294901760
    %1896 = vmatpush.msra.mxu0 %v1895
    %v1897 = vand.u32 %v1360, 4294901760
    %v1898 = vsub.f32 %v1360, %v1897
    %v1899 = vand.u32 %v1898, 4294901760
    %v1900 = vsub.f32 %v1898, %v1899
    %v1901 = vand.u32 %v1900, 4294901760
    %1902 = vmatpush.msra.mxu0 %v1901
    %v1903 = vand.u32 %v1359, 4294901760
    %v1904 = vsub.f32 %v1359, %v1903
    %v1905 = vand.u32 %v1904, 4294901760
    %v1906 = vsub.f32 %v1904, %v1905
    %v1907 = vand.u32 %v1906, 4294901760
    %1908 = vmatpush.msra.mxu0 %v1907
    %v1909 = vand.u32 %v1358, 4294901760
    %v1910 = vsub.f32 %v1358, %v1909
    %v1911 = vand.u32 %v1910, 4294901760
    %v1912 = vsub.f32 %v1910, %v1911
    %v1913 = vand.u32 %v1912, 4294901760
    %1914 = vmatpush.msra.mxu0 %v1913
    %v1915 = vand.u32 %v1357, 4294901760
    %v1916 = vsub.f32 %v1357, %v1915
    %v1917 = vand.u32 %v1916, 4294901760
    %v1918 = vsub.f32 %v1916, %v1917
    %v1919 = vand.u32 %v1918, 4294901760
    %1920 = vmatpush.msra.mxu0 %v1919
    %v1921 = vand.u32 %v1356, 4294901760
    %v1922 = vsub.f32 %v1356, %v1921
    %v1923 = vand.u32 %v1922, 4294901760
    %v1924 = vsub.f32 %v1922, %v1923
    %v1925 = vand.u32 %v1924, 4294901760
    %1926 = vmatpush.msra.mxu0 %v1925
    %v1927 = vand.u32 %v1330, 4294901760
    %1928 = vmatmul.f32.gmra.mxu0 %v1927
    %v1929 = vpop.f32.mrf.mxu0
    %v1930 = vadd.f32 %v1821, %v1929
    %v1931 = vand.u32 %v1334, 4294901760
    %1932 = vmatmul.f32.gmra.mxu0 %v1931
    %v1933 = vpop.f32.mrf.mxu0
    %v1934 = vadd.f32 %v1829, %v1933
    %1935 = vdwg.mxu0
    %v1936 = vand.u32 %v1371, 4294901760
    %v1937 = vsub.f32 %v1371, %v1936
    %1938 = vmatpush.msra.mxu0 %v1937
    %v1939 = vand.u32 %v1370, 4294901760
    %v1940 = vsub.f32 %v1370, %v1939
    %1941 = vmatpush.msra.mxu0 %v1940
    %v1942 = vand.u32 %v1369, 4294901760
    %v1943 = vsub.f32 %v1369, %v1942
    %1944 = vmatpush.msra.mxu0 %v1943
    %v1945 = vand.u32 %v1368, 4294901760
    %v1946 = vsub.f32 %v1368, %v1945
    %1947 = vmatpush.msra.mxu0 %v1946
    %v1948 = vand.u32 %v1367, 4294901760
    %v1949 = vsub.f32 %v1367, %v1948
    %1950 = vmatpush.msra.mxu0 %v1949
    %v1951 = vand.u32 %v1366, 4294901760
    %v1952 = vsub.f32 %v1366, %v1951
    %1953 = vmatpush.msra.mxu0 %v1952
    %v1954 = vand.u32 %v1365, 4294901760
    %v1955 = vsub.f32 %v1365, %v1954
    %1956 = vmatpush.msra.mxu0 %v1955
    %v1957 = vand.u32 %v1364, 4294901760
    %v1958 = vsub.f32 %v1364, %v1957
    %1959 = vmatpush.msra.mxu0 %v1958
    %v1960 = vand.u32 %v1363, 4294901760
    %v1961 = vsub.f32 %v1363, %v1960
    %1962 = vmatpush.msra.mxu0 %v1961
    %v1963 = vand.u32 %v1362, 4294901760
    %v1964 = vsub.f32 %v1362, %v1963
    %1965 = vmatpush.msra.mxu0 %v1964
    %v1966 = vand.u32 %v1361, 4294901760
    %v1967 = vsub.f32 %v1361, %v1966
    %1968 = vmatpush.msra.mxu0 %v1967
    %v1969 = vand.u32 %v1360, 4294901760
    %v1970 = vsub.f32 %v1360, %v1969
    %1971 = vmatpush.msra.mxu0 %v1970
    %v1972 = vand.u32 %v1359, 4294901760
    %v1973 = vsub.f32 %v1359, %v1972
    %1974 = vmatpush.msra.mxu0 %v1973
    %v1975 = vand.u32 %v1358, 4294901760
    %v1976 = vsub.f32 %v1358, %v1975
    %1977 = vmatpush.msra.mxu0 %v1976
    %v1978 = vand.u32 %v1357, 4294901760
    %v1979 = vsub.f32 %v1357, %v1978
    %1980 = vmatpush.msra.mxu0 %v1979
    %v1981 = vand.u32 %v1356, 4294901760
    %v1982 = vsub.f32 %v1356, %v1981
    %1983 = vmatpush.msra.mxu0 %v1982
    %v1984 = vand.u32 %v1330, 4294901760
    %v1985 = vsub.f32 %v1330, %v1984
    %1986 = vmatmul.f32.gmra.mxu0 %v1985
    %v1987 = vpop.f32.mrf.mxu0
    %v1988 = vadd.f32 %v1930, %v1987
    %v1989 = vand.u32 %v1334, 4294901760
    %v1990 = vsub.f32 %v1334, %v1989
    %1991 = vmatmul.f32.gmra.mxu0 %v1990
    %v1992 = vpop.f32.mrf.mxu0
    %v1993 = vadd.f32 %v1934, %v1992
    %1994 = vdwg.mxu0
    %v1995 = vand.u32 %v1371, 4294901760
    %1996 = vmatpush.msra.mxu0 %v1995
    %v1997 = vand.u32 %v1370, 4294901760
    %1998 = vmatpush.msra.mxu0 %v1997
    %v1999 = vand.u32 %v1369, 4294901760
    %2000 = vmatpush.msra.mxu0 %v1999
    %v2001 = vand.u32 %v1368, 4294901760
    %2002 = vmatpush.msra.mxu0 %v2001
    %v2003 = vand.u32 %v1367, 4294901760
    %2004 = vmatpush.msra.mxu0 %v2003
    %v2005 = vand.u32 %v1366, 4294901760
    %2006 = vmatpush.msra.mxu0 %v2005
    %v2007 = vand.u32 %v1365, 4294901760
    %2008 = vmatpush.msra.mxu0 %v2007
    %v2009 = vand.u32 %v1364, 4294901760
    %2010 = vmatpush.msra.mxu0 %v2009
    %v2011 = vand.u32 %v1363, 4294901760
    %2012 = vmatpush.msra.mxu0 %v2011
    %v2013 = vand.u32 %v1362, 4294901760
    %2014 = vmatpush.msra.mxu0 %v2013
    %v2015 = vand.u32 %v1361, 4294901760
    %2016 = vmatpush.msra.mxu0 %v2015
    %v2017 = vand.u32 %v1360, 4294901760
    %2018 = vmatpush.msra.mxu0 %v2017
    %v2019 = vand.u32 %v1359, 4294901760
    %2020 = vmatpush.msra.mxu0 %v2019
    %v2021 = vand.u32 %v1358, 4294901760
    %2022 = vmatpush.msra.mxu0 %v2021
    %v2023 = vand.u32 %v1357, 4294901760
    %2024 = vmatpush.msra.mxu0 %v2023
    %v2025 = vand.u32 %v1356, 4294901760
    %2026 = vmatpush.msra.mxu0 %v2025
    %v2027 = vand.u32 %v1330, 4294901760
    %v2028 = vsub.f32 %v1330, %v2027
    %v2029 = vand.u32 %v2028, 4294901760
    %2030 = vmatmul.f32.gmra.mxu0 %v2029
    %v2031 = vpop.f32.mrf.mxu0
    %v2032 = vadd.f32 %v1988, %v2031
    %v2033 = vand.u32 %v1334, 4294901760
    %v2034 = vsub.f32 %v1334, %v2033
    %v2035 = vand.u32 %v2034, 4294901760
    %2036 = vmatmul.f32.gmra.mxu0 %v2035
    %v2037 = vpop.f32.mrf.mxu0
    %v2038 = vadd.f32 %v1993, %v2037
    %2039 = vdwg.mxu0
    %v2040 = vand.u32 %v1371, 4294901760
    %v2041 = vsub.f32 %v1371, %v2040
    %v2042 = vand.u32 %v2041, 4294901760
    %2043 = vmatpush.msra.mxu0 %v2042
    %v2044 = vand.u32 %v1370, 4294901760
    %v2045 = vsub.f32 %v1370, %v2044
    %v2046 = vand.u32 %v2045, 4294901760
    %2047 = vmatpush.msra.mxu0 %v2046
    %v2048 = vand.u32 %v1369, 4294901760
    %v2049 = vsub.f32 %v1369, %v2048
    %v2050 = vand.u32 %v2049, 4294901760
    %2051 = vmatpush.msra.mxu0 %v2050
    %v2052 = vand.u32 %v1368, 4294901760
    %v2053 = vsub.f32 %v1368, %v2052
    %v2054 = vand.u32 %v2053, 4294901760
    %2055 = vmatpush.msra.mxu0 %v2054
    %v2056 = vand.u32 %v1367, 4294901760
    %v2057 = vsub.f32 %v1367, %v2056
    %v2058 = vand.u32 %v2057, 4294901760
    %2059 = vmatpush.msra.mxu0 %v2058
    %v2060 = vand.u32 %v1366, 4294901760
    %v2061 = vsub.f32 %v1366, %v2060
    %v2062 = vand.u32 %v2061, 4294901760
    %2063 = vmatpush.msra.mxu0 %v2062
    %v2064 = vand.u32 %v1365, 4294901760
    %v2065 = vsub.f32 %v1365, %v2064
    %v2066 = vand.u32 %v2065, 4294901760
    %2067 = vmatpush.msra.mxu0 %v2066
    %v2068 = vand.u32 %v1364, 4294901760
    %v2069 = vsub.f32 %v1364, %v2068
    %v2070 = vand.u32 %v2069, 4294901760
    %2071 = vmatpush.msra.mxu0 %v2070
    %v2072 = vand.u32 %v1363, 4294901760
    %v2073 = vsub.f32 %v1363, %v2072
    %v2074 = vand.u32 %v2073, 4294901760
    %2075 = vmatpush.msra.mxu0 %v2074
    %v2076 = vand.u32 %v1362, 4294901760
    %v2077 = vsub.f32 %v1362, %v2076
    %v2078 = vand.u32 %v2077, 4294901760
    %2079 = vmatpush.msra.mxu0 %v2078
    %v2080 = vand.u32 %v1361, 4294901760
    %v2081 = vsub.f32 %v1361, %v2080
    %v2082 = vand.u32 %v2081, 4294901760
    %2083 = vmatpush.msra.mxu0 %v2082
    %v2084 = vand.u32 %v1360, 4294901760
    %v2085 = vsub.f32 %v1360, %v2084
    %v2086 = vand.u32 %v2085, 4294901760
    %2087 = vmatpush.msra.mxu0 %v2086
    %v2088 = vand.u32 %v1359, 4294901760
    %v2089 = vsub.f32 %v1359, %v2088
    %v2090 = vand.u32 %v2089, 4294901760
    %2091 = vmatpush.msra.mxu0 %v2090
    %v2092 = vand.u32 %v1358, 4294901760
    %v2093 = vsub.f32 %v1358, %v2092
    %v2094 = vand.u32 %v2093, 4294901760
    %2095 = vmatpush.msra.mxu0 %v2094
    %v2096 = vand.u32 %v1357, 4294901760
    %v2097 = vsub.f32 %v1357, %v2096
    %v2098 = vand.u32 %v2097, 4294901760
    %2099 = vmatpush.msra.mxu0 %v2098
    %v2100 = vand.u32 %v1356, 4294901760
    %v2101 = vsub.f32 %v1356, %v2100
    %v2102 = vand.u32 %v2101, 4294901760
    %2103 = vmatpush.msra.mxu0 %v2102
    %v2104 = vand.u32 %v1330, 4294901760
    %2105 = vmatmul.f32.gmra.mxu0 %v2104
    %v2106 = vpop.f32.mrf.mxu0
    %v2107 = vadd.f32 %v2032, %v2106
    %v2108 = vand.u32 %v1334, 4294901760
    %2109 = vmatmul.f32.gmra.mxu0 %v2108
    %v2110 = vpop.f32.mrf.mxu0
    %v2111 = vadd.f32 %v2038, %v2110
    %2112 = vdwg.mxu0
    %v2113 = vand.u32 %v1371, 4294901760
    %2114 = vmatpush.msra.mxu0 %v2113
    %v2115 = vand.u32 %v1370, 4294901760
    %2116 = vmatpush.msra.mxu0 %v2115
    %v2117 = vand.u32 %v1369, 4294901760
    %2118 = vmatpush.msra.mxu0 %v2117
    %v2119 = vand.u32 %v1368, 4294901760
    %2120 = vmatpush.msra.mxu0 %v2119
    %v2121 = vand.u32 %v1367, 4294901760
    %2122 = vmatpush.msra.mxu0 %v2121
    %v2123 = vand.u32 %v1366, 4294901760
    %2124 = vmatpush.msra.mxu0 %v2123
    %v2125 = vand.u32 %v1365, 4294901760
    %2126 = vmatpush.msra.mxu0 %v2125
    %v2127 = vand.u32 %v1364, 4294901760
    %2128 = vmatpush.msra.mxu0 %v2127
    %v2129 = vand.u32 %v1363, 4294901760
    %2130 = vmatpush.msra.mxu0 %v2129
    %v2131 = vand.u32 %v1362, 4294901760
    %2132 = vmatpush.msra.mxu0 %v2131
    %v2133 = vand.u32 %v1361, 4294901760
    %2134 = vmatpush.msra.mxu0 %v2133
    %v2135 = vand.u32 %v1360, 4294901760
    %2136 = vmatpush.msra.mxu0 %v2135
    %v2137 = vand.u32 %v1359, 4294901760
    %2138 = vmatpush.msra.mxu0 %v2137
    %v2139 = vand.u32 %v1358, 4294901760
    %2140 = vmatpush.msra.mxu0 %v2139
    %v2141 = vand.u32 %v1357, 4294901760
    %2142 = vmatpush.msra.mxu0 %v2141
    %v2143 = vand.u32 %v1356, 4294901760
    %2144 = vmatpush.msra.mxu0 %v2143
    %v2145 = vand.u32 %v1330, 4294901760
    %2146 = vmatmul.f32.gmra.mxu0 %v2145
    %v2147 = vpop.f32.mrf.mxu0
    %v2148 = vadd.f32 %v2107, %v2147
    %v2149 = vand.u32 %v1334, 4294901760
    %2150 = vmatmul.f32.gmra.mxu0 %v2149
    %v2151 = vpop.f32.mrf.mxu0
    %v2152 = vadd.f32 %v2111, %v2151
    %2153 = vdwg.mxu0
    %v2154 = vand.u32 %v1387, 4294901760
    %2155 = vmatpush.msra.mxu0 %v2154
    %v2156 = vand.u32 %v1386, 4294901760
    %2157 = vmatpush.msra.mxu0 %v2156
    %v2158 = vand.u32 %v1385, 4294901760
    %2159 = vmatpush.msra.mxu0 %v2158
    %v2160 = vand.u32 %v1384, 4294901760
    %2161 = vmatpush.msra.mxu0 %v2160
    %v2162 = vand.u32 %v1383, 4294901760
    %2163 = vmatpush.msra.mxu0 %v2162
    %v2164 = vand.u32 %v1382, 4294901760
    %2165 = vmatpush.msra.mxu0 %v2164
    %v2166 = vand.u32 %v1381, 4294901760
    %2167 = vmatpush.msra.mxu0 %v2166
    %v2168 = vand.u32 %v1380, 4294901760
    %2169 = vmatpush.msra.mxu0 %v2168
    %v2170 = vand.u32 %v1379, 4294901760
    %2171 = vmatpush.msra.mxu0 %v2170
    %v2172 = vand.u32 %v1378, 4294901760
    %2173 = vmatpush.msra.mxu0 %v2172
    %v2174 = vand.u32 %v1377, 4294901760
    %2175 = vmatpush.msra.mxu0 %v2174
    %v2176 = vand.u32 %v1376, 4294901760
    %2177 = vmatpush.msra.mxu0 %v2176
    %v2178 = vand.u32 %v1375, 4294901760
    %2179 = vmatpush.msra.mxu0 %v2178
    %v2180 = vand.u32 %v1374, 4294901760
    %2181 = vmatpush.msra.mxu0 %v2180
    %v2182 = vand.u32 %v1373, 4294901760
    %2183 = vmatpush.msra.mxu0 %v2182
    %v2184 = vand.u32 %v1372, 4294901760
    %2185 = vmatpush.msra.mxu0 %v2184
    %v2186 = vand.u32 %v1331, 4294901760
    %v2187 = vsub.f32 %v1331, %v2186
    %v2188 = vand.u32 %v2187, 4294901760
    %v2189 = vsub.f32 %v2187, %v2188
    %v2190 = vand.u32 %v2189, 4294901760
    %2191 = vmatmul.f32.gmra.mxu0 %v2190
    %v2192 = vpop.f32.mrf.mxu0
    %v2193 = vadd.f32 %v2148, %v2192
    %v2194 = vand.u32 %v1335, 4294901760
    %v2195 = vsub.f32 %v1335, %v2194
    %v2196 = vand.u32 %v2195, 4294901760
    %v2197 = vsub.f32 %v2195, %v2196
    %v2198 = vand.u32 %v2197, 4294901760
    %2199 = vmatmul.f32.gmra.mxu0 %v2198
    %v2200 = vpop.f32.mrf.mxu0
    %v2201 = vadd.f32 %v2152, %v2200
    %2202 = vdwg.mxu0
    %v2203 = vand.u32 %v1387, 4294901760
    %v2204 = vsub.f32 %v1387, %v2203
    %v2205 = vand.u32 %v2204, 4294901760
    %v2206 = vsub.f32 %v2204, %v2205
    %v2207 = vand.u32 %v2206, 4294901760
    %2208 = vmatpush.msra.mxu0 %v2207
    %v2209 = vand.u32 %v1386, 4294901760
    %v2210 = vsub.f32 %v1386, %v2209
    %v2211 = vand.u32 %v2210, 4294901760
    %v2212 = vsub.f32 %v2210, %v2211
    %v2213 = vand.u32 %v2212, 4294901760
    %2214 = vmatpush.msra.mxu0 %v2213
    %v2215 = vand.u32 %v1385, 4294901760
    %v2216 = vsub.f32 %v1385, %v2215
    %v2217 = vand.u32 %v2216, 4294901760
    %v2218 = vsub.f32 %v2216, %v2217
    %v2219 = vand.u32 %v2218, 4294901760
    %2220 = vmatpush.msra.mxu0 %v2219
    %v2221 = vand.u32 %v1384, 4294901760
    %v2222 = vsub.f32 %v1384, %v2221
    %v2223 = vand.u32 %v2222, 4294901760
    %v2224 = vsub.f32 %v2222, %v2223
    %v2225 = vand.u32 %v2224, 4294901760
    %2226 = vmatpush.msra.mxu0 %v2225
    %v2227 = vand.u32 %v1383, 4294901760
    %v2228 = vsub.f32 %v1383, %v2227
    %v2229 = vand.u32 %v2228, 4294901760
    %v2230 = vsub.f32 %v2228, %v2229
    %v2231 = vand.u32 %v2230, 4294901760
    %2232 = vmatpush.msra.mxu0 %v2231
    %v2233 = vand.u32 %v1382, 4294901760
    %v2234 = vsub.f32 %v1382, %v2233
    %v2235 = vand.u32 %v2234, 4294901760
    %v2236 = vsub.f32 %v2234, %v2235
    %v2237 = vand.u32 %v2236, 4294901760
    %2238 = vmatpush.msra.mxu0 %v2237
    %v2239 = vand.u32 %v1381, 4294901760
    %v2240 = vsub.f32 %v1381, %v2239
    %v2241 = vand.u32 %v2240, 4294901760
    %v2242 = vsub.f32 %v2240, %v2241
    %v2243 = vand.u32 %v2242, 4294901760
    %2244 = vmatpush.msra.mxu0 %v2243
    %v2245 = vand.u32 %v1380, 4294901760
    %v2246 = vsub.f32 %v1380, %v2245
    %v2247 = vand.u32 %v2246, 4294901760
    %v2248 = vsub.f32 %v2246, %v2247
    %v2249 = vand.u32 %v2248, 4294901760
    %2250 = vmatpush.msra.mxu0 %v2249
    %v2251 = vand.u32 %v1379, 4294901760
    %v2252 = vsub.f32 %v1379, %v2251
    %v2253 = vand.u32 %v2252, 4294901760
    %v2254 = vsub.f32 %v2252, %v2253
    %v2255 = vand.u32 %v2254, 4294901760
    %2256 = vmatpush.msra.mxu0 %v2255
    %v2257 = vand.u32 %v1378, 4294901760
    %v2258 = vsub.f32 %v1378, %v2257
    %v2259 = vand.u32 %v2258, 4294901760
    %v2260 = vsub.f32 %v2258, %v2259
    %v2261 = vand.u32 %v2260, 4294901760
    %2262 = vmatpush.msra.mxu0 %v2261
    %v2263 = vand.u32 %v1377, 4294901760
    %v2264 = vsub.f32 %v1377, %v2263
    %v2265 = vand.u32 %v2264, 4294901760
    %v2266 = vsub.f32 %v2264, %v2265
    %v2267 = vand.u32 %v2266, 4294901760
    %2268 = vmatpush.msra.mxu0 %v2267
    %v2269 = vand.u32 %v1376, 4294901760
    %v2270 = vsub.f32 %v1376, %v2269
    %v2271 = vand.u32 %v2270, 4294901760
    %v2272 = vsub.f32 %v2270, %v2271
    %v2273 = vand.u32 %v2272, 4294901760
    %2274 = vmatpush.msra.mxu0 %v2273
    %v2275 = vand.u32 %v1375, 4294901760
    %v2276 = vsub.f32 %v1375, %v2275
    %v2277 = vand.u32 %v2276, 4294901760
    %v2278 = vsub.f32 %v2276, %v2277
    %v2279 = vand.u32 %v2278, 4294901760
    %2280 = vmatpush.msra.mxu0 %v2279
    %v2281 = vand.u32 %v1374, 4294901760
    %v2282 = vsub.f32 %v1374, %v2281
    %v2283 = vand.u32 %v2282, 4294901760
    %v2284 = vsub.f32 %v2282, %v2283
    %v2285 = vand.u32 %v2284, 4294901760
    %2286 = vmatpush.msra.mxu0 %v2285
    %v2287 = vand.u32 %v1373, 4294901760
    %v2288 = vsub.f32 %v1373, %v2287
    %v2289 = vand.u32 %v2288, 4294901760
    %v2290 = vsub.f32 %v2288, %v2289
    %v2291 = vand.u32 %v2290, 4294901760
    %2292 = vmatpush.msra.mxu0 %v2291
    %v2293 = vand.u32 %v1372, 4294901760
    %v2294 = vsub.f32 %v1372, %v2293
    %v2295 = vand.u32 %v2294, 4294901760
    %v2296 = vsub.f32 %v2294, %v2295
    %v2297 = vand.u32 %v2296, 4294901760
    %2298 = vmatpush.msra.mxu0 %v2297
    %v2299 = vand.u32 %v1331, 4294901760
    %2300 = vmatmul.f32.gmra.mxu0 %v2299
    %v2301 = vpop.f32.mrf.mxu0
    %v2302 = vadd.f32 %v2193, %v2301
    %v2303 = vand.u32 %v1335, 4294901760
    %2304 = vmatmul.f32.gmra.mxu0 %v2303
    %v2305 = vpop.f32.mrf.mxu0
    %v2306 = vadd.f32 %v2201, %v2305
    %2307 = vdwg.mxu0
    %v2308 = vand.u32 %v1387, 4294901760
    %v2309 = vsub.f32 %v1387, %v2308
    %2310 = vmatpush.msra.mxu0 %v2309
    %v2311 = vand.u32 %v1386, 4294901760
    %v2312 = vsub.f32 %v1386, %v2311
    %2313 = vmatpush.msra.mxu0 %v2312
    %v2314 = vand.u32 %v1385, 4294901760
    %v2315 = vsub.f32 %v1385, %v2314
    %2316 = vmatpush.msra.mxu0 %v2315
    %v2317 = vand.u32 %v1384, 4294901760
    %v2318 = vsub.f32 %v1384, %v2317
    %2319 = vmatpush.msra.mxu0 %v2318
    %v2320 = vand.u32 %v1383, 4294901760
    %v2321 = vsub.f32 %v1383, %v2320
    %2322 = vmatpush.msra.mxu0 %v2321
    %v2323 = vand.u32 %v1382, 4294901760
    %v2324 = vsub.f32 %v1382, %v2323
    %2325 = vmatpush.msra.mxu0 %v2324
    %v2326 = vand.u32 %v1381, 4294901760
    %v2327 = vsub.f32 %v1381, %v2326
    %2328 = vmatpush.msra.mxu0 %v2327
    %v2329 = vand.u32 %v1380, 4294901760
    %v2330 = vsub.f32 %v1380, %v2329
    %2331 = vmatpush.msra.mxu0 %v2330
    %v2332 = vand.u32 %v1379, 4294901760
    %v2333 = vsub.f32 %v1379, %v2332
    %2334 = vmatpush.msra.mxu0 %v2333
    %v2335 = vand.u32 %v1378, 4294901760
    %v2336 = vsub.f32 %v1378, %v2335
    %2337 = vmatpush.msra.mxu0 %v2336
    %v2338 = vand.u32 %v1377, 4294901760
    %v2339 = vsub.f32 %v1377, %v2338
    %2340 = vmatpush.msra.mxu0 %v2339
    %v2341 = vand.u32 %v1376, 4294901760
    %v2342 = vsub.f32 %v1376, %v2341
    %2343 = vmatpush.msra.mxu0 %v2342
    %v2344 = vand.u32 %v1375, 4294901760
    %v2345 = vsub.f32 %v1375, %v2344
    %2346 = vmatpush.msra.mxu0 %v2345
    %v2347 = vand.u32 %v1374, 4294901760
    %v2348 = vsub.f32 %v1374, %v2347
    %2349 = vmatpush.msra.mxu0 %v2348
    %v2350 = vand.u32 %v1373, 4294901760
    %v2351 = vsub.f32 %v1373, %v2350
    %2352 = vmatpush.msra.mxu0 %v2351
    %v2353 = vand.u32 %v1372, 4294901760
    %v2354 = vsub.f32 %v1372, %v2353
    %2355 = vmatpush.msra.mxu0 %v2354
    %v2356 = vand.u32 %v1331, 4294901760
    %v2357 = vsub.f32 %v1331, %v2356
    %2358 = vmatmul.f32.gmra.mxu0 %v2357
    %v2359 = vpop.f32.mrf.mxu0
    %v2360 = vadd.f32 %v2302, %v2359
    %v2361 = vand.u32 %v1335, 4294901760
    %v2362 = vsub.f32 %v1335, %v2361
    %2363 = vmatmul.f32.gmra.mxu0 %v2362
    %v2364 = vpop.f32.mrf.mxu0
    %v2365 = vadd.f32 %v2306, %v2364
    %2366 = vdwg.mxu0
    %v2367 = vand.u32 %v1387, 4294901760
    %2368 = vmatpush.msra.mxu0 %v2367
    %v2369 = vand.u32 %v1386, 4294901760
    %2370 = vmatpush.msra.mxu0 %v2369
    %v2371 = vand.u32 %v1385, 4294901760
    %2372 = vmatpush.msra.mxu0 %v2371
    %v2373 = vand.u32 %v1384, 4294901760
    %2374 = vmatpush.msra.mxu0 %v2373
    %v2375 = vand.u32 %v1383, 4294901760
    %2376 = vmatpush.msra.mxu0 %v2375
    %v2377 = vand.u32 %v1382, 4294901760
    %2378 = vmatpush.msra.mxu0 %v2377
    %v2379 = vand.u32 %v1381, 4294901760
    %2380 = vmatpush.msra.mxu0 %v2379
    %v2381 = vand.u32 %v1380, 4294901760
    %2382 = vmatpush.msra.mxu0 %v2381
    %v2383 = vand.u32 %v1379, 4294901760
    %2384 = vmatpush.msra.mxu0 %v2383
    %v2385 = vand.u32 %v1378, 4294901760
    %2386 = vmatpush.msra.mxu0 %v2385
    %v2387 = vand.u32 %v1377, 4294901760
    %2388 = vmatpush.msra.mxu0 %v2387
    %v2389 = vand.u32 %v1376, 4294901760
    %2390 = vmatpush.msra.mxu0 %v2389
    %v2391 = vand.u32 %v1375, 4294901760
    %2392 = vmatpush.msra.mxu0 %v2391
    %v2393 = vand.u32 %v1374, 4294901760
    %2394 = vmatpush.msra.mxu0 %v2393
    %v2395 = vand.u32 %v1373, 4294901760
    %2396 = vmatpush.msra.mxu0 %v2395
    %v2397 = vand.u32 %v1372, 4294901760
    %2398 = vmatpush.msra.mxu0 %v2397
    %v2399 = vand.u32 %v1331, 4294901760
    %v2400 = vsub.f32 %v1331, %v2399
    %v2401 = vand.u32 %v2400, 4294901760
    %2402 = vmatmul.f32.gmra.mxu0 %v2401
    %v2403 = vpop.f32.mrf.mxu0
    %v2404 = vadd.f32 %v2360, %v2403
    %v2405 = vand.u32 %v1335, 4294901760
    %v2406 = vsub.f32 %v1335, %v2405
    %v2407 = vand.u32 %v2406, 4294901760
    %2408 = vmatmul.f32.gmra.mxu0 %v2407
    %v2409 = vpop.f32.mrf.mxu0
    %v2410 = vadd.f32 %v2365, %v2409
    %2411 = vdwg.mxu0
    %v2412 = vand.u32 %v1387, 4294901760
    %v2413 = vsub.f32 %v1387, %v2412
    %v2414 = vand.u32 %v2413, 4294901760
    %2415 = vmatpush.msra.mxu0 %v2414
    %v2416 = vand.u32 %v1386, 4294901760
    %v2417 = vsub.f32 %v1386, %v2416
    %v2418 = vand.u32 %v2417, 4294901760
    %2419 = vmatpush.msra.mxu0 %v2418
    %v2420 = vand.u32 %v1385, 4294901760
    %v2421 = vsub.f32 %v1385, %v2420
    %v2422 = vand.u32 %v2421, 4294901760
    %2423 = vmatpush.msra.mxu0 %v2422
    %v2424 = vand.u32 %v1384, 4294901760
    %v2425 = vsub.f32 %v1384, %v2424
    %v2426 = vand.u32 %v2425, 4294901760
    %2427 = vmatpush.msra.mxu0 %v2426
    %v2428 = vand.u32 %v1383, 4294901760
    %v2429 = vsub.f32 %v1383, %v2428
    %v2430 = vand.u32 %v2429, 4294901760
    %2431 = vmatpush.msra.mxu0 %v2430
    %v2432 = vand.u32 %v1382, 4294901760
    %v2433 = vsub.f32 %v1382, %v2432
    %v2434 = vand.u32 %v2433, 4294901760
    %2435 = vmatpush.msra.mxu0 %v2434
    %v2436 = vand.u32 %v1381, 4294901760
    %v2437 = vsub.f32 %v1381, %v2436
    %v2438 = vand.u32 %v2437, 4294901760
    %2439 = vmatpush.msra.mxu0 %v2438
    %v2440 = vand.u32 %v1380, 4294901760
    %v2441 = vsub.f32 %v1380, %v2440
    %v2442 = vand.u32 %v2441, 4294901760
    %2443 = vmatpush.msra.mxu0 %v2442
    %v2444 = vand.u32 %v1379, 4294901760
    %v2445 = vsub.f32 %v1379, %v2444
    %v2446 = vand.u32 %v2445, 4294901760
    %2447 = vmatpush.msra.mxu0 %v2446
    %v2448 = vand.u32 %v1378, 4294901760
    %v2449 = vsub.f32 %v1378, %v2448
    %v2450 = vand.u32 %v2449, 4294901760
    %2451 = vmatpush.msra.mxu0 %v2450
    %v2452 = vand.u32 %v1377, 4294901760
    %v2453 = vsub.f32 %v1377, %v2452
    %v2454 = vand.u32 %v2453, 4294901760
    %2455 = vmatpush.msra.mxu0 %v2454
    %v2456 = vand.u32 %v1376, 4294901760
    %v2457 = vsub.f32 %v1376, %v2456
    %v2458 = vand.u32 %v2457, 4294901760
    %2459 = vmatpush.msra.mxu0 %v2458
    %v2460 = vand.u32 %v1375, 4294901760
    %v2461 = vsub.f32 %v1375, %v2460
    %v2462 = vand.u32 %v2461, 4294901760
    %2463 = vmatpush.msra.mxu0 %v2462
    %v2464 = vand.u32 %v1374, 4294901760
    %v2465 = vsub.f32 %v1374, %v2464
    %v2466 = vand.u32 %v2465, 4294901760
    %2467 = vmatpush.msra.mxu0 %v2466
    %v2468 = vand.u32 %v1373, 4294901760
    %v2469 = vsub.f32 %v1373, %v2468
    %v2470 = vand.u32 %v2469, 4294901760
    %2471 = vmatpush.msra.mxu0 %v2470
    %v2472 = vand.u32 %v1372, 4294901760
    %v2473 = vsub.f32 %v1372, %v2472
    %v2474 = vand.u32 %v2473, 4294901760
    %2475 = vmatpush.msra.mxu0 %v2474
    %v2476 = vand.u32 %v1331, 4294901760
    %2477 = vmatmul.f32.gmra.mxu0 %v2476
    %v2478 = vpop.f32.mrf.mxu0
    %v2479 = vadd.f32 %v2404, %v2478
    %v2480 = vand.u32 %v1335, 4294901760
    %2481 = vmatmul.f32.gmra.mxu0 %v2480
    %v2482 = vpop.f32.mrf.mxu0
    %v2483 = vadd.f32 %v2410, %v2482
    %2484 = vdwg.mxu0
    %v2485 = vand.u32 %v1387, 4294901760
    %2486 = vmatpush.msra.mxu0 %v2485
    %v2487 = vand.u32 %v1386, 4294901760
    %2488 = vmatpush.msra.mxu0 %v2487
    %v2489 = vand.u32 %v1385, 4294901760
    %2490 = vmatpush.msra.mxu0 %v2489
    %v2491 = vand.u32 %v1384, 4294901760
    %2492 = vmatpush.msra.mxu0 %v2491
    %v2493 = vand.u32 %v1383, 4294901760
    %2494 = vmatpush.msra.mxu0 %v2493
    %v2495 = vand.u32 %v1382, 4294901760
    %2496 = vmatpush.msra.mxu0 %v2495
    %v2497 = vand.u32 %v1381, 4294901760
    %2498 = vmatpush.msra.mxu0 %v2497
    %v2499 = vand.u32 %v1380, 4294901760
    %2500 = vmatpush.msra.mxu0 %v2499
    %v2501 = vand.u32 %v1379, 4294901760
    %2502 = vmatpush.msra.mxu0 %v2501
    %v2503 = vand.u32 %v1378, 4294901760
    %2504 = vmatpush.msra.mxu0 %v2503
    %v2505 = vand.u32 %v1377, 4294901760
    %2506 = vmatpush.msra.mxu0 %v2505
    %v2507 = vand.u32 %v1376, 4294901760
    %2508 = vmatpush.msra.mxu0 %v2507
    %v2509 = vand.u32 %v1375, 4294901760
    %2510 = vmatpush.msra.mxu0 %v2509
    %v2511 = vand.u32 %v1374, 4294901760
    %2512 = vmatpush.msra.mxu0 %v2511
    %v2513 = vand.u32 %v1373, 4294901760
    %2514 = vmatpush.msra.mxu0 %v2513
    %v2515 = vand.u32 %v1372, 4294901760
    %2516 = vmatpush.msra.mxu0 %v2515
    %v2517 = vand.u32 %v1331, 4294901760
    %2518 = vmatmul.f32.gmra.mxu0 %v2517
    %v2519 = vpop.f32.mrf.mxu0
    %v2520 = vadd.f32 %v2479, %v2519
    %v2521 = vand.u32 %v1335, 4294901760
    %2522 = vmatmul.f32.gmra.mxu0 %v2521
    %v2523 = vpop.f32.mrf.mxu0
    %v2524 = vadd.f32 %v2483, %v2523
    %2525 = vdwg.mxu0
    %v2526 = vand.u32 %v1403, 4294901760
    %2527 = vmatpush.msra.mxu0 %v2526
    %v2528 = vand.u32 %v1402, 4294901760
    %2529 = vmatpush.msra.mxu0 %v2528
    %v2530 = vand.u32 %v1401, 4294901760
    %2531 = vmatpush.msra.mxu0 %v2530
    %v2532 = vand.u32 %v1400, 4294901760
    %2533 = vmatpush.msra.mxu0 %v2532
    %v2534 = vand.u32 %v1399, 4294901760
    %2535 = vmatpush.msra.mxu0 %v2534
    %v2536 = vand.u32 %v1398, 4294901760
    %2537 = vmatpush.msra.mxu0 %v2536
    %v2538 = vand.u32 %v1397, 4294901760
    %2539 = vmatpush.msra.mxu0 %v2538
    %v2540 = vand.u32 %v1396, 4294901760
    %2541 = vmatpush.msra.mxu0 %v2540
    %v2542 = vand.u32 %v1395, 4294901760
    %2543 = vmatpush.msra.mxu0 %v2542
    %v2544 = vand.u32 %v1394, 4294901760
    %2545 = vmatpush.msra.mxu0 %v2544
    %v2546 = vand.u32 %v1393, 4294901760
    %2547 = vmatpush.msra.mxu0 %v2546
    %v2548 = vand.u32 %v1392, 4294901760
    %2549 = vmatpush.msra.mxu0 %v2548
    %v2550 = vand.u32 %v1391, 4294901760
    %2551 = vmatpush.msra.mxu0 %v2550
    %v2552 = vand.u32 %v1390, 4294901760
    %2553 = vmatpush.msra.mxu0 %v2552
    %v2554 = vand.u32 %v1389, 4294901760
    %2555 = vmatpush.msra.mxu0 %v2554
    %v2556 = vand.u32 %v1388, 4294901760
    %2557 = vmatpush.msra.mxu0 %v2556
    %v2558 = vand.u32 %v1332, 4294901760
    %v2559 = vsub.f32 %v1332, %v2558
    %v2560 = vand.u32 %v2559, 4294901760
    %v2561 = vsub.f32 %v2559, %v2560
    %v2562 = vand.u32 %v2561, 4294901760
    %2563 = vmatmul.f32.gmra.mxu0 %v2562
    %v2564 = vpop.f32.mrf.mxu0
    %v2565 = vadd.f32 %v2520, %v2564
    %v2566 = vand.u32 %v1336, 4294901760
    %v2567 = vsub.f32 %v1336, %v2566
    %v2568 = vand.u32 %v2567, 4294901760
    %v2569 = vsub.f32 %v2567, %v2568
    %v2570 = vand.u32 %v2569, 4294901760
    %2571 = vmatmul.f32.gmra.mxu0 %v2570
    %v2572 = vpop.f32.mrf.mxu0
    %v2573 = vadd.f32 %v2524, %v2572
    %2574 = vdwg.mxu0
    %v2575 = vand.u32 %v1403, 4294901760
    %v2576 = vsub.f32 %v1403, %v2575
    %v2577 = vand.u32 %v2576, 4294901760
    %v2578 = vsub.f32 %v2576, %v2577
    %v2579 = vand.u32 %v2578, 4294901760
    %2580 = vmatpush.msra.mxu0 %v2579
    %v2581 = vand.u32 %v1402, 4294901760
    %v2582 = vsub.f32 %v1402, %v2581
    %v2583 = vand.u32 %v2582, 4294901760
    %v2584 = vsub.f32 %v2582, %v2583
    %v2585 = vand.u32 %v2584, 4294901760
    %2586 = vmatpush.msra.mxu0 %v2585
    %v2587 = vand.u32 %v1401, 4294901760
    %v2588 = vsub.f32 %v1401, %v2587
    %v2589 = vand.u32 %v2588, 4294901760
    %v2590 = vsub.f32 %v2588, %v2589
    %v2591 = vand.u32 %v2590, 4294901760
    %2592 = vmatpush.msra.mxu0 %v2591
    %v2593 = vand.u32 %v1400, 4294901760
    %v2594 = vsub.f32 %v1400, %v2593
    %v2595 = vand.u32 %v2594, 4294901760
    %v2596 = vsub.f32 %v2594, %v2595
    %v2597 = vand.u32 %v2596, 4294901760
    %2598 = vmatpush.msra.mxu0 %v2597
    %v2599 = vand.u32 %v1399, 4294901760
    %v2600 = vsub.f32 %v1399, %v2599
    %v2601 = vand.u32 %v2600, 4294901760
    %v2602 = vsub.f32 %v2600, %v2601
    %v2603 = vand.u32 %v2602, 4294901760
    %2604 = vmatpush.msra.mxu0 %v2603
    %v2605 = vand.u32 %v1398, 4294901760
    %v2606 = vsub.f32 %v1398, %v2605
    %v2607 = vand.u32 %v2606, 4294901760
    %v2608 = vsub.f32 %v2606, %v2607
    %v2609 = vand.u32 %v2608, 4294901760
    %2610 = vmatpush.msra.mxu0 %v2609
    %v2611 = vand.u32 %v1397, 4294901760
    %v2612 = vsub.f32 %v1397, %v2611
    %v2613 = vand.u32 %v2612, 4294901760
    %v2614 = vsub.f32 %v2612, %v2613
    %v2615 = vand.u32 %v2614, 4294901760
    %2616 = vmatpush.msra.mxu0 %v2615
    %v2617 = vand.u32 %v1396, 4294901760
    %v2618 = vsub.f32 %v1396, %v2617
    %v2619 = vand.u32 %v2618, 4294901760
    %v2620 = vsub.f32 %v2618, %v2619
    %v2621 = vand.u32 %v2620, 4294901760
    %2622 = vmatpush.msra.mxu0 %v2621
    %v2623 = vand.u32 %v1395, 4294901760
    %v2624 = vsub.f32 %v1395, %v2623
    %v2625 = vand.u32 %v2624, 4294901760
    %v2626 = vsub.f32 %v2624, %v2625
    %v2627 = vand.u32 %v2626, 4294901760
    %2628 = vmatpush.msra.mxu0 %v2627
    %v2629 = vand.u32 %v1394, 4294901760
    %v2630 = vsub.f32 %v1394, %v2629
    %v2631 = vand.u32 %v2630, 4294901760
    %v2632 = vsub.f32 %v2630, %v2631
    %v2633 = vand.u32 %v2632, 4294901760
    %2634 = vmatpush.msra.mxu0 %v2633
    %v2635 = vand.u32 %v1393, 4294901760
    %v2636 = vsub.f32 %v1393, %v2635
    %v2637 = vand.u32 %v2636, 4294901760
    %v2638 = vsub.f32 %v2636, %v2637
    %v2639 = vand.u32 %v2638, 4294901760
    %2640 = vmatpush.msra.mxu0 %v2639
    %v2641 = vand.u32 %v1392, 4294901760
    %v2642 = vsub.f32 %v1392, %v2641
    %v2643 = vand.u32 %v2642, 4294901760
    %v2644 = vsub.f32 %v2642, %v2643
    %v2645 = vand.u32 %v2644, 4294901760
    %2646 = vmatpush.msra.mxu0 %v2645
    %v2647 = vand.u32 %v1391, 4294901760
    %v2648 = vsub.f32 %v1391, %v2647
    %v2649 = vand.u32 %v2648, 4294901760
    %v2650 = vsub.f32 %v2648, %v2649
    %v2651 = vand.u32 %v2650, 4294901760
    %2652 = vmatpush.msra.mxu0 %v2651
    %v2653 = vand.u32 %v1390, 4294901760
    %v2654 = vsub.f32 %v1390, %v2653
    %v2655 = vand.u32 %v2654, 4294901760
    %v2656 = vsub.f32 %v2654, %v2655
    %v2657 = vand.u32 %v2656, 4294901760
    %2658 = vmatpush.msra.mxu0 %v2657
    %v2659 = vand.u32 %v1389, 4294901760
    %v2660 = vsub.f32 %v1389, %v2659
    %v2661 = vand.u32 %v2660, 4294901760
    %v2662 = vsub.f32 %v2660, %v2661
    %v2663 = vand.u32 %v2662, 4294901760
    %2664 = vmatpush.msra.mxu0 %v2663
    %v2665 = vand.u32 %v1388, 4294901760
    %v2666 = vsub.f32 %v1388, %v2665
    %v2667 = vand.u32 %v2666, 4294901760
    %v2668 = vsub.f32 %v2666, %v2667
    %v2669 = vand.u32 %v2668, 4294901760
    %2670 = vmatpush.msra.mxu0 %v2669
    %v2671 = vand.u32 %v1332, 4294901760
    %2672 = vmatmul.f32.gmra.mxu0 %v2671
    %v2673 = vpop.f32.mrf.mxu0
    %v2674 = vadd.f32 %v2565, %v2673
    %v2675 = vand.u32 %v1336, 4294901760
    %2676 = vmatmul.f32.gmra.mxu0 %v2675
    %v2677 = vpop.f32.mrf.mxu0
    %v2678 = vadd.f32 %v2573, %v2677
    %2679 = vdwg.mxu0
    %v2680 = vand.u32 %v1403, 4294901760
    %v2681 = vsub.f32 %v1403, %v2680
    %2682 = vmatpush.msra.mxu0 %v2681
    %v2683 = vand.u32 %v1402, 4294901760
    %v2684 = vsub.f32 %v1402, %v2683
    %2685 = vmatpush.msra.mxu0 %v2684
    %v2686 = vand.u32 %v1401, 4294901760
    %v2687 = vsub.f32 %v1401, %v2686
    %2688 = vmatpush.msra.mxu0 %v2687
    %v2689 = vand.u32 %v1400, 4294901760
    %v2690 = vsub.f32 %v1400, %v2689
    %2691 = vmatpush.msra.mxu0 %v2690
    %v2692 = vand.u32 %v1399, 4294901760
    %v2693 = vsub.f32 %v1399, %v2692
    %2694 = vmatpush.msra.mxu0 %v2693
    %v2695 = vand.u32 %v1398, 4294901760
    %v2696 = vsub.f32 %v1398, %v2695
    %2697 = vmatpush.msra.mxu0 %v2696
    %v2698 = vand.u32 %v1397, 4294901760
    %v2699 = vsub.f32 %v1397, %v2698
    %2700 = vmatpush.msra.mxu0 %v2699
    %v2701 = vand.u32 %v1396, 4294901760
    %v2702 = vsub.f32 %v1396, %v2701
    %2703 = vmatpush.msra.mxu0 %v2702
    %v2704 = vand.u32 %v1395, 4294901760
    %v2705 = vsub.f32 %v1395, %v2704
    %2706 = vmatpush.msra.mxu0 %v2705
    %v2707 = vand.u32 %v1394, 4294901760
    %v2708 = vsub.f32 %v1394, %v2707
    %2709 = vmatpush.msra.mxu0 %v2708
    %v2710 = vand.u32 %v1393, 4294901760
    %v2711 = vsub.f32 %v1393, %v2710
    %2712 = vmatpush.msra.mxu0 %v2711
    %v2713 = vand.u32 %v1392, 4294901760
    %v2714 = vsub.f32 %v1392, %v2713
    %2715 = vmatpush.msra.mxu0 %v2714
    %v2716 = vand.u32 %v1391, 4294901760
    %v2717 = vsub.f32 %v1391, %v2716
    %2718 = vmatpush.msra.mxu0 %v2717
    %v2719 = vand.u32 %v1390, 4294901760
    %v2720 = vsub.f32 %v1390, %v2719
    %2721 = vmatpush.msra.mxu0 %v2720
    %v2722 = vand.u32 %v1389, 4294901760
    %v2723 = vsub.f32 %v1389, %v2722
    %2724 = vmatpush.msra.mxu0 %v2723
    %v2725 = vand.u32 %v1388, 4294901760
    %v2726 = vsub.f32 %v1388, %v2725
    %2727 = vmatpush.msra.mxu0 %v2726
    %v2728 = vand.u32 %v1332, 4294901760
    %v2729 = vsub.f32 %v1332, %v2728
    %2730 = vmatmul.f32.gmra.mxu0 %v2729
    %v2731 = vpop.f32.mrf.mxu0
    %v2732 = vadd.f32 %v2674, %v2731
    %v2733 = vand.u32 %v1336, 4294901760
    %v2734 = vsub.f32 %v1336, %v2733
    %2735 = vmatmul.f32.gmra.mxu0 %v2734
    %v2736 = vpop.f32.mrf.mxu0
    %v2737 = vadd.f32 %v2678, %v2736
    %2738 = vdwg.mxu0
    %v2739 = vand.u32 %v1403, 4294901760
    %2740 = vmatpush.msra.mxu0 %v2739
    %v2741 = vand.u32 %v1402, 4294901760
    %2742 = vmatpush.msra.mxu0 %v2741
    %v2743 = vand.u32 %v1401, 4294901760
    %2744 = vmatpush.msra.mxu0 %v2743
    %v2745 = vand.u32 %v1400, 4294901760
    %2746 = vmatpush.msra.mxu0 %v2745
    %v2747 = vand.u32 %v1399, 4294901760
    %2748 = vmatpush.msra.mxu0 %v2747
    %v2749 = vand.u32 %v1398, 4294901760
    %2750 = vmatpush.msra.mxu0 %v2749
    %v2751 = vand.u32 %v1397, 4294901760
    %2752 = vmatpush.msra.mxu0 %v2751
    %v2753 = vand.u32 %v1396, 4294901760
    %2754 = vmatpush.msra.mxu0 %v2753
    %v2755 = vand.u32 %v1395, 4294901760
    %2756 = vmatpush.msra.mxu0 %v2755
    %v2757 = vand.u32 %v1394, 4294901760
    %2758 = vmatpush.msra.mxu0 %v2757
    %v2759 = vand.u32 %v1393, 4294901760
    %2760 = vmatpush.msra.mxu0 %v2759
    %v2761 = vand.u32 %v1392, 4294901760
    %2762 = vmatpush.msra.mxu0 %v2761
    %v2763 = vand.u32 %v1391, 4294901760
    %2764 = vmatpush.msra.mxu0 %v2763
    %v2765 = vand.u32 %v1390, 4294901760
    %2766 = vmatpush.msra.mxu0 %v2765
    %v2767 = vand.u32 %v1389, 4294901760
    %2768 = vmatpush.msra.mxu0 %v2767
    %v2769 = vand.u32 %v1388, 4294901760
    %2770 = vmatpush.msra.mxu0 %v2769
    %v2771 = vand.u32 %v1332, 4294901760
    %v2772 = vsub.f32 %v1332, %v2771
    %v2773 = vand.u32 %v2772, 4294901760
    %2774 = vmatmul.f32.gmra.mxu0 %v2773
    %v2775 = vpop.f32.mrf.mxu0
    %v2776 = vadd.f32 %v2732, %v2775
    %v2777 = vand.u32 %v1336, 4294901760
    %v2778 = vsub.f32 %v1336, %v2777
    %v2779 = vand.u32 %v2778, 4294901760
    %2780 = vmatmul.f32.gmra.mxu0 %v2779
    %v2781 = vpop.f32.mrf.mxu0
    %v2782 = vadd.f32 %v2737, %v2781
    %2783 = vdwg.mxu0
    %v2784 = vand.u32 %v1403, 4294901760
    %v2785 = vsub.f32 %v1403, %v2784
    %v2786 = vand.u32 %v2785, 4294901760
    %2787 = vmatpush.msra.mxu0 %v2786
    %v2788 = vand.u32 %v1402, 4294901760
    %v2789 = vsub.f32 %v1402, %v2788
    %v2790 = vand.u32 %v2789, 4294901760
    %2791 = vmatpush.msra.mxu0 %v2790
    %v2792 = vand.u32 %v1401, 4294901760
    %v2793 = vsub.f32 %v1401, %v2792
    %v2794 = vand.u32 %v2793, 4294901760
    %2795 = vmatpush.msra.mxu0 %v2794
    %v2796 = vand.u32 %v1400, 4294901760
    %v2797 = vsub.f32 %v1400, %v2796
    %v2798 = vand.u32 %v2797, 4294901760
    %2799 = vmatpush.msra.mxu0 %v2798
    %v2800 = vand.u32 %v1399, 4294901760
    %v2801 = vsub.f32 %v1399, %v2800
    %v2802 = vand.u32 %v2801, 4294901760
    %2803 = vmatpush.msra.mxu0 %v2802
    %v2804 = vand.u32 %v1398, 4294901760
    %v2805 = vsub.f32 %v1398, %v2804
    %v2806 = vand.u32 %v2805, 4294901760
    %2807 = vmatpush.msra.mxu0 %v2806
    %v2808 = vand.u32 %v1397, 4294901760
    %v2809 = vsub.f32 %v1397, %v2808
    %v2810 = vand.u32 %v2809, 4294901760
    %2811 = vmatpush.msra.mxu0 %v2810
    %v2812 = vand.u32 %v1396, 4294901760
    %v2813 = vsub.f32 %v1396, %v2812
    %v2814 = vand.u32 %v2813, 4294901760
    %2815 = vmatpush.msra.mxu0 %v2814
    %v2816 = vand.u32 %v1395, 4294901760
    %v2817 = vsub.f32 %v1395, %v2816
    %v2818 = vand.u32 %v2817, 4294901760
    %2819 = vmatpush.msra.mxu0 %v2818
    %v2820 = vand.u32 %v1394, 4294901760
    %v2821 = vsub.f32 %v1394, %v2820
    %v2822 = vand.u32 %v2821, 4294901760
    %2823 = vmatpush.msra.mxu0 %v2822
    %v2824 = vand.u32 %v1393, 4294901760
    %v2825 = vsub.f32 %v1393, %v2824
    %v2826 = vand.u32 %v2825, 4294901760
    %2827 = vmatpush.msra.mxu0 %v2826
    %v2828 = vand.u32 %v1392, 4294901760
    %v2829 = vsub.f32 %v1392, %v2828
    %v2830 = vand.u32 %v2829, 4294901760
    %2831 = vmatpush.msra.mxu0 %v2830
    %v2832 = vand.u32 %v1391, 4294901760
    %v2833 = vsub.f32 %v1391, %v2832
    %v2834 = vand.u32 %v2833, 4294901760
    %2835 = vmatpush.msra.mxu0 %v2834
    %v2836 = vand.u32 %v1390, 4294901760
    %v2837 = vsub.f32 %v1390, %v2836
    %v2838 = vand.u32 %v2837, 4294901760
    %2839 = vmatpush.msra.mxu0 %v2838
    %v2840 = vand.u32 %v1389, 4294901760
    %v2841 = vsub.f32 %v1389, %v2840
    %v2842 = vand.u32 %v2841, 4294901760
    %2843 = vmatpush.msra.mxu0 %v2842
    %v2844 = vand.u32 %v1388, 4294901760
    %v2845 = vsub.f32 %v1388, %v2844
    %v2846 = vand.u32 %v2845, 4294901760
    %2847 = vmatpush.msra.mxu0 %v2846
    %v2848 = vand.u32 %v1332, 4294901760
    %2849 = vmatmul.f32.gmra.mxu0 %v2848
    %v2850 = vpop.f32.mrf.mxu0
    %v2851 = vadd.f32 %v2776, %v2850
    %v2852 = vand.u32 %v1336, 4294901760
    %2853 = vmatmul.f32.gmra.mxu0 %v2852
    %v2854 = vpop.f32.mrf.mxu0
    %v2855 = vadd.f32 %v2782, %v2854
    %2856 = vdwg.mxu0
    %v2857 = vand.u32 %v1403, 4294901760
    %2858 = vmatpush.msra.mxu0 %v2857
    %v2859 = vand.u32 %v1402, 4294901760
    %2860 = vmatpush.msra.mxu0 %v2859
    %v2861 = vand.u32 %v1401, 4294901760
    %2862 = vmatpush.msra.mxu0 %v2861
    %v2863 = vand.u32 %v1400, 4294901760
    %2864 = vmatpush.msra.mxu0 %v2863
    %v2865 = vand.u32 %v1399, 4294901760
    %2866 = vmatpush.msra.mxu0 %v2865
    %v2867 = vand.u32 %v1398, 4294901760
    %2868 = vmatpush.msra.mxu0 %v2867
    %v2869 = vand.u32 %v1397, 4294901760
    %2870 = vmatpush.msra.mxu0 %v2869
    %v2871 = vand.u32 %v1396, 4294901760
    %2872 = vmatpush.msra.mxu0 %v2871
    %v2873 = vand.u32 %v1395, 4294901760
    %2874 = vmatpush.msra.mxu0 %v2873
    %v2875 = vand.u32 %v1394, 4294901760
    %2876 = vmatpush.msra.mxu0 %v2875
    %v2877 = vand.u32 %v1393, 4294901760
    %2878 = vmatpush.msra.mxu0 %v2877
    %v2879 = vand.u32 %v1392, 4294901760
    %2880 = vmatpush.msra.mxu0 %v2879
    %v2881 = vand.u32 %v1391, 4294901760
    %2882 = vmatpush.msra.mxu0 %v2881
    %v2883 = vand.u32 %v1390, 4294901760
    %2884 = vmatpush.msra.mxu0 %v2883
    %v2885 = vand.u32 %v1389, 4294901760
    %2886 = vmatpush.msra.mxu0 %v2885
    %v2887 = vand.u32 %v1388, 4294901760
    %2888 = vmatpush.msra.mxu0 %v2887
    %v2889 = vand.u32 %v1332, 4294901760
    %2890 = vmatmul.f32.gmra.mxu0 %v2889
    %v2891 = vpop.f32.mrf.mxu0
    %v2892 = vadd.f32 %v2851, %v2891
    %v2893 = vand.u32 %v1336, 4294901760
    %2894 = vmatmul.f32.gmra.mxu0 %v2893
    %v2895 = vpop.f32.mrf.mxu0
    %v2896 = vadd.f32 %v2855, %v2895
    %2897 = vdwg.mxu0
    %v2899 = vrot.slane %v2892, 4
    %v2901 = vsel %vm447, %v2892, %v2899
    %v2902 = vrot.slane %v2892, 1
    %v2904 = vrot.slane %v2892, 5
    %v2906 = vsel %vm447, %v2902, %v2904
    %v2907 = vrot.slane %v2892, 2
    %v2909 = vrot.slane %v2892, 6
    %v2911 = vsel %vm447, %v2907, %v2909
    %v2912 = vrot.slane %v2892, 3
    %v2915 = vrot.slane %v2896, 7
    %v2917 = vsel %vm447, %v2912, %v2915
    %v2918 = vsel %vm447, %v2899, %v2896
    %vm2919 = vcmask 261120
    %v2921 = vsel %vm2919, 0.0, 0
    %2923 = vmatpush.msra.mxu0 0.0
    %2924 = vmatpush.msra.mxu0 0.0
    %2925 = vmatpush.msra.mxu0 0.0
    %2926 = vmatpush.msra.mxu0 0.0
    %2927 = vmatpush.msra.mxu0 0.0
    %2928 = vmatpush.msra.mxu0 0.0
    %2929 = vmatpush.msra.mxu0 0.0
    %2930 = vmatpush.msra.mxu0 0.0
    %2931 = vmatpush.msra.mxu0 0.0
    %2932 = vmatpush.msra.mxu0 0.0
    %2933 = vmatpush.msra.mxu0 0.0
    %2934 = vmatpush.msra.mxu0 0.0
    %v2935 = vand.u32 %v1407, 4294901760
    %2936 = vmatpush.msra.mxu0 %v2935
    %v2937 = vand.u32 %v1406, 4294901760
    %2938 = vmatpush.msra.mxu0 %v2937
    %v2939 = vand.u32 %v1405, 4294901760
    %2940 = vmatpush.msra.mxu0 %v2939
    %v2941 = vand.u32 %v1404, 4294901760
    %2942 = vmatpush.msra.mxu0 %v2941
    %v2943 = vand.u32 %v2921, 4294901760
    %v2944 = vsub.f32 %v2921, %v2943
    %v2945 = vand.u32 %v2944, 4294901760
    %v2946 = vsub.f32 %v2944, %v2945
    %v2947 = vand.u32 %v2946, 4294901760
    %2948 = vmatmul.f32.gmra.mxu0 %v2947
    %v2949 = vpop.f32.mrf.mxu0
    %v2950 = vadd.f32 0.0, %v2949
    %2951 = vdwg.mxu0
    %2952 = vmatpush.msra.mxu0 0.0
    %2953 = vmatpush.msra.mxu0 0.0
    %2954 = vmatpush.msra.mxu0 0.0
    %2955 = vmatpush.msra.mxu0 0.0
    %2956 = vmatpush.msra.mxu0 0.0
    %2957 = vmatpush.msra.mxu0 0.0
    %2958 = vmatpush.msra.mxu0 0.0
    %2959 = vmatpush.msra.mxu0 0.0
    %2960 = vmatpush.msra.mxu0 0.0
    %2961 = vmatpush.msra.mxu0 0.0
    %2962 = vmatpush.msra.mxu0 0.0
    %2963 = vmatpush.msra.mxu0 0.0
    %v2964 = vand.u32 %v1407, 4294901760
    %v2965 = vsub.f32 %v1407, %v2964
    %v2966 = vand.u32 %v2965, 4294901760
    %v2967 = vsub.f32 %v2965, %v2966
    %v2968 = vand.u32 %v2967, 4294901760
    %2969 = vmatpush.msra.mxu0 %v2968
    %v2970 = vand.u32 %v1406, 4294901760
    %v2971 = vsub.f32 %v1406, %v2970
    %v2972 = vand.u32 %v2971, 4294901760
    %v2973 = vsub.f32 %v2971, %v2972
    %v2974 = vand.u32 %v2973, 4294901760
    %2975 = vmatpush.msra.mxu0 %v2974
    %v2976 = vand.u32 %v1405, 4294901760
    %v2977 = vsub.f32 %v1405, %v2976
    %v2978 = vand.u32 %v2977, 4294901760
    %v2979 = vsub.f32 %v2977, %v2978
    %v2980 = vand.u32 %v2979, 4294901760
    %2981 = vmatpush.msra.mxu0 %v2980
    %v2982 = vand.u32 %v1404, 4294901760
    %v2983 = vsub.f32 %v1404, %v2982
    %v2984 = vand.u32 %v2983, 4294901760
    %v2985 = vsub.f32 %v2983, %v2984
    %v2986 = vand.u32 %v2985, 4294901760
    %2987 = vmatpush.msra.mxu0 %v2986
    %v2988 = vand.u32 %v2921, 4294901760
    %2989 = vmatmul.f32.gmra.mxu0 %v2988
    %v2990 = vpop.f32.mrf.mxu0
    %v2991 = vadd.f32 %v2950, %v2990
    %2992 = vdwg.mxu0
    %2993 = vmatpush.msra.mxu0 0.0
    %2994 = vmatpush.msra.mxu0 0.0
    %2995 = vmatpush.msra.mxu0 0.0
    %2996 = vmatpush.msra.mxu0 0.0
    %2997 = vmatpush.msra.mxu0 0.0
    %2998 = vmatpush.msra.mxu0 0.0
    %2999 = vmatpush.msra.mxu0 0.0
    %3000 = vmatpush.msra.mxu0 0.0
    %3001 = vmatpush.msra.mxu0 0.0
    %3002 = vmatpush.msra.mxu0 0.0
    %3003 = vmatpush.msra.mxu0 0.0
    %3004 = vmatpush.msra.mxu0 0.0
    %v3005 = vand.u32 %v1407, 4294901760
    %v3006 = vsub.f32 %v1407, %v3005
    %3007 = vmatpush.msra.mxu0 %v3006
    %v3008 = vand.u32 %v1406, 4294901760
    %v3009 = vsub.f32 %v1406, %v3008
    %3010 = vmatpush.msra.mxu0 %v3009
    %v3011 = vand.u32 %v1405, 4294901760
    %v3012 = vsub.f32 %v1405, %v3011
    %3013 = vmatpush.msra.mxu0 %v3012
    %v3014 = vand.u32 %v1404, 4294901760
    %v3015 = vsub.f32 %v1404, %v3014
    %3016 = vmatpush.msra.mxu0 %v3015
    %v3017 = vand.u32 %v2921, 4294901760
    %v3018 = vsub.f32 %v2921, %v3017
    %3019 = vmatmul.f32.gmra.mxu0 %v3018
    %v3020 = vpop.f32.mrf.mxu0
    %v3021 = vadd.f32 %v2991, %v3020
    %3022 = vdwg.mxu0
    %3023 = vmatpush.msra.mxu0 0.0
    %3024 = vmatpush.msra.mxu0 0.0
    %3025 = vmatpush.msra.mxu0 0.0
    %3026 = vmatpush.msra.mxu0 0.0
    %3027 = vmatpush.msra.mxu0 0.0
    %3028 = vmatpush.msra.mxu0 0.0
    %3029 = vmatpush.msra.mxu0 0.0
    %3030 = vmatpush.msra.mxu0 0.0
    %3031 = vmatpush.msra.mxu0 0.0
    %3032 = vmatpush.msra.mxu0 0.0
    %3033 = vmatpush.msra.mxu0 0.0
    %3034 = vmatpush.msra.mxu0 0.0
    %v3035 = vand.u32 %v1407, 4294901760
    %3036 = vmatpush.msra.mxu0 %v3035
    %v3037 = vand.u32 %v1406, 4294901760
    %3038 = vmatpush.msra.mxu0 %v3037
    %v3039 = vand.u32 %v1405, 4294901760
    %3040 = vmatpush.msra.mxu0 %v3039
    %v3041 = vand.u32 %v1404, 4294901760
    %3042 = vmatpush.msra.mxu0 %v3041
    %v3043 = vand.u32 %v2921, 4294901760
    %v3044 = vsub.f32 %v2921, %v3043
    %v3045 = vand.u32 %v3044, 4294901760
    %3046 = vmatmul.f32.gmra.mxu0 %v3045
    %v3047 = vpop.f32.mrf.mxu0
    %v3048 = vadd.f32 %v3021, %v3047
    %3049 = vdwg.mxu0
    %3050 = vmatpush.msra.mxu0 0.0
    %3051 = vmatpush.msra.mxu0 0.0
    %3052 = vmatpush.msra.mxu0 0.0
    %3053 = vmatpush.msra.mxu0 0.0
    %3054 = vmatpush.msra.mxu0 0.0
    %3055 = vmatpush.msra.mxu0 0.0
    %3056 = vmatpush.msra.mxu0 0.0
    %3057 = vmatpush.msra.mxu0 0.0
    %3058 = vmatpush.msra.mxu0 0.0
    %3059 = vmatpush.msra.mxu0 0.0
    %3060 = vmatpush.msra.mxu0 0.0
    %3061 = vmatpush.msra.mxu0 0.0
    %v3062 = vand.u32 %v1407, 4294901760
    %v3063 = vsub.f32 %v1407, %v3062
    %v3064 = vand.u32 %v3063, 4294901760
    %3065 = vmatpush.msra.mxu0 %v3064
    %v3066 = vand.u32 %v1406, 4294901760
    %v3067 = vsub.f32 %v1406, %v3066
    %v3068 = vand.u32 %v3067, 4294901760
    %3069 = vmatpush.msra.mxu0 %v3068
    %v3070 = vand.u32 %v1405, 4294901760
    %v3071 = vsub.f32 %v1405, %v3070
    %v3072 = vand.u32 %v3071, 4294901760
    %3073 = vmatpush.msra.mxu0 %v3072
    %v3074 = vand.u32 %v1404, 4294901760
    %v3075 = vsub.f32 %v1404, %v3074
    %v3076 = vand.u32 %v3075, 4294901760
    %3077 = vmatpush.msra.mxu0 %v3076
    %v3078 = vand.u32 %v2921, 4294901760
    %3079 = vmatmul.f32.gmra.mxu0 %v3078
    %v3080 = vpop.f32.mrf.mxu0
    %v3081 = vadd.f32 %v3048, %v3080
    %3082 = vdwg.mxu0
    %3083 = vmatpush.msra.mxu0 0.0
    %3084 = vmatpush.msra.mxu0 0.0
    %3085 = vmatpush.msra.mxu0 0.0
    %3086 = vmatpush.msra.mxu0 0.0
    %3087 = vmatpush.msra.mxu0 0.0
    %3088 = vmatpush.msra.mxu0 0.0
    %3089 = vmatpush.msra.mxu0 0.0
    %3090 = vmatpush.msra.mxu0 0.0
    %3091 = vmatpush.msra.mxu0 0.0
    %3092 = vmatpush.msra.mxu0 0.0
    %3093 = vmatpush.msra.mxu0 0.0
    %3094 = vmatpush.msra.mxu0 0.0
    %v3095 = vand.u32 %v1407, 4294901760
    %3096 = vmatpush.msra.mxu0 %v3095
    %v3097 = vand.u32 %v1406, 4294901760
    %3098 = vmatpush.msra.mxu0 %v3097
    %v3099 = vand.u32 %v1405, 4294901760
    %3100 = vmatpush.msra.mxu0 %v3099
    %v3101 = vand.u32 %v1404, 4294901760
    %3102 = vmatpush.msra.mxu0 %v3101
    %v3103 = vand.u32 %v2921, 4294901760
    %3104 = vmatmul.f32.gmra.mxu0 %v3103
    %v3105 = vpop.f32.mrf.mxu0
    %v3106 = vadd.f32 %v3081, %v3105
    %3107 = vdwg.mxu0
    %v3108 = vadd.f32 %v2901, %v3106
    %v3109 = vxor.u32 %v3108, 2147483648
    %v3110 = vmul.f32 %v3109, 1.442695
    %v3111 = vpow.pop %v3110
    %v3112 = vadd.f32 %v3111, 1.0
    %v3113 = vrcp.pop %v3112
    %v3114 = vmul.f32 %v3112, %v3113
    %v3115 = vsub.f32 1.0, %v3114
    %v3116 = vmul.f32 %v3113, %v3115
    %v3117 = vadd.f32 %v3113, %v3116
    %vm3118 = vweird.f32 %v3112
    %vm3119 = vweird.f32 %v3113
    %vm3120 = vmor %vm3118, %vm3119
    %v3121 = vsel %vm3120, %v3113, %v3117
    %v3122 = vand.u32 2147483647, %v3112
    %vm3123 = vcmp.eq.f32.partialorder %v3122, 8.507059e+37
    %v3124 = vand.u32 %v3112, 2147483648
    %v3125 = vor.u32 1.1754944e-38, %v3124
    %v3126 = vsel %vm3123, %v3125, %v3121
    %v3127 = vmul.f32 1.0, %v3126
    %v3128 = vtanh.pop %v3108
    %v3129 = vmul.f32 %v3127, 0.0
    %3131 = vrot.lane.b32.xlu0 %v3128, 64
    %v3132 = vpop.permute.xlu0 %3131
    %v3134 = vmul.f32 %v3127, %v3132
    %3136 = vrot.lane.b32.xlu0 %v3134, 32
    %v3137 = vpop.permute.xlu0 %3136
    %v3139 = vadd.f32 %v3129, %v3137
    %v3140 = vtanh.pop %v3139
    %3142 = vrot.lane.b32.xlu0 %v3140, 64
    %v3143 = vpop.permute.xlu0 %3142
    %v3145 = vmul.f32 %v3127, %v3143
    %3147 = vrot.lane.b32.xlu0 %v3145, 32
    %v3148 = vpop.permute.xlu0 %3147
    %v3149 = vsel %vm2919, %v3148, 0
    %3151 = vmatpush.msra.mxu0 0.0
    %3152 = vmatpush.msra.mxu0 0.0
    %3153 = vmatpush.msra.mxu0 0.0
    %3154 = vmatpush.msra.mxu0 0.0
    %3155 = vmatpush.msra.mxu0 0.0
    %3156 = vmatpush.msra.mxu0 0.0
    %3157 = vmatpush.msra.mxu0 0.0
    %3158 = vmatpush.msra.mxu0 0.0
    %3159 = vmatpush.msra.mxu0 0.0
    %3160 = vmatpush.msra.mxu0 0.0
    %3161 = vmatpush.msra.mxu0 0.0
    %3162 = vmatpush.msra.mxu0 0.0
    %v3163 = vand.u32 %v1407, 4294901760
    %3164 = vmatpush.msra.mxu0 %v3163
    %v3165 = vand.u32 %v1406, 4294901760
    %3166 = vmatpush.msra.mxu0 %v3165
    %v3167 = vand.u32 %v1405, 4294901760
    %3168 = vmatpush.msra.mxu0 %v3167
    %v3169 = vand.u32 %v1404, 4294901760
    %3170 = vmatpush.msra.mxu0 %v3169
    %v3171 = vand.u32 %v3149, 4294901760
    %v3172 = vsub.f32 %v3149, %v3171
    %v3173 = vand.u32 %v3172, 4294901760
    %v3174 = vsub.f32 %v3172, %v3173
    %v3175 = vand.u32 %v3174, 4294901760
    %3176 = vmatmul.f32.gmra.mxu0 %v3175
    %v3177 = vpop.f32.mrf.mxu0
    %v3178 = vadd.f32 0.0, %v3177
    %3179 = vdwg.mxu0
    %3180 = vmatpush.msra.mxu0 0.0
    %3181 = vmatpush.msra.mxu0 0.0
    %3182 = vmatpush.msra.mxu0 0.0
    %3183 = vmatpush.msra.mxu0 0.0
    %3184 = vmatpush.msra.mxu0 0.0
    %3185 = vmatpush.msra.mxu0 0.0
    %3186 = vmatpush.msra.mxu0 0.0
    %3187 = vmatpush.msra.mxu0 0.0
    %3188 = vmatpush.msra.mxu0 0.0
    %3189 = vmatpush.msra.mxu0 0.0
    %3190 = vmatpush.msra.mxu0 0.0
    %3191 = vmatpush.msra.mxu0 0.0
    %v3192 = vand.u32 %v1407, 4294901760
    %v3193 = vsub.f32 %v1407, %v3192
    %v3194 = vand.u32 %v3193, 4294901760
    %v3195 = vsub.f32 %v3193, %v3194
    %v3196 = vand.u32 %v3195, 4294901760
    %3197 = vmatpush.msra.mxu0 %v3196
    %v3198 = vand.u32 %v1406, 4294901760
    %v3199 = vsub.f32 %v1406, %v3198
    %v3200 = vand.u32 %v3199, 4294901760
    %v3201 = vsub.f32 %v3199, %v3200
    %v3202 = vand.u32 %v3201, 4294901760
    %3203 = vmatpush.msra.mxu0 %v3202
    %v3204 = vand.u32 %v1405, 4294901760
    %v3205 = vsub.f32 %v1405, %v3204
    %v3206 = vand.u32 %v3205, 4294901760
    %v3207 = vsub.f32 %v3205, %v3206
    %v3208 = vand.u32 %v3207, 4294901760
    %3209 = vmatpush.msra.mxu0 %v3208
    %v3210 = vand.u32 %v1404, 4294901760
    %v3211 = vsub.f32 %v1404, %v3210
    %v3212 = vand.u32 %v3211, 4294901760
    %v3213 = vsub.f32 %v3211, %v3212
    %v3214 = vand.u32 %v3213, 4294901760
    %3215 = vmatpush.msra.mxu0 %v3214
    %v3216 = vand.u32 %v3149, 4294901760
    %3217 = vmatmul.f32.gmra.mxu0 %v3216
    %v3218 = vpop.f32.mrf.mxu0
    %v3219 = vadd.f32 %v3178, %v3218
    %3220 = vdwg.mxu0
    %3221 = vmatpush.msra.mxu0 0.0
    %3222 = vmatpush.msra.mxu0 0.0
    %3223 = vmatpush.msra.mxu0 0.0
    %3224 = vmatpush.msra.mxu0 0.0
    %3225 = vmatpush.msra.mxu0 0.0
    %3226 = vmatpush.msra.mxu0 0.0
    %3227 = vmatpush.msra.mxu0 0.0
    %3228 = vmatpush.msra.mxu0 0.0
    %3229 = vmatpush.msra.mxu0 0.0
    %3230 = vmatpush.msra.mxu0 0.0
    %3231 = vmatpush.msra.mxu0 0.0
    %3232 = vmatpush.msra.mxu0 0.0
    %v3233 = vand.u32 %v1407, 4294901760
    %v3234 = vsub.f32 %v1407, %v3233
    %3235 = vmatpush.msra.mxu0 %v3234
    %v3236 = vand.u32 %v1406, 4294901760
    %v3237 = vsub.f32 %v1406, %v3236
    %3238 = vmatpush.msra.mxu0 %v3237
    %v3239 = vand.u32 %v1405, 4294901760
    %v3240 = vsub.f32 %v1405, %v3239
    %3241 = vmatpush.msra.mxu0 %v3240
    %v3242 = vand.u32 %v1404, 4294901760
    %v3243 = vsub.f32 %v1404, %v3242
    %3244 = vmatpush.msra.mxu0 %v3243
    %v3245 = vand.u32 %v3149, 4294901760
    %v3246 = vsub.f32 %v3149, %v3245
    %3247 = vmatmul.f32.gmra.mxu0 %v3246
    %v3248 = vpop.f32.mrf.mxu0
    %v3249 = vadd.f32 %v3219, %v3248
    %3250 = vdwg.mxu0
    %3251 = vmatpush.msra.mxu0 0.0
    %3252 = vmatpush.msra.mxu0 0.0
    %3253 = vmatpush.msra.mxu0 0.0
    %3254 = vmatpush.msra.mxu0 0.0
    %3255 = vmatpush.msra.mxu0 0.0
    %3256 = vmatpush.msra.mxu0 0.0
    %3257 = vmatpush.msra.mxu0 0.0
    %3258 = vmatpush.msra.mxu0 0.0
    %3259 = vmatpush.msra.mxu0 0.0
    %3260 = vmatpush.msra.mxu0 0.0
    %3261 = vmatpush.msra.mxu0 0.0
    %3262 = vmatpush.msra.mxu0 0.0
    %v3263 = vand.u32 %v1407, 4294901760
    %3264 = vmatpush.msra.mxu0 %v3263
    %v3265 = vand.u32 %v1406, 4294901760
    %3266 = vmatpush.msra.mxu0 %v3265
    %v3267 = vand.u32 %v1405, 4294901760
    %3268 = vmatpush.msra.mxu0 %v3267
    %v3269 = vand.u32 %v1404, 4294901760
    %3270 = vmatpush.msra.mxu0 %v3269
    %v3271 = vand.u32 %v3149, 4294901760
    %v3272 = vsub.f32 %v3149, %v3271
    %v3273 = vand.u32 %v3272, 4294901760
    %3274 = vmatmul.f32.gmra.mxu0 %v3273
    %v3275 = vpop.f32.mrf.mxu0
    %v3276 = vadd.f32 %v3249, %v3275
    %3277 = vdwg.mxu0
    %3278 = vmatpush.msra.mxu0 0.0
    %3279 = vmatpush.msra.mxu0 0.0
    %3280 = vmatpush.msra.mxu0 0.0
    %3281 = vmatpush.msra.mxu0 0.0
    %3282 = vmatpush.msra.mxu0 0.0
    %3283 = vmatpush.msra.mxu0 0.0
    %3284 = vmatpush.msra.mxu0 0.0
    %3285 = vmatpush.msra.mxu0 0.0
    %3286 = vmatpush.msra.mxu0 0.0
    %3287 = vmatpush.msra.mxu0 0.0
    %3288 = vmatpush.msra.mxu0 0.0
    %3289 = vmatpush.msra.mxu0 0.0
    %v3290 = vand.u32 %v1407, 4294901760
    %v3291 = vsub.f32 %v1407, %v3290
    %v3292 = vand.u32 %v3291, 4294901760
    %3293 = vmatpush.msra.mxu0 %v3292
    %v3294 = vand.u32 %v1406, 4294901760
    %v3295 = vsub.f32 %v1406, %v3294
    %v3296 = vand.u32 %v3295, 4294901760
    %3297 = vmatpush.msra.mxu0 %v3296
    %v3298 = vand.u32 %v1405, 4294901760
    %v3299 = vsub.f32 %v1405, %v3298
    %v3300 = vand.u32 %v3299, 4294901760
    %3301 = vmatpush.msra.mxu0 %v3300
    %v3302 = vand.u32 %v1404, 4294901760
    %v3303 = vsub.f32 %v1404, %v3302
    %v3304 = vand.u32 %v3303, 4294901760
    %3305 = vmatpush.msra.mxu0 %v3304
    %v3306 = vand.u32 %v3149, 4294901760
    %3307 = vmatmul.f32.gmra.mxu0 %v3306
    %v3308 = vpop.f32.mrf.mxu0
    %v3309 = vadd.f32 %v3276, %v3308
    %3310 = vdwg.mxu0
    %3311 = vmatpush.msra.mxu0 0.0
    %3312 = vmatpush.msra.mxu0 0.0
    %3313 = vmatpush.msra.mxu0 0.0
    %3314 = vmatpush.msra.mxu0 0.0
    %3315 = vmatpush.msra.mxu0 0.0
    %3316 = vmatpush.msra.mxu0 0.0
    %3317 = vmatpush.msra.mxu0 0.0
    %3318 = vmatpush.msra.mxu0 0.0
    %3319 = vmatpush.msra.mxu0 0.0
    %3320 = vmatpush.msra.mxu0 0.0
    %3321 = vmatpush.msra.mxu0 0.0
    %3322 = vmatpush.msra.mxu0 0.0
    %v3323 = vand.u32 %v1407, 4294901760
    %3324 = vmatpush.msra.mxu0 %v3323
    %v3325 = vand.u32 %v1406, 4294901760
    %3326 = vmatpush.msra.mxu0 %v3325
    %v3327 = vand.u32 %v1405, 4294901760
    %3328 = vmatpush.msra.mxu0 %v3327
    %v3329 = vand.u32 %v1404, 4294901760
    %3330 = vmatpush.msra.mxu0 %v3329
    %v3331 = vand.u32 %v3149, 4294901760
    %3332 = vmatmul.f32.gmra.mxu0 %v3331
    %v3333 = vpop.f32.mrf.mxu0
    %v3334 = vadd.f32 %v3309, %v3333
    %3335 = vdwg.mxu0
    %v3336 = vadd.f32 %v2906, %v3334
    %v3337 = vxor.u32 %v3336, 2147483648
    %v3338 = vmul.f32 %v3337, 1.442695
    %v3339 = vpow.pop %v3338
    %v3340 = vadd.f32 %v3339, 1.0
    %v3341 = vrcp.pop %v3340
    %v3342 = vmul.f32 %v3340, %v3341
    %v3343 = vsub.f32 1.0, %v3342
    %v3344 = vmul.f32 %v3341, %v3343
    %v3345 = vadd.f32 %v3341, %v3344
    %vm3346 = vweird.f32 %v3340
    %vm3347 = vweird.f32 %v3341
    %vm3348 = vmor %vm3346, %vm3347
    %v3349 = vsel %vm3348, %v3341, %v3345
    %v3350 = vand.u32 2147483647, %v3340
    %vm3351 = vcmp.eq.f32.partialorder %v3350, 8.507059e+37
    %v3352 = vand.u32 %v3340, 2147483648
    %v3353 = vor.u32 1.1754944e-38, %v3352
    %v3354 = vsel %vm3351, %v3353, %v3349
    %v3355 = vmul.f32 1.0, %v3354
    %v3356 = vtanh.pop %v3336
    %v3357 = vmul.f32 %v3355, %v3139
    %3359 = vrot.lane.b32.xlu0 %v3356, 64
    %v3360 = vpop.permute.xlu0 %3359
    %v3362 = vmul.f32 %v3355, %v3360
    %3364 = vrot.lane.b32.xlu0 %v3362, 32
    %v3365 = vpop.permute.xlu0 %3364
    %v3367 = vadd.f32 %v3357, %v3365
    %v3368 = vtanh.pop %v3367
    %3370 = vrot.lane.b32.xlu0 %v3368, 64
    %v3371 = vpop.permute.xlu0 %3370
    %v3373 = vmul.f32 %v3355, %v3371
    %3375 = vrot.lane.b32.xlu0 %v3373, 32
    %v3376 = vpop.permute.xlu0 %3375
    %v3377 = vsel %vm2919, %v3376, 0
    %3379 = vmatpush.msra.mxu0 0.0
    %3380 = vmatpush.msra.mxu0 0.0
    %3381 = vmatpush.msra.mxu0 0.0
    %3382 = vmatpush.msra.mxu0 0.0
    %3383 = vmatpush.msra.mxu0 0.0
    %3384 = vmatpush.msra.mxu0 0.0
    %3385 = vmatpush.msra.mxu0 0.0
    %3386 = vmatpush.msra.mxu0 0.0
    %3387 = vmatpush.msra.mxu0 0.0
    %3388 = vmatpush.msra.mxu0 0.0
    %3389 = vmatpush.msra.mxu0 0.0
    %3390 = vmatpush.msra.mxu0 0.0
    %v3391 = vand.u32 %v1407, 4294901760
    %3392 = vmatpush.msra.mxu0 %v3391
    %v3393 = vand.u32 %v1406, 4294901760
    %3394 = vmatpush.msra.mxu0 %v3393
    %v3395 = vand.u32 %v1405, 4294901760
    %3396 = vmatpush.msra.mxu0 %v3395
    %v3397 = vand.u32 %v1404, 4294901760
    %3398 = vmatpush.msra.mxu0 %v3397
    %v3399 = vand.u32 %v3377, 4294901760
    %v3400 = vsub.f32 %v3377, %v3399
    %v3401 = vand.u32 %v3400, 4294901760
    %v3402 = vsub.f32 %v3400, %v3401
    %v3403 = vand.u32 %v3402, 4294901760
    %3404 = vmatmul.f32.gmra.mxu0 %v3403
    %v3405 = vpop.f32.mrf.mxu0
    %v3406 = vadd.f32 0.0, %v3405
    %3407 = vdwg.mxu0
    %3408 = vmatpush.msra.mxu0 0.0
    %3409 = vmatpush.msra.mxu0 0.0
    %3410 = vmatpush.msra.mxu0 0.0
    %3411 = vmatpush.msra.mxu0 0.0
    %3412 = vmatpush.msra.mxu0 0.0
    %3413 = vmatpush.msra.mxu0 0.0
    %3414 = vmatpush.msra.mxu0 0.0
    %3415 = vmatpush.msra.mxu0 0.0
    %3416 = vmatpush.msra.mxu0 0.0
    %3417 = vmatpush.msra.mxu0 0.0
    %3418 = vmatpush.msra.mxu0 0.0
    %3419 = vmatpush.msra.mxu0 0.0
    %v3420 = vand.u32 %v1407, 4294901760
    %v3421 = vsub.f32 %v1407, %v3420
    %v3422 = vand.u32 %v3421, 4294901760
    %v3423 = vsub.f32 %v3421, %v3422
    %v3424 = vand.u32 %v3423, 4294901760
    %3425 = vmatpush.msra.mxu0 %v3424
    %v3426 = vand.u32 %v1406, 4294901760
    %v3427 = vsub.f32 %v1406, %v3426
    %v3428 = vand.u32 %v3427, 4294901760
    %v3429 = vsub.f32 %v3427, %v3428
    %v3430 = vand.u32 %v3429, 4294901760
    %3431 = vmatpush.msra.mxu0 %v3430
    %v3432 = vand.u32 %v1405, 4294901760
    %v3433 = vsub.f32 %v1405, %v3432
    %v3434 = vand.u32 %v3433, 4294901760
    %v3435 = vsub.f32 %v3433, %v3434
    %v3436 = vand.u32 %v3435, 4294901760
    %3437 = vmatpush.msra.mxu0 %v3436
    %v3438 = vand.u32 %v1404, 4294901760
    %v3439 = vsub.f32 %v1404, %v3438
    %v3440 = vand.u32 %v3439, 4294901760
    %v3441 = vsub.f32 %v3439, %v3440
    %v3442 = vand.u32 %v3441, 4294901760
    %3443 = vmatpush.msra.mxu0 %v3442
    %v3444 = vand.u32 %v3377, 4294901760
    %3445 = vmatmul.f32.gmra.mxu0 %v3444
    %v3446 = vpop.f32.mrf.mxu0
    %v3447 = vadd.f32 %v3406, %v3446
    %3448 = vdwg.mxu0
    %3449 = vmatpush.msra.mxu0 0.0
    %3450 = vmatpush.msra.mxu0 0.0
    %3451 = vmatpush.msra.mxu0 0.0
    %3452 = vmatpush.msra.mxu0 0.0
    %3453 = vmatpush.msra.mxu0 0.0
    %3454 = vmatpush.msra.mxu0 0.0
    %3455 = vmatpush.msra.mxu0 0.0
    %3456 = vmatpush.msra.mxu0 0.0
    %3457 = vmatpush.msra.mxu0 0.0
    %3458 = vmatpush.msra.mxu0 0.0
    %3459 = vmatpush.msra.mxu0 0.0
    %3460 = vmatpush.msra.mxu0 0.0
    %v3461 = vand.u32 %v1407, 4294901760
    %v3462 = vsub.f32 %v1407, %v3461
    %3463 = vmatpush.msra.mxu0 %v3462
    %v3464 = vand.u32 %v1406, 4294901760
    %v3465 = vsub.f32 %v1406, %v3464
    %3466 = vmatpush.msra.mxu0 %v3465
    %v3467 = vand.u32 %v1405, 4294901760
    %v3468 = vsub.f32 %v1405, %v3467
    %3469 = vmatpush.msra.mxu0 %v3468
    %v3470 = vand.u32 %v1404, 4294901760
    %v3471 = vsub.f32 %v1404, %v3470
    %3472 = vmatpush.msra.mxu0 %v3471
    %v3473 = vand.u32 %v3377, 4294901760
    %v3474 = vsub.f32 %v3377, %v3473
    %3475 = vmatmul.f32.gmra.mxu0 %v3474
    %v3476 = vpop.f32.mrf.mxu0
    %v3477 = vadd.f32 %v3447, %v3476
    %3478 = vdwg.mxu0
    %3479 = vmatpush.msra.mxu0 0.0
    %3480 = vmatpush.msra.mxu0 0.0
    %3481 = vmatpush.msra.mxu0 0.0
    %3482 = vmatpush.msra.mxu0 0.0
    %3483 = vmatpush.msra.mxu0 0.0
    %3484 = vmatpush.msra.mxu0 0.0
    %3485 = vmatpush.msra.mxu0 0.0
    %3486 = vmatpush.msra.mxu0 0.0
    %3487 = vmatpush.msra.mxu0 0.0
    %3488 = vmatpush.msra.mxu0 0.0
    %3489 = vmatpush.msra.mxu0 0.0
    %3490 = vmatpush.msra.mxu0 0.0
    %v3491 = vand.u32 %v1407, 4294901760
    %3492 = vmatpush.msra.mxu0 %v3491
    %v3493 = vand.u32 %v1406, 4294901760
    %3494 = vmatpush.msra.mxu0 %v3493
    %v3495 = vand.u32 %v1405, 4294901760
    %3496 = vmatpush.msra.mxu0 %v3495
    %v3497 = vand.u32 %v1404, 4294901760
    %3498 = vmatpush.msra.mxu0 %v3497
    %v3499 = vand.u32 %v3377, 4294901760
    %v3500 = vsub.f32 %v3377, %v3499
    %v3501 = vand.u32 %v3500, 4294901760
    %3502 = vmatmul.f32.gmra.mxu0 %v3501
    %v3503 = vpop.f32.mrf.mxu0
    %v3504 = vadd.f32 %v3477, %v3503
    %3505 = vdwg.mxu0
    %3506 = vmatpush.msra.mxu0 0.0
    %3507 = vmatpush.msra.mxu0 0.0
    %3508 = vmatpush.msra.mxu0 0.0
    %3509 = vmatpush.msra.mxu0 0.0
    %3510 = vmatpush.msra.mxu0 0.0
    %3511 = vmatpush.msra.mxu0 0.0
    %3512 = vmatpush.msra.mxu0 0.0
    %3513 = vmatpush.msra.mxu0 0.0
    %3514 = vmatpush.msra.mxu0 0.0
    %3515 = vmatpush.msra.mxu0 0.0
    %3516 = vmatpush.msra.mxu0 0.0
    %3517 = vmatpush.msra.mxu0 0.0
    %v3518 = vand.u32 %v1407, 4294901760
    %v3519 = vsub.f32 %v1407, %v3518
    %v3520 = vand.u32 %v3519, 4294901760
    %3521 = vmatpush.msra.mxu0 %v3520
    %v3522 = vand.u32 %v1406, 4294901760
    %v3523 = vsub.f32 %v1406, %v3522
    %v3524 = vand.u32 %v3523, 4294901760
    %3525 = vmatpush.msra.mxu0 %v3524
    %v3526 = vand.u32 %v1405, 4294901760
    %v3527 = vsub.f32 %v1405, %v3526
    %v3528 = vand.u32 %v3527, 4294901760
    %3529 = vmatpush.msra.mxu0 %v3528
    %v3530 = vand.u32 %v1404, 4294901760
    %v3531 = vsub.f32 %v1404, %v3530
    %v3532 = vand.u32 %v3531, 4294901760
    %3533 = vmatpush.msra.mxu0 %v3532
    %v3534 = vand.u32 %v3377, 4294901760
    %3535 = vmatmul.f32.gmra.mxu0 %v3534
    %v3536 = vpop.f32.mrf.mxu0
    %v3537 = vadd.f32 %v3504, %v3536
    %3538 = vdwg.mxu0
    %3539 = vmatpush.msra.mxu0 0.0
    %3540 = vmatpush.msra.mxu0 0.0
    %3541 = vmatpush.msra.mxu0 0.0
    %3542 = vmatpush.msra.mxu0 0.0
    %3543 = vmatpush.msra.mxu0 0.0
    %3544 = vmatpush.msra.mxu0 0.0
    %3545 = vmatpush.msra.mxu0 0.0
    %3546 = vmatpush.msra.mxu0 0.0
    %3547 = vmatpush.msra.mxu0 0.0
    %3548 = vmatpush.msra.mxu0 0.0
    %3549 = vmatpush.msra.mxu0 0.0
    %3550 = vmatpush.msra.mxu0 0.0
    %v3551 = vand.u32 %v1407, 4294901760
    %3552 = vmatpush.msra.mxu0 %v3551
    %v3553 = vand.u32 %v1406, 4294901760
    %3554 = vmatpush.msra.mxu0 %v3553
    %v3555 = vand.u32 %v1405, 4294901760
    %3556 = vmatpush.msra.mxu0 %v3555
    %v3557 = vand.u32 %v1404, 4294901760
    %3558 = vmatpush.msra.mxu0 %v3557
    %v3559 = vand.u32 %v3377, 4294901760
    %3560 = vmatmul.f32.gmra.mxu0 %v3559
    %v3561 = vpop.f32.mrf.mxu0
    %v3562 = vadd.f32 %v3537, %v3561
    %3563 = vdwg.mxu0
    %v3564 = vadd.f32 %v2911, %v3562
    %v3565 = vxor.u32 %v3564, 2147483648
    %v3566 = vmul.f32 %v3565, 1.442695
    %v3567 = vpow.pop %v3566
    %v3568 = vadd.f32 %v3567, 1.0
    %v3569 = vrcp.pop %v3568
    %v3570 = vmul.f32 %v3568, %v3569
    %v3571 = vsub.f32 1.0, %v3570
    %v3572 = vmul.f32 %v3569, %v3571
    %v3573 = vadd.f32 %v3569, %v3572
    %vm3574 = vweird.f32 %v3568
    %vm3575 = vweird.f32 %v3569
    %vm3576 = vmor %vm3574, %vm3575
    %v3577 = vsel %vm3576, %v3569, %v3573
    %v3578 = vand.u32 2147483647, %v3568
    %vm3579 = vcmp.eq.f32.partialorder %v3578, 8.507059e+37
    %v3580 = vand.u32 %v3568, 2147483648
    %v3581 = vor.u32 1.1754944e-38, %v3580
    %v3582 = vsel %vm3579, %v3581, %v3577
    %v3583 = vmul.f32 1.0, %v3582
    %v3584 = vtanh.pop %v3564
    %v3585 = vmul.f32 %v3583, %v3367
    %3587 = vrot.lane.b32.xlu0 %v3584, 64
    %v3588 = vpop.permute.xlu0 %3587
    %v3590 = vmul.f32 %v3583, %v3588
    %3592 = vrot.lane.b32.xlu0 %v3590, 32
    %v3593 = vpop.permute.xlu0 %3592
    %v3595 = vadd.f32 %v3585, %v3593
    %v3596 = vtanh.pop %v3595
    %3598 = vrot.lane.b32.xlu0 %v3596, 64
    %v3599 = vpop.permute.xlu0 %3598
    %v3601 = vmul.f32 %v3583, %v3599
    %3603 = vrot.lane.b32.xlu0 %v3601, 32
    %v3604 = vpop.permute.xlu0 %3603
    %v3605 = vsel %vm2919, %v3604, 0
    %3607 = vmatpush.msra.mxu0 0.0
    %3608 = vmatpush.msra.mxu0 0.0
    %3609 = vmatpush.msra.mxu0 0.0
    %3610 = vmatpush.msra.mxu0 0.0
    %3611 = vmatpush.msra.mxu0 0.0
    %3612 = vmatpush.msra.mxu0 0.0
    %3613 = vmatpush.msra.mxu0 0.0
    %3614 = vmatpush.msra.mxu0 0.0
    %3615 = vmatpush.msra.mxu0 0.0
    %3616 = vmatpush.msra.mxu0 0.0
    %3617 = vmatpush.msra.mxu0 0.0
    %3618 = vmatpush.msra.mxu0 0.0
    %v3619 = vand.u32 %v1407, 4294901760
    %3620 = vmatpush.msra.mxu0 %v3619
    %v3621 = vand.u32 %v1406, 4294901760
    %3622 = vmatpush.msra.mxu0 %v3621
    %v3623 = vand.u32 %v1405, 4294901760
    %3624 = vmatpush.msra.mxu0 %v3623
    %v3625 = vand.u32 %v1404, 4294901760
    %3626 = vmatpush.msra.mxu0 %v3625
    %v3627 = vand.u32 %v3605, 4294901760
    %v3628 = vsub.f32 %v3605, %v3627
    %v3629 = vand.u32 %v3628, 4294901760
    %v3630 = vsub.f32 %v3628, %v3629
    %v3631 = vand.u32 %v3630, 4294901760
    %3632 = vmatmul.f32.gmra.mxu0 %v3631
    %v3633 = vpop.f32.mrf.mxu0
    %v3634 = vadd.f32 0.0, %v3633
    %3635 = vdwg.mxu0
    %3636 = vmatpush.msra.mxu0 0.0
    %3637 = vmatpush.msra.mxu0 0.0
    %3638 = vmatpush.msra.mxu0 0.0
    %3639 = vmatpush.msra.mxu0 0.0
    %3640 = vmatpush.msra.mxu0 0.0
    %3641 = vmatpush.msra.mxu0 0.0
    %3642 = vmatpush.msra.mxu0 0.0
    %3643 = vmatpush.msra.mxu0 0.0
    %3644 = vmatpush.msra.mxu0 0.0
    %3645 = vmatpush.msra.mxu0 0.0
    %3646 = vmatpush.msra.mxu0 0.0
    %3647 = vmatpush.msra.mxu0 0.0
    %v3648 = vand.u32 %v1407, 4294901760
    %v3649 = vsub.f32 %v1407, %v3648
    %v3650 = vand.u32 %v3649, 4294901760
    %v3651 = vsub.f32 %v3649, %v3650
    %v3652 = vand.u32 %v3651, 4294901760
    %3653 = vmatpush.msra.mxu0 %v3652
    %v3654 = vand.u32 %v1406, 4294901760
    %v3655 = vsub.f32 %v1406, %v3654
    %v3656 = vand.u32 %v3655, 4294901760
    %v3657 = vsub.f32 %v3655, %v3656
    %v3658 = vand.u32 %v3657, 4294901760
    %3659 = vmatpush.msra.mxu0 %v3658
    %v3660 = vand.u32 %v1405, 4294901760
    %v3661 = vsub.f32 %v1405, %v3660
    %v3662 = vand.u32 %v3661, 4294901760
    %v3663 = vsub.f32 %v3661, %v3662
    %v3664 = vand.u32 %v3663, 4294901760
    %3665 = vmatpush.msra.mxu0 %v3664
    %v3666 = vand.u32 %v1404, 4294901760
    %v3667 = vsub.f32 %v1404, %v3666
    %v3668 = vand.u32 %v3667, 4294901760
    %v3669 = vsub.f32 %v3667, %v3668
    %v3670 = vand.u32 %v3669, 4294901760
    %3671 = vmatpush.msra.mxu0 %v3670
    %v3672 = vand.u32 %v3605, 4294901760
    %3673 = vmatmul.f32.gmra.mxu0 %v3672
    %v3674 = vpop.f32.mrf.mxu0
    %v3675 = vadd.f32 %v3634, %v3674
    %3676 = vdwg.mxu0
    %3677 = vmatpush.msra.mxu0 0.0
    %3678 = vmatpush.msra.mxu0 0.0
    %3679 = vmatpush.msra.mxu0 0.0
    %3680 = vmatpush.msra.mxu0 0.0
    %3681 = vmatpush.msra.mxu0 0.0
    %3682 = vmatpush.msra.mxu0 0.0
    %3683 = vmatpush.msra.mxu0 0.0
    %3684 = vmatpush.msra.mxu0 0.0
    %3685 = vmatpush.msra.mxu0 0.0
    %3686 = vmatpush.msra.mxu0 0.0
    %3687 = vmatpush.msra.mxu0 0.0
    %3688 = vmatpush.msra.mxu0 0.0
    %v3689 = vand.u32 %v1407, 4294901760
    %v3690 = vsub.f32 %v1407, %v3689
    %3691 = vmatpush.msra.mxu0 %v3690
    %v3692 = vand.u32 %v1406, 4294901760
    %v3693 = vsub.f32 %v1406, %v3692
    %3694 = vmatpush.msra.mxu0 %v3693
    %v3695 = vand.u32 %v1405, 4294901760
    %v3696 = vsub.f32 %v1405, %v3695
    %3697 = vmatpush.msra.mxu0 %v3696
    %v3698 = vand.u32 %v1404, 4294901760
    %v3699 = vsub.f32 %v1404, %v3698
    %3700 = vmatpush.msra.mxu0 %v3699
    %v3701 = vand.u32 %v3605, 4294901760
    %v3702 = vsub.f32 %v3605, %v3701
    %3703 = vmatmul.f32.gmra.mxu0 %v3702
    %v3704 = vpop.f32.mrf.mxu0
    %v3705 = vadd.f32 %v3675, %v3704
    %3706 = vdwg.mxu0
    %3707 = vmatpush.msra.mxu0 0.0
    %3708 = vmatpush.msra.mxu0 0.0
    %3709 = vmatpush.msra.mxu0 0.0
    %3710 = vmatpush.msra.mxu0 0.0
    %3711 = vmatpush.msra.mxu0 0.0
    %3712 = vmatpush.msra.mxu0 0.0
    %3713 = vmatpush.msra.mxu0 0.0
    %3714 = vmatpush.msra.mxu0 0.0
    %3715 = vmatpush.msra.mxu0 0.0
    %3716 = vmatpush.msra.mxu0 0.0
    %3717 = vmatpush.msra.mxu0 0.0
    %3718 = vmatpush.msra.mxu0 0.0
    %v3719 = vand.u32 %v1407, 4294901760
    %3720 = vmatpush.msra.mxu0 %v3719
    %v3721 = vand.u32 %v1406, 4294901760
    %3722 = vmatpush.msra.mxu0 %v3721
    %v3723 = vand.u32 %v1405, 4294901760
    %3724 = vmatpush.msra.mxu0 %v3723
    %v3725 = vand.u32 %v1404, 4294901760
    %3726 = vmatpush.msra.mxu0 %v3725
    %v3727 = vand.u32 %v3605, 4294901760
    %v3728 = vsub.f32 %v3605, %v3727
    %v3729 = vand.u32 %v3728, 4294901760
    %3730 = vmatmul.f32.gmra.mxu0 %v3729
    %v3731 = vpop.f32.mrf.mxu0
    %v3732 = vadd.f32 %v3705, %v3731
    %3733 = vdwg.mxu0
    %3734 = vmatpush.msra.mxu0 0.0
    %3735 = vmatpush.msra.mxu0 0.0
    %3736 = vmatpush.msra.mxu0 0.0
    %3737 = vmatpush.msra.mxu0 0.0
    %3738 = vmatpush.msra.mxu0 0.0
    %3739 = vmatpush.msra.mxu0 0.0
    %3740 = vmatpush.msra.mxu0 0.0
    %3741 = vmatpush.msra.mxu0 0.0
    %3742 = vmatpush.msra.mxu0 0.0
    %3743 = vmatpush.msra.mxu0 0.0
    %3744 = vmatpush.msra.mxu0 0.0
    %3745 = vmatpush.msra.mxu0 0.0
    %v3746 = vand.u32 %v1407, 4294901760
    %v3747 = vsub.f32 %v1407, %v3746
    %v3748 = vand.u32 %v3747, 4294901760
    %3749 = vmatpush.msra.mxu0 %v3748
    %v3750 = vand.u32 %v1406, 4294901760
    %v3751 = vsub.f32 %v1406, %v3750
    %v3752 = vand.u32 %v3751, 4294901760
    %3753 = vmatpush.msra.mxu0 %v3752
    %v3754 = vand.u32 %v1405, 4294901760
    %v3755 = vsub.f32 %v1405, %v3754
    %v3756 = vand.u32 %v3755, 4294901760
    %3757 = vmatpush.msra.mxu0 %v3756
    %v3758 = vand.u32 %v1404, 4294901760
    %v3759 = vsub.f32 %v1404, %v3758
    %v3760 = vand.u32 %v3759, 4294901760
    %3761 = vmatpush.msra.mxu0 %v3760
    %v3762 = vand.u32 %v3605, 4294901760
    %3763 = vmatmul.f32.gmra.mxu0 %v3762
    %v3764 = vpop.f32.mrf.mxu0
    %v3765 = vadd.f32 %v3732, %v3764
    %3766 = vdwg.mxu0
    %3767 = vmatpush.msra.mxu0 0.0
    %3768 = vmatpush.msra.mxu0 0.0
    %3769 = vmatpush.msra.mxu0 0.0
    %3770 = vmatpush.msra.mxu0 0.0
    %3771 = vmatpush.msra.mxu0 0.0
    %3772 = vmatpush.msra.mxu0 0.0
    %3773 = vmatpush.msra.mxu0 0.0
    %3774 = vmatpush.msra.mxu0 0.0
    %3775 = vmatpush.msra.mxu0 0.0
    %3776 = vmatpush.msra.mxu0 0.0
    %3777 = vmatpush.msra.mxu0 0.0
    %3778 = vmatpush.msra.mxu0 0.0
    %v3779 = vand.u32 %v1407, 4294901760
    %3780 = vmatpush.msra.mxu0 %v3779
    %v3781 = vand.u32 %v1406, 4294901760
    %3782 = vmatpush.msra.mxu0 %v3781
    %v3783 = vand.u32 %v1405, 4294901760
    %3784 = vmatpush.msra.mxu0 %v3783
    %v3785 = vand.u32 %v1404, 4294901760
    %3786 = vmatpush.msra.mxu0 %v3785
    %v3787 = vand.u32 %v3605, 4294901760
    %3788 = vmatmul.f32.gmra.mxu0 %v3787
    %v3789 = vpop.f32.mrf.mxu0
    %v3790 = vadd.f32 %v3765, %v3789
    %3791 = vdwg.mxu0
    %v3792 = vadd.f32 %v2917, %v3790
    %v3793 = vxor.u32 %v3792, 2147483648
    %v3794 = vmul.f32 %v3793, 1.442695
    %v3795 = vpow.pop %v3794
    %v3796 = vadd.f32 %v3795, 1.0
    %v3797 = vrcp.pop %v3796
    %v3798 = vmul.f32 %v3796, %v3797
    %v3799 = vsub.f32 1.0, %v3798
    %v3800 = vmul.f32 %v3797, %v3799
    %v3801 = vadd.f32 %v3797, %v3800
    %vm3802 = vweird.f32 %v3796
    %vm3803 = vweird.f32 %v3797
    %vm3804 = vmor %vm3802, %vm3803
    %v3805 = vsel %vm3804, %v3797, %v3801
    %v3806 = vand.u32 2147483647, %v3796
    %vm3807 = vcmp.eq.f32.partialorder %v3806, 8.507059e+37
    %v3808 = vand.u32 %v3796, 2147483648
    %v3809 = vor.u32 1.1754944e-38, %v3808
    %v3810 = vsel %vm3807, %v3809, %v3805
    %v3811 = vmul.f32 1.0, %v3810
    %v3812 = vtanh.pop %v3792
    %v3813 = vmul.f32 %v3811, %v3595
    %3815 = vrot.lane.b32.xlu0 %v3812, 64
    %v3816 = vpop.permute.xlu0 %3815
    %v3818 = vmul.f32 %v3811, %v3816
    %3820 = vrot.lane.b32.xlu0 %v3818, 32
    %v3821 = vpop.permute.xlu0 %3820
    %v3823 = vadd.f32 %v3813, %v3821
    %v3824 = vtanh.pop %v3823
    %3826 = vrot.lane.b32.xlu0 %v3824, 64
    %v3827 = vpop.permute.xlu0 %3826
    %v3829 = vmul.f32 %v3811, %v3827
    %3831 = vrot.lane.b32.xlu0 %v3829, 32
    %v3832 = vpop.permute.xlu0 %3831
    %v3833 = vsel %vm2919, %v3832, 0
    %3835 = vmatpush.msra.mxu0 0.0
    %3836 = vmatpush.msra.mxu0 0.0
    %3837 = vmatpush.msra.mxu0 0.0
    %3838 = vmatpush.msra.mxu0 0.0
    %3839 = vmatpush.msra.mxu0 0.0
    %3840 = vmatpush.msra.mxu0 0.0
    %3841 = vmatpush.msra.mxu0 0.0
    %3842 = vmatpush.msra.mxu0 0.0
    %3843 = vmatpush.msra.mxu0 0.0
    %3844 = vmatpush.msra.mxu0 0.0
    %3845 = vmatpush.msra.mxu0 0.0
    %3846 = vmatpush.msra.mxu0 0.0
    %v3847 = vand.u32 %v1407, 4294901760
    %3848 = vmatpush.msra.mxu0 %v3847
    %v3849 = vand.u32 %v1406, 4294901760
    %3850 = vmatpush.msra.mxu0 %v3849
    %v3851 = vand.u32 %v1405, 4294901760
    %3852 = vmatpush.msra.mxu0 %v3851
    %v3853 = vand.u32 %v1404, 4294901760
    %3854 = vmatpush.msra.mxu0 %v3853
    %v3855 = vand.u32 %v3833, 4294901760
    %v3856 = vsub.f32 %v3833, %v3855
    %v3857 = vand.u32 %v3856, 4294901760
    %v3858 = vsub.f32 %v3856, %v3857
    %v3859 = vand.u32 %v3858, 4294901760
    %3860 = vmatmul.f32.gmra.mxu0 %v3859
    %v3861 = vpop.f32.mrf.mxu0
    %v3862 = vadd.f32 0.0, %v3861
    %3863 = vdwg.mxu0
    %3864 = vmatpush.msra.mxu0 0.0
    %3865 = vmatpush.msra.mxu0 0.0
    %3866 = vmatpush.msra.mxu0 0.0
    %3867 = vmatpush.msra.mxu0 0.0
    %3868 = vmatpush.msra.mxu0 0.0
    %3869 = vmatpush.msra.mxu0 0.0
    %3870 = vmatpush.msra.mxu0 0.0
    %3871 = vmatpush.msra.mxu0 0.0
    %3872 = vmatpush.msra.mxu0 0.0
    %3873 = vmatpush.msra.mxu0 0.0
    %3874 = vmatpush.msra.mxu0 0.0
    %3875 = vmatpush.msra.mxu0 0.0
    %v3876 = vand.u32 %v1407, 4294901760
    %v3877 = vsub.f32 %v1407, %v3876
    %v3878 = vand.u32 %v3877, 4294901760
    %v3879 = vsub.f32 %v3877, %v3878
    %v3880 = vand.u32 %v3879, 4294901760
    %3881 = vmatpush.msra.mxu0 %v3880
    %v3882 = vand.u32 %v1406, 4294901760
    %v3883 = vsub.f32 %v1406, %v3882
    %v3884 = vand.u32 %v3883, 4294901760
    %v3885 = vsub.f32 %v3883, %v3884
    %v3886 = vand.u32 %v3885, 4294901760
    %3887 = vmatpush.msra.mxu0 %v3886
    %v3888 = vand.u32 %v1405, 4294901760
    %v3889 = vsub.f32 %v1405, %v3888
    %v3890 = vand.u32 %v3889, 4294901760
    %v3891 = vsub.f32 %v3889, %v3890
    %v3892 = vand.u32 %v3891, 4294901760
    %3893 = vmatpush.msra.mxu0 %v3892
    %v3894 = vand.u32 %v1404, 4294901760
    %v3895 = vsub.f32 %v1404, %v3894
    %v3896 = vand.u32 %v3895, 4294901760
    %v3897 = vsub.f32 %v3895, %v3896
    %v3898 = vand.u32 %v3897, 4294901760
    %3899 = vmatpush.msra.mxu0 %v3898
    %v3900 = vand.u32 %v3833, 4294901760
    %3901 = vmatmul.f32.gmra.mxu0 %v3900
    %v3902 = vpop.f32.mrf.mxu0
    %v3903 = vadd.f32 %v3862, %v3902
    %3904 = vdwg.mxu0
    %3905 = vmatpush.msra.mxu0 0.0
    %3906 = vmatpush.msra.mxu0 0.0
    %3907 = vmatpush.msra.mxu0 0.0
    %3908 = vmatpush.msra.mxu0 0.0
    %3909 = vmatpush.msra.mxu0 0.0
    %3910 = vmatpush.msra.mxu0 0.0
    %3911 = vmatpush.msra.mxu0 0.0
    %3912 = vmatpush.msra.mxu0 0.0
    %3913 = vmatpush.msra.mxu0 0.0
    %3914 = vmatpush.msra.mxu0 0.0
    %3915 = vmatpush.msra.mxu0 0.0
    %3916 = vmatpush.msra.mxu0 0.0
    %v3917 = vand.u32 %v1407, 4294901760
    %v3918 = vsub.f32 %v1407, %v3917
    %3919 = vmatpush.msra.mxu0 %v3918
    %v3920 = vand.u32 %v1406, 4294901760
    %v3921 = vsub.f32 %v1406, %v3920
    %3922 = vmatpush.msra.mxu0 %v3921
    %v3923 = vand.u32 %v1405, 4294901760
    %v3924 = vsub.f32 %v1405, %v3923
    %3925 = vmatpush.msra.mxu0 %v3924
    %v3926 = vand.u32 %v1404, 4294901760
    %v3927 = vsub.f32 %v1404, %v3926
    %3928 = vmatpush.msra.mxu0 %v3927
    %v3929 = vand.u32 %v3833, 4294901760
    %v3930 = vsub.f32 %v3833, %v3929
    %3931 = vmatmul.f32.gmra.mxu0 %v3930
    %v3932 = vpop.f32.mrf.mxu0
    %v3933 = vadd.f32 %v3903, %v3932
    %3934 = vdwg.mxu0
    %3935 = vmatpush.msra.mxu0 0.0
    %3936 = vmatpush.msra.mxu0 0.0
    %3937 = vmatpush.msra.mxu0 0.0
    %3938 = vmatpush.msra.mxu0 0.0
    %3939 = vmatpush.msra.mxu0 0.0
    %3940 = vmatpush.msra.mxu0 0.0
    %3941 = vmatpush.msra.mxu0 0.0
    %3942 = vmatpush.msra.mxu0 0.0
    %3943 = vmatpush.msra.mxu0 0.0
    %3944 = vmatpush.msra.mxu0 0.0
    %3945 = vmatpush.msra.mxu0 0.0
    %3946 = vmatpush.msra.mxu0 0.0
    %v3947 = vand.u32 %v1407, 4294901760
    %3948 = vmatpush.msra.mxu0 %v3947
    %v3949 = vand.u32 %v1406, 4294901760
    %3950 = vmatpush.msra.mxu0 %v3949
    %v3951 = vand.u32 %v1405, 4294901760
    %3952 = vmatpush.msra.mxu0 %v3951
    %v3953 = vand.u32 %v1404, 4294901760
    %3954 = vmatpush.msra.mxu0 %v3953
    %v3955 = vand.u32 %v3833, 4294901760
    %v3956 = vsub.f32 %v3833, %v3955
    %v3957 = vand.u32 %v3956, 4294901760
    %3958 = vmatmul.f32.gmra.mxu0 %v3957
    %v3959 = vpop.f32.mrf.mxu0
    %v3960 = vadd.f32 %v3933, %v3959
    %3961 = vdwg.mxu0
    %3962 = vmatpush.msra.mxu0 0.0
    %3963 = vmatpush.msra.mxu0 0.0
    %3964 = vmatpush.msra.mxu0 0.0
    %3965 = vmatpush.msra.mxu0 0.0
    %3966 = vmatpush.msra.mxu0 0.0
    %3967 = vmatpush.msra.mxu0 0.0
    %3968 = vmatpush.msra.mxu0 0.0
    %3969 = vmatpush.msra.mxu0 0.0
    %3970 = vmatpush.msra.mxu0 0.0
    %3971 = vmatpush.msra.mxu0 0.0
    %3972 = vmatpush.msra.mxu0 0.0
    %3973 = vmatpush.msra.mxu0 0.0
    %v3974 = vand.u32 %v1407, 4294901760
    %v3975 = vsub.f32 %v1407, %v3974
    %v3976 = vand.u32 %v3975, 4294901760
    %3977 = vmatpush.msra.mxu0 %v3976
    %v3978 = vand.u32 %v1406, 4294901760
    %v3979 = vsub.f32 %v1406, %v3978
    %v3980 = vand.u32 %v3979, 4294901760
    %3981 = vmatpush.msra.mxu0 %v3980
    %v3982 = vand.u32 %v1405, 4294901760
    %v3983 = vsub.f32 %v1405, %v3982
    %v3984 = vand.u32 %v3983, 4294901760
    %3985 = vmatpush.msra.mxu0 %v3984
    %v3986 = vand.u32 %v1404, 4294901760
    %v3987 = vsub.f32 %v1404, %v3986
    %v3988 = vand.u32 %v3987, 4294901760
    %3989 = vmatpush.msra.mxu0 %v3988
    %v3990 = vand.u32 %v3833, 4294901760
    %3991 = vmatmul.f32.gmra.mxu0 %v3990
    %v3992 = vpop.f32.mrf.mxu0
    %v3993 = vadd.f32 %v3960, %v3992
    %3994 = vdwg.mxu0
    %3995 = vmatpush.msra.mxu0 0.0
    %3996 = vmatpush.msra.mxu0 0.0
    %3997 = vmatpush.msra.mxu0 0.0
    %3998 = vmatpush.msra.mxu0 0.0
    %3999 = vmatpush.msra.mxu0 0.0
    %4000 = vmatpush.msra.mxu0 0.0
    %4001 = vmatpush.msra.mxu0 0.0
    %4002 = vmatpush.msra.mxu0 0.0
    %4003 = vmatpush.msra.mxu0 0.0
    %4004 = vmatpush.msra.mxu0 0.0
    %4005 = vmatpush.msra.mxu0 0.0
    %4006 = vmatpush.msra.mxu0 0.0
    %v4007 = vand.u32 %v1407, 4294901760
    %4008 = vmatpush.msra.mxu0 %v4007
    %v4009 = vand.u32 %v1406, 4294901760
    %4010 = vmatpush.msra.mxu0 %v4009
    %v4011 = vand.u32 %v1405, 4294901760
    %4012 = vmatpush.msra.mxu0 %v4011
    %v4013 = vand.u32 %v1404, 4294901760
    %4014 = vmatpush.msra.mxu0 %v4013
    %v4015 = vand.u32 %v3833, 4294901760
    %4016 = vmatmul.f32.gmra.mxu0 %v4015
    %v4017 = vpop.f32.mrf.mxu0
    %v4018 = vadd.f32 %v3993, %v4017
    %4019 = vdwg.mxu0
    %v4020 = vadd.f32 %v2918, %v4018
    %v4021 = vxor.u32 %v4020, 2147483648
    %v4022 = vmul.f32 %v4021, 1.442695
    %v4023 = vpow.pop %v4022
    %v4024 = vadd.f32 %v4023, 1.0
    %v4025 = vrcp.pop %v4024
    %v4026 = vmul.f32 %v4024, %v4025
    %v4027 = vsub.f32 1.0, %v4026
    %v4028 = vmul.f32 %v4025, %v4027
    %v4029 = vadd.f32 %v4025, %v4028
    %vm4030 = vweird.f32 %v4024
    %vm4031 = vweird.f32 %v4025
    %vm4032 = vmor %vm4030, %vm4031
    %v4033 = vsel %vm4032, %v4025, %v4029
    %v4034 = vand.u32 2147483647, %v4024
    %vm4035 = vcmp.eq.f32.partialorder %v4034, 8.507059e+37
    %v4036 = vand.u32 %v4024, 2147483648
    %v4037 = vor.u32 1.1754944e-38, %v4036
    %v4038 = vsel %vm4035, %v4037, %v4033
    %v4039 = vmul.f32 1.0, %v4038
    %v4040 = vtanh.pop %v4020
    %v4041 = vmul.f32 %v4039, %v3823
    %4043 = vrot.lane.b32.xlu0 %v4040, 64
    %v4044 = vpop.permute.xlu0 %4043
    %v4046 = vmul.f32 %v4039, %v4044
    %4048 = vrot.lane.b32.xlu0 %v4046, 32
    %v4049 = vpop.permute.xlu0 %4048
    %v4051 = vadd.f32 %v4041, %v4049
    %v4052 = vtanh.pop %v4051
    %4054 = vrot.lane.b32.xlu0 %v4052, 64
    %v4055 = vpop.permute.xlu0 %4054
    %v4057 = vmul.f32 %v4039, %v4055
    %v4058 = vperm.slane %v36, 0
    %4060 = vrot.lane.b32.xlu0 %v4057, 32
    %v4061 = vpop.permute.xlu0 %4060
    %v4062 = vsel %vm2919, %v4061, 0
    %4064 = vmatpush.msra.mxu0 0.0
    %4065 = vmatpush.msra.mxu0 0.0
    %4066 = vmatpush.msra.mxu0 0.0
    %4067 = vmatpush.msra.mxu0 0.0
    %4068 = vmatpush.msra.mxu0 0.0
    %4069 = vmatpush.msra.mxu0 0.0
    %4070 = vmatpush.msra.mxu0 0.0
    %4071 = vmatpush.msra.mxu0 0.0
    %4072 = vmatpush.msra.mxu0 0.0
    %4073 = vmatpush.msra.mxu0 0.0
    %4074 = vmatpush.msra.mxu0 0.0
    %4075 = vmatpush.msra.mxu0 0.0
    %v4076 = vand.u32 %v35, 4294901760
    %4077 = vmatpush.msra.mxu0 %v4076
    %v4078 = vand.u32 %v34, 4294901760
    %4079 = vmatpush.msra.mxu0 %v4078
    %v4080 = vand.u32 %v33, 4294901760
    %4081 = vmatpush.msra.mxu0 %v4080
    %v4082 = vand.u32 %v32, 4294901760
    %4083 = vmatpush.msra.mxu0 %v4082
    %v4084 = vand.u32 %v4062, 4294901760
    %v4085 = vsub.f32 %v4062, %v4084
    %v4086 = vand.u32 %v4085, 4294901760
    %v4087 = vsub.f32 %v4085, %v4086
    %v4088 = vand.u32 %v4087, 4294901760
    %4089 = vmatmul.f32.gmra.mxu0 %v4088
    %v4090 = vpop.f32.mrf.mxu0
    %v4091 = vadd.f32 %v4058, %v4090
    %4092 = vdwg.mxu0
    %4093 = vmatpush.msra.mxu0 0.0
    %4094 = vmatpush.msra.mxu0 0.0
    %4095 = vmatpush.msra.mxu0 0.0
    %4096 = vmatpush.msra.mxu0 0.0
    %4097 = vmatpush.msra.mxu0 0.0
    %4098 = vmatpush.msra.mxu0 0.0
    %4099 = vmatpush.msra.mxu0 0.0
    %4100 = vmatpush.msra.mxu0 0.0
    %4101 = vmatpush.msra.mxu0 0.0
    %4102 = vmatpush.msra.mxu0 0.0
    %4103 = vmatpush.msra.mxu0 0.0
    %4104 = vmatpush.msra.mxu0 0.0
    %v4105 = vand.u32 %v35, 4294901760
    %v4106 = vsub.f32 %v35, %v4105
    %v4107 = vand.u32 %v4106, 4294901760
    %v4108 = vsub.f32 %v4106, %v4107
    %v4109 = vand.u32 %v4108, 4294901760
    %4110 = vmatpush.msra.mxu0 %v4109
    %v4111 = vand.u32 %v34, 4294901760
    %v4112 = vsub.f32 %v34, %v4111
    %v4113 = vand.u32 %v4112, 4294901760
    %v4114 = vsub.f32 %v4112, %v4113
    %v4115 = vand.u32 %v4114, 4294901760
    %4116 = vmatpush.msra.mxu0 %v4115
    %v4117 = vand.u32 %v33, 4294901760
    %v4118 = vsub.f32 %v33, %v4117
    %v4119 = vand.u32 %v4118, 4294901760
    %v4120 = vsub.f32 %v4118, %v4119
    %v4121 = vand.u32 %v4120, 4294901760
    %4122 = vmatpush.msra.mxu0 %v4121
    %v4123 = vand.u32 %v32, 4294901760
    %v4124 = vsub.f32 %v32, %v4123
    %v4125 = vand.u32 %v4124, 4294901760
    %v4126 = vsub.f32 %v4124, %v4125
    %v4127 = vand.u32 %v4126, 4294901760
    %4128 = vmatpush.msra.mxu0 %v4127
    %v4129 = vand.u32 %v4062, 4294901760
    %4130 = vmatmul.f32.gmra.mxu0 %v4129
    %v4131 = vpop.f32.mrf.mxu0
    %v4132 = vadd.f32 %v4091, %v4131
    %4133 = vdwg.mxu0
    %4134 = vmatpush.msra.mxu0 0.0
    %4135 = vmatpush.msra.mxu0 0.0
    %4136 = vmatpush.msra.mxu0 0.0
    %4137 = vmatpush.msra.mxu0 0.0
    %4138 = vmatpush.msra.mxu0 0.0
    %4139 = vmatpush.msra.mxu0 0.0
    %4140 = vmatpush.msra.mxu0 0.0
    %4141 = vmatpush.msra.mxu0 0.0
    %4142 = vmatpush.msra.mxu0 0.0
    %4143 = vmatpush.msra.mxu0 0.0
    %4144 = vmatpush.msra.mxu0 0.0
    %4145 = vmatpush.msra.mxu0 0.0
    %v4146 = vand.u32 %v35, 4294901760
    %v4147 = vsub.f32 %v35, %v4146
    %4148 = vmatpush.msra.mxu0 %v4147
    %v4149 = vand.u32 %v34, 4294901760
    %v4150 = vsub.f32 %v34, %v4149
    %4151 = vmatpush.msra.mxu0 %v4150
    %v4152 = vand.u32 %v33, 4294901760
    %v4153 = vsub.f32 %v33, %v4152
    %4154 = vmatpush.msra.mxu0 %v4153
    %v4155 = vand.u32 %v32, 4294901760
    %v4156 = vsub.f32 %v32, %v4155
    %4157 = vmatpush.msra.mxu0 %v4156
    %v4158 = vand.u32 %v4062, 4294901760
    %v4159 = vsub.f32 %v4062, %v4158
    %4160 = vmatmul.f32.gmra.mxu0 %v4159
    %v4161 = vpop.f32.mrf.mxu0
    %v4162 = vadd.f32 %v4132, %v4161
    %4163 = vdwg.mxu0
    %4164 = vmatpush.msra.mxu0 0.0
    %4165 = vmatpush.msra.mxu0 0.0
    %4166 = vmatpush.msra.mxu0 0.0
    %4167 = vmatpush.msra.mxu0 0.0
    %4168 = vmatpush.msra.mxu0 0.0
    %4169 = vmatpush.msra.mxu0 0.0
    %4170 = vmatpush.msra.mxu0 0.0
    %4171 = vmatpush.msra.mxu0 0.0
    %4172 = vmatpush.msra.mxu0 0.0
    %4173 = vmatpush.msra.mxu0 0.0
    %4174 = vmatpush.msra.mxu0 0.0
    %4175 = vmatpush.msra.mxu0 0.0
    %v4176 = vand.u32 %v35, 4294901760
    %4177 = vmatpush.msra.mxu0 %v4176
    %v4178 = vand.u32 %v34, 4294901760
    %4179 = vmatpush.msra.mxu0 %v4178
    %v4180 = vand.u32 %v33, 4294901760
    %4181 = vmatpush.msra.mxu0 %v4180
    %v4182 = vand.u32 %v32, 4294901760
    %4183 = vmatpush.msra.mxu0 %v4182
    %v4184 = vand.u32 %v4062, 4294901760
    %v4185 = vsub.f32 %v4062, %v4184
    %v4186 = vand.u32 %v4185, 4294901760
    %4187 = vmatmul.f32.gmra.mxu0 %v4186
    %v4188 = vpop.f32.mrf.mxu0
    %v4189 = vadd.f32 %v4162, %v4188
    %4190 = vdwg.mxu0
    %4191 = vmatpush.msra.mxu0 0.0
    %4192 = vmatpush.msra.mxu0 0.0
    %4193 = vmatpush.msra.mxu0 0.0
    %4194 = vmatpush.msra.mxu0 0.0
    %4195 = vmatpush.msra.mxu0 0.0
    %4196 = vmatpush.msra.mxu0 0.0
    %4197 = vmatpush.msra.mxu0 0.0
    %4198 = vmatpush.msra.mxu0 0.0
    %4199 = vmatpush.msra.mxu0 0.0
    %4200 = vmatpush.msra.mxu0 0.0
    %4201 = vmatpush.msra.mxu0 0.0
    %4202 = vmatpush.msra.mxu0 0.0
    %v4203 = vand.u32 %v35, 4294901760
    %v4204 = vsub.f32 %v35, %v4203
    %v4205 = vand.u32 %v4204, 4294901760
    %4206 = vmatpush.msra.mxu0 %v4205
    %v4207 = vand.u32 %v34, 4294901760
    %v4208 = vsub.f32 %v34, %v4207
    %v4209 = vand.u32 %v4208, 4294901760
    %4210 = vmatpush.msra.mxu0 %v4209
    %v4211 = vand.u32 %v33, 4294901760
    %v4212 = vsub.f32 %v33, %v4211
    %v4213 = vand.u32 %v4212, 4294901760
    %4214 = vmatpush.msra.mxu0 %v4213
    %v4215 = vand.u32 %v32, 4294901760
    %v4216 = vsub.f32 %v32, %v4215
    %v4217 = vand.u32 %v4216, 4294901760
    %4218 = vmatpush.msra.mxu0 %v4217
    %v4219 = vand.u32 %v4062, 4294901760
    %4220 = vmatmul.f32.gmra.mxu0 %v4219
    %v4221 = vpop.f32.mrf.mxu0
    %v4222 = vadd.f32 %v4189, %v4221
    %4223 = vdwg.mxu0
    %4224 = vmatpush.msra.mxu0 0.0
    %4225 = vmatpush.msra.mxu0 0.0
    %4226 = vmatpush.msra.mxu0 0.0
    %4227 = vmatpush.msra.mxu0 0.0
    %4228 = vmatpush.msra.mxu0 0.0
    %4229 = vmatpush.msra.mxu0 0.0
    %4230 = vmatpush.msra.mxu0 0.0
    %4231 = vmatpush.msra.mxu0 0.0
    %4232 = vmatpush.msra.mxu0 0.0
    %4233 = vmatpush.msra.mxu0 0.0
    %4234 = vmatpush.msra.mxu0 0.0
    %4235 = vmatpush.msra.mxu0 0.0
    %v4236 = vand.u32 %v35, 4294901760
    %4237 = vmatpush.msra.mxu0 %v4236
    %v4238 = vand.u32 %v34, 4294901760
    %4239 = vmatpush.msra.mxu0 %v4238
    %v4240 = vand.u32 %v33, 4294901760
    %4241 = vmatpush.msra.mxu0 %v4240
    %v4242 = vand.u32 %v32, 4294901760
    %4243 = vmatpush.msra.mxu0 %v4242
    %v4244 = vand.u32 %v4062, 4294901760
    %4245 = vmatmul.f32.gmra.mxu0 %v4244
    %v4246 = vpop.f32.mrf.mxu0
    %v4247 = vadd.f32 %v4222, %v4246
    %4248 = vdwg.mxu0
    %v4249 = vmax.f32 %v4247, 0.0
    %v4250 = vperm.slane %v39, 0
    %v4252 = vsel %vm473, %v4249, 0
    %4254 = vmatpush.msra.mxu0 0.0
    %4255 = vmatpush.msra.mxu0 0.0
    %4256 = vmatpush.msra.mxu0 0.0
    %4257 = vmatpush.msra.mxu0 0.0
    %4258 = vmatpush.msra.mxu0 0.0
    %4259 = vmatpush.msra.mxu0 0.0
    %4260 = vmatpush.msra.mxu0 0.0
    %4261 = vmatpush.msra.mxu0 0.0
    %4262 = vmatpush.msra.mxu0 0.0
    %4263 = vmatpush.msra.mxu0 0.0
    %4264 = vmatpush.msra.mxu0 0.0
    %4265 = vmatpush.msra.mxu0 0.0
    %4266 = vmatpush.msra.mxu0 0.0
    %4267 = vmatpush.msra.mxu0 0.0
    %v4268 = vand.u32 %v38, 4294901760
    %4269 = vmatpush.msra.mxu0 %v4268
    %v4270 = vand.u32 %v37, 4294901760
    %4271 = vmatpush.msra.mxu0 %v4270
    %v4272 = vand.u32 %v4252, 4294901760
    %v4273 = vsub.f32 %v4252, %v4272
    %v4274 = vand.u32 %v4273, 4294901760
    %v4275 = vsub.f32 %v4273, %v4274
    %v4276 = vand.u32 %v4275, 4294901760
    %4277 = vmatmul.f32.gmra.mxu0 %v4276
    %v4278 = vpop.f32.mrf.mxu0
    %v4279 = vadd.f32 %v4250, %v4278
    %4280 = vdwg.mxu0
    %4281 = vmatpush.msra.mxu0 0.0
    %4282 = vmatpush.msra.mxu0 0.0
    %4283 = vmatpush.msra.mxu0 0.0
    %4284 = vmatpush.msra.mxu0 0.0
    %4285 = vmatpush.msra.mxu0 0.0
    %4286 = vmatpush.msra.mxu0 0.0
    %4287 = vmatpush.msra.mxu0 0.0
    %4288 = vmatpush.msra.mxu0 0.0
    %4289 = vmatpush.msra.mxu0 0.0
    %4290 = vmatpush.msra.mxu0 0.0
    %4291 = vmatpush.msra.mxu0 0.0
    %4292 = vmatpush.msra.mxu0 0.0
    %4293 = vmatpush.msra.mxu0 0.0
    %4294 = vmatpush.msra.mxu0 0.0
    %v4295 = vand.u32 %v38, 4294901760
    %v4296 = vsub.f32 %v38, %v4295
    %v4297 = vand.u32 %v4296, 4294901760
    %v4298 = vsub.f32 %v4296, %v4297
    %v4299 = vand.u32 %v4298, 4294901760
    %4300 = vmatpush.msra.mxu0 %v4299
    %v4301 = vand.u32 %v37, 4294901760
    %v4302 = vsub.f32 %v37, %v4301
    %v4303 = vand.u32 %v4302, 4294901760
    %v4304 = vsub.f32 %v4302, %v4303
    %v4305 = vand.u32 %v4304, 4294901760
    %4306 = vmatpush.msra.mxu0 %v4305
    %v4307 = vand.u32 %v4252, 4294901760
    %4308 = vmatmul.f32.gmra.mxu0 %v4307
    %v4309 = vpop.f32.mrf.mxu0
    %v4310 = vadd.f32 %v4279, %v4309
    %4311 = vdwg.mxu0
    %4312 = vmatpush.msra.mxu0 0.0
    %4313 = vmatpush.msra.mxu0 0.0
    %4314 = vmatpush.msra.mxu0 0.0
    %4315 = vmatpush.msra.mxu0 0.0
    %4316 = vmatpush.msra.mxu0 0.0
    %4317 = vmatpush.msra.mxu0 0.0
    %4318 = vmatpush.msra.mxu0 0.0
    %4319 = vmatpush.msra.mxu0 0.0
    %4320 = vmatpush.msra.mxu0 0.0
    %4321 = vmatpush.msra.mxu0 0.0
    %4322 = vmatpush.msra.mxu0 0.0
    %4323 = vmatpush.msra.mxu0 0.0
    %4324 = vmatpush.msra.mxu0 0.0
    %4325 = vmatpush.msra.mxu0 0.0
    %v4326 = vand.u32 %v38, 4294901760
    %v4327 = vsub.f32 %v38, %v4326
    %4328 = vmatpush.msra.mxu0 %v4327
    %v4329 = vand.u32 %v37, 4294901760
    %v4330 = vsub.f32 %v37, %v4329
    %4331 = vmatpush.msra.mxu0 %v4330
    %v4332 = vand.u32 %v4252, 4294901760
    %v4333 = vsub.f32 %v4252, %v4332
    %4334 = vmatmul.f32.gmra.mxu0 %v4333
    %v4335 = vpop.f32.mrf.mxu0
    %v4336 = vadd.f32 %v4310, %v4335
    %4337 = vdwg.mxu0
    %4338 = vmatpush.msra.mxu0 0.0
    %4339 = vmatpush.msra.mxu0 0.0
    %4340 = vmatpush.msra.mxu0 0.0
    %4341 = vmatpush.msra.mxu0 0.0
    %4342 = vmatpush.msra.mxu0 0.0
    %4343 = vmatpush.msra.mxu0 0.0
    %4344 = vmatpush.msra.mxu0 0.0
    %4345 = vmatpush.msra.mxu0 0.0
    %4346 = vmatpush.msra.mxu0 0.0
    %4347 = vmatpush.msra.mxu0 0.0
    %4348 = vmatpush.msra.mxu0 0.0
    %4349 = vmatpush.msra.mxu0 0.0
    %4350 = vmatpush.msra.mxu0 0.0
    %4351 = vmatpush.msra.mxu0 0.0
    %v4352 = vand.u32 %v38, 4294901760
    %4353 = vmatpush.msra.mxu0 %v4352
    %v4354 = vand.u32 %v37, 4294901760
    %4355 = vmatpush.msra.mxu0 %v4354
    %v4356 = vand.u32 %v4252, 4294901760
    %v4357 = vsub.f32 %v4252, %v4356
    %v4358 = vand.u32 %v4357, 4294901760
    %4359 = vmatmul.f32.gmra.mxu0 %v4358
    %v4360 = vpop.f32.mrf.mxu0
    %v4361 = vadd.f32 %v4336, %v4360
    %4362 = vdwg.mxu0
    %4363 = vmatpush.msra.mxu0 0.0
    %4364 = vmatpush.msra.mxu0 0.0
    %4365 = vmatpush.msra.mxu0 0.0
    %4366 = vmatpush.msra.mxu0 0.0
    %4367 = vmatpush.msra.mxu0 0.0
    %4368 = vmatpush.msra.mxu0 0.0
    %4369 = vmatpush.msra.mxu0 0.0
    %4370 = vmatpush.msra.mxu0 0.0
    %4371 = vmatpush.msra.mxu0 0.0
    %4372 = vmatpush.msra.mxu0 0.0
    %4373 = vmatpush.msra.mxu0 0.0
    %4374 = vmatpush.msra.mxu0 0.0
    %4375 = vmatpush.msra.mxu0 0.0
    %4376 = vmatpush.msra.mxu0 0.0
    %v4377 = vand.u32 %v38, 4294901760
    %v4378 = vsub.f32 %v38, %v4377
    %v4379 = vand.u32 %v4378, 4294901760
    %4380 = vmatpush.msra.mxu0 %v4379
    %v4381 = vand.u32 %v37, 4294901760
    %v4382 = vsub.f32 %v37, %v4381
    %v4383 = vand.u32 %v4382, 4294901760
    %4384 = vmatpush.msra.mxu0 %v4383
    %v4385 = vand.u32 %v4252, 4294901760
    %4386 = vmatmul.f32.gmra.mxu0 %v4385
    %v4387 = vpop.f32.mrf.mxu0
    %v4388 = vadd.f32 %v4361, %v4387
    %4389 = vdwg.mxu0
    %4390 = vmatpush.msra.mxu0 0.0
    %4391 = vmatpush.msra.mxu0 0.0
    %4392 = vmatpush.msra.mxu0 0.0
    %4393 = vmatpush.msra.mxu0 0.0
    %4394 = vmatpush.msra.mxu0 0.0
    %4395 = vmatpush.msra.mxu0 0.0
    %4396 = vmatpush.msra.mxu0 0.0
    %4397 = vmatpush.msra.mxu0 0.0
    %4398 = vmatpush.msra.mxu0 0.0
    %4399 = vmatpush.msra.mxu0 0.0
    %4400 = vmatpush.msra.mxu0 0.0
    %4401 = vmatpush.msra.mxu0 0.0
    %4402 = vmatpush.msra.mxu0 0.0
    %4403 = vmatpush.msra.mxu0 0.0
    %v4404 = vand.u32 %v38, 4294901760
    %4405 = vmatpush.msra.mxu0 %v4404
    %v4406 = vand.u32 %v37, 4294901760
    %4407 = vmatpush.msra.mxu0 %v4406
    %v4408 = vand.u32 %v4252, 4294901760
    %4409 = vmatmul.f32.gmra.mxu0 %v4408
    %v4410 = vpop.f32.mrf.mxu0
    %v4411 = vadd.f32 %v4388, %v4410
    %4412 = vdwg.mxu0
    %vm4413 = vcmask 33792
    %4414 = vst.msk [vmem:[#allocation4] sm:$0x3] %vm4413, %v4411
    // Predicated region
    $region18: #{conv_lstm_forward.1} parent=1 // pred_check
      _
    $region19: #{conv_lstm_forward.1} parent=1 // pred_check_branch
      %4416 = sbr.rel (0) target = $region21
    $region20: #{conv_lstm_forward.1} parent=1 // pred_region
      %4418 = vsyncadd [#allocation5], 0
      %s4420 = sshll.u32 [#allocation4], 4
      %s4421 = int_to_ptr.vmem [resolvable:$true] %s4420
      %s4422 = sshll.u32 %s4, 4
      %s4423 = int_to_ptr.hbm [resolvable:$true] %s4422
      %4425 = dma.vmem_to_hbm [thread:$0]  %s4421, 32, %s4423, [#allocation5]
    $region21: #{conv_lstm_forward.1} parent=1 // pred_fallthru
      _
    // Predicated region
    $region22: #{conv_lstm_forward.1} parent=1 // pred_check
      _
    $region23: #{conv_lstm_forward.1} parent=1 // pred_check_branch
      %4427 = sbr.rel (0) target = $region25
    $region24: #{conv_lstm_forward.1} parent=1 // pred_region
      %4429 = dma.done [#allocation5], 32
    $region25: #{conv_lstm_forward.1} parent=1 // pred_fallthru
      _
    %4430 = vsyncpa [#allocation5], 1
  %4431 = vsyncmov [#allocation3]
  %s4432 = vpop.sfrf %4431
  %p4433 = scmp.eq.s32.totalorder %s4432, 0
  %p4434 = pneg %p4433
  %4436 = shalt.err (%p4434)

</llo_original>
